<compile_context>
chip_gen: v7x
topology: tpu7x:2x2x1
jax: 0.10.0
libtpu: 0.0.40
codegen_flags: <defaults>
</compile_context>

<pallas_src>
import functools

import jax
import jax.numpy as jnp
from jax.experimental import pallas as pl
from jax.experimental.pallas import tpu as pltpu

BN_EPS = 1e-5
LANE = 128        # lane width: GEMM K / N dims are kept lane-dense in-kernel
MAX_TK = 2048     # upper bound for the K tile


# ---------------------------------------------------------------------------
# small helpers
# ---------------------------------------------------------------------------
def _round_up(x, m):
    return (x + m - 1) // m * m


def _pick_m_tile(m):
    """Row-tile: as big as possible, but keep >=2 row-tiles whenever possible
    so the 'parallel' i axis has multiple steps (v7x has 2 TensorCores)."""
    if m >= 1024:
        return 512
    return 256


def _pick_lane_tile(n):
    """Out-channel tile: largest of {512,384,256,128} dividing round_up(n,128)."""
    npad = _round_up(n, LANE)
    for t in (512, 384, 256, 128):
        if npad % t == 0:
            return t
    return LANE


def _pick_lane_tile_wide(npad, max_t=2048):
    """For the elementwise pass-2 kernel: widest lane-dense tile <= max_t."""
    for t in range(min(npad, max_t), 0, -LANE):
        if npad % t == 0:
            return t
    return LANE


def _pick_tk(kp, max_tk=MAX_TK):
    """Largest K tile <= max_tk that divides kp (kp is a multiple of LANE).
    Never inflates kp further (padded K is real MXU work)."""
    if kp <= max_tk:
        return kp
    for t in range(max_tk, 0, -LANE):
        if kp % t == 0:
            return t
    return LANE


def _pad2d(a, rows, cols, dtype):
    a = a.astype(dtype)
    pr, pc = rows - a.shape[0], cols - a.shape[1]
    if pr == 0 and pc == 0:
        return a
    return jnp.pad(a, ((0, pr), (0, pc)))


@functools.lru_cache(maxsize=None)
def _vmem_limit_bytes():
    """Generation-dependent scoped-VMEM limit: ~3/4 of physical VMEM
    (~96 MiB on v5e/v6e, ~48 MiB on v7x), safe fallback if undetectable."""
    cap = None
    try:
        info = pltpu.get_tpu_info()
        for name in ("vmem_capacity_bytes", "vmem_size_bytes", "vmem_bytes"):
            cap = getattr(info, name, None)
            if cap:
                break
    except Exception:
        cap = None
    if not cap or cap <= 0:
        cap = 64 * 1024 * 1024          # v7x physical VMEM (safe everywhere)
    return int(min(cap * 3 // 4, 100 * 1024 * 1024))


def _mosaic_params(dims):
    return pltpu.CompilerParams(dimension_semantics=dims,
                                vmem_limit_bytes=_vmem_limit_bytes())


# ---------------------------------------------------------------------------
# Pallas kernels
# ---------------------------------------------------------------------------
def _gemm_bias_kernel(x_ref, w_ref, b_ref, o_ref, acc_ref):
    """o = x @ w + b.  K-tiled with an f32 VMEM accumulator."""
    k = pl.program_id(2)

    @pl.when(k == 0)
    def _():
        acc_ref[...] = jnp.zeros_like(acc_ref)

    acc_ref[...] += jnp.dot(x_ref[...], w_ref[...],
                            preferred_element_type=jnp.float32)

    @pl.when(k == pl.num_programs(2) - 1)
    def _():
        o_ref[...] = (acc_ref[...] + b_ref[...]).astype(o_ref.dtype)


def _gemm_stats_kernel(x_ref, w_ref, y_ref, ssum_ref, ssq_ref, acc_ref):
    """Pass 1 of the tiled conv+BN: y = x @ w (stored bf16), plus per-(M-tile,
    channel) partial sum / sum-of-squares from the f32 accumulator.  The
    cross-tile reduction happens outside, so M-tiling stays correct for
    BatchNorm statistics."""
    k = pl.program_id(2)

    @pl.when(k == 0)
    def _():
        acc_ref[...] = jnp.zeros_like(acc_ref)

    acc_ref[...] += jnp.dot(x_ref[...], w_ref[...],
                            preferred_element_type=jnp.float32)

    @pl.when(k == pl.num_programs(2) - 1)
    def _():
        y = acc_ref[...]
        y_ref[...] = y.astype(y_ref.dtype)
        ssum_ref[...] = jnp.sum(y, axis=0, keepdims=True).reshape(1, 1, -1)
        ssq_ref[...] = jnp.sum(y * y, axis=0, keepdims=True).reshape(1, 1, -1)


def _scale_shift_relu_kernel(y_ref, sc_ref, sh_ref, o_ref):
    """Pass 2: o = relu(y * scale + shift) with per-channel scale/shift."""
    y = y_ref[...].astype(jnp.float32)
    o = y * sc_ref[...] + sh_ref[...]
    o_ref[...] = jnp.maximum(o, 0.0).astype(o_ref.dtype)


# ---------------------------------------------------------------------------
# tiled GEMM wrappers
# ---------------------------------------------------------------------------
def gemm_bias(x, w, b, out_dtype):
    """(M,K) @ (K,N) + b, tiled.  Pads M/K/N to tile multiples, bf16 MXU
    inputs, f32 accumulation.  Returns the (M, N) result."""
    M, K = x.shape
    N = w.shape[1]
    tm = _pick_m_tile(M)
    tn = _pick_lane_tile(N)
    Mp, Kp, Np = _round_up(M, tm), _round_up(K, LANE), _round_up(N, tn)
    tk = _pick_tk(Kp)
    xp = _pad2d(x, Mp, Kp, jnp.bfloat16)
    wp = _pad2d(w, Kp, Np, jnp.bfloat16)
    bp = jnp.pad(b.astype(jnp.float32), ((0, Np - N),))[None, :]
    grid = (Mp // tm, Np // tn, Kp // tk)

    out = pl.pallas_call(
        _gemm_bias_kernel,
        out_shape=jax.ShapeDtypeStruct((Mp, Np), out_dtype),
        grid_spec=pltpu.PrefetchScalarGridSpec(
            num_scalar_prefetch=0,
            grid=grid,
            in_specs=[pl.BlockSpec((tm, tk), lambda i, j, k: (i, k)),
                      pl.BlockSpec((tk, tn), lambda i, j, k: (k, j)),
                      pl.BlockSpec((1, tn), lambda i, j, k: (0, j))],
            out_specs=pl.BlockSpec((tm, tn), lambda i, j, k: (i, j)),
            scratch_shapes=[pltpu.VMEM((tm, tn), jnp.float32)]),
        compiler_params=_mosaic_params(("parallel", "parallel", "arbitrary")),
    )(xp, wp, bp)
    return out[:M, :N]


def gemm_bn_relu(x, w, gamma, beta, m_real, out_dtype):
    """Conv GEMM + training-mode BatchNorm + ReLU, fully tiled.
    Two passes: (1) tiled GEMM emitting bf16 y plus per-tile channel
    sum/sumsq from the f32 accumulator, (2) finalize scale/shift (tiny O(C)
    JAX), then a big-block normalize+ReLU kernel.  Rows of `x` beyond m_real
    must be zero (the conv has no bias)."""
    M, K = x.shape
    N = w.shape[1]
    tm = _pick_m_tile(M)
    tn = _pick_lane_tile(N)
    Mp, Kp, Np = _round_up(M, tm), _round_up(K, LANE), _round_up(N, tn)
    tk = _pick_tk(Kp)
    xp = _pad2d(x, Mp, Kp, jnp.bfloat16)
    wp = _pad2d(w, Kp, Np, jnp.bfloat16)
    gi = Mp // tm
    grid = (gi, Np // tn, Kp // tk)

    y, psum, psq = pl.pallas_call(
        _gemm_stats_kernel,
        out_shape=(jax.ShapeDtypeStruct((Mp, Np), jnp.bfloat16),
                   jax.ShapeDtypeStruct((gi, 1, Np), jnp.float32),
                   jax.ShapeDtypeStruct((gi, 1, Np), jnp.float32)),
        grid_spec=pltpu.PrefetchScalarGridSpec(
            num_scalar_prefetch=0,
            grid=grid,
            in_specs=[pl.BlockSpec((tm, tk), lambda i, j, k: (i, k)),
                      pl.BlockSpec((tk, tn), lambda i, j, k: (k, j))],
            out_specs=[pl.BlockSpec((tm, tn), lambda i, j, k: (i, j)),
                       pl.BlockSpec((1, 1, tn), lambda i, j, k: (i, 0, j)),
                       pl.BlockSpec((1, 1, tn), lambda i, j, k: (i, 0, j))],
            scratch_shapes=[pltpu.VMEM((tm, tn), jnp.float32)]),
        compiler_params=_mosaic_params(("parallel", "parallel", "arbitrary")),
    )(xp, wp)

    # --- BN finalize: cross-tile reduction + fold into per-channel scale/shift
    # TODO(synk): E[y^2]-E[y]^2 from f32 partial sums can cancel for very
    # large M / large-mean activations; a Welford-style per-tile merge would
    # be more robust.
    ssum = jnp.sum(psum[:, 0, :], axis=0)
    ssq = jnp.sum(psq[:, 0, :], axis=0)
    mean = ssum / m_real
    var = jnp.maximum(ssq / m_real - mean * mean, 0.0)   # biased var (training BN)
    g = jnp.pad(gamma.astype(jnp.float32), ((0, Np - N),))
    b = jnp.pad(beta.astype(jnp.float32), ((0, Np - N),))
    scale = g * jax.lax.rsqrt(var + BN_EPS)
    shift = b - mean * scale

    # --- pass 2: big lane-dense blocks (pure HBM-bound elementwise work) -----
    tm2 = 512 if Mp % 512 == 0 else 256
    tn2 = _pick_lane_tile_wide(Np)
    out = pl.pallas_call(
        _scale_shift_relu_kernel,
        out_shape=jax.ShapeDtypeStruct((Mp, Np), out_dtype),
        grid_spec=pltpu.PrefetchScalarGridSpec(
            num_scalar_prefetch=0,
            grid=(Mp // tm2, Np // tn2),
            in_specs=[pl.BlockSpec((tm2, tn2), lambda i, j: (i, j)),
                      pl.BlockSpec((1, tn2), lambda i, j: (0, j)),
                      pl.BlockSpec((1, tn2), lambda i, j: (0, j))],
            out_specs=pl.BlockSpec((tm2, tn2), lambda i, j: (i, j))),
        compiler_params=_mosaic_params(("parallel", "parallel")),
    )(y, scale[None, :], shift[None, :])
    return out[:m_real, :N]


# ---------------------------------------------------------------------------
# conv plumbing (layout glue stays in JAX; GEMMs run in the kernels above)
# ---------------------------------------------------------------------------
def _im2col_3x3(x_nhwc):
    """3x3 patches with padding=1. Column layout (kh*3 + kw)*C + c, matching
    the reshaped PyTorch conv weight."""
    # TODO(synk): replace with an in-kernel shifted-window conv (9 accumulated
    # MXU matmuls over a halo'd VMEM block) to remove the 9x im2col HBM traffic.
    N, H, W, C = x_nhwc.shape
    xp = jnp.pad(x_nhwc, ((0, 0), (1, 1), (1, 1), (0, 0)))
    cols = [xp[:, kh:kh + H, kw:kw + W, :] for kh in range(3) for kw in range(3)]
    return jnp.concatenate(cols, axis=-1).reshape(N * H * W, 9 * C)


def _conv3x3_bn_relu(x_nhwc, w_pt, gamma, beta, out_dtype):
    """x_nhwc: (N,H,W,C) with natural channel count (padding happens inside
    the GEMM wrapper).  w_pt: (Cout, C, 3, 3); gamma/beta: (Cout,)."""
    N, H, W, C = x_nhwc.shape
    Cout = w_pt.shape[0]
    patches = _im2col_3x3(x_nhwc)                                     # (NHW, 9C)
    w_mat = jnp.transpose(w_pt, (2, 3, 1, 0)).reshape(9 * C, Cout)    # (9C, Cout)
    y = gemm_bn_relu(patches, w_mat, gamma, beta,
                     m_real=N * H * W, out_dtype=out_dtype)
    return y.reshape(N, H, W, Cout)


def up_forward(x2_nchw, x1_nchw, params):
    """Replicates Up.forward(x2, x1). Inputs/outputs are NCHW like PyTorch."""
    x2 = jnp.transpose(x2_nchw, (0, 2, 3, 1)).astype(jnp.float32)     # NHWC
    x1 = jnp.transpose(x1_nchw, (0, 2, 3, 1)).astype(jnp.float32)     # NHWC

    N, H2, W2, Cin = x2.shape
    Chalf = Cin // 2

    # --- ConvTranspose2d(Cin, Chalf, k=2, s=2) as one GEMM over the 4 taps ---
    # out[n, 2h+kh, 2w+kw, co] = sum_ci x[n,h,w,ci] * W[ci,co,kh,kw] + b[co]
    w_up = jnp.transpose(params["up_w"], (0, 2, 3, 1)).reshape(Cin, 4 * Chalf)
    b_up = jnp.tile(params["up_b"], 4)                                # (4*Chalf,)
    y = gemm_bias(x2.reshape(N * H2 * W2, Cin), w_up, b_up,
                  out_dtype=jnp.bfloat16)                             # (NHW, 4*Chalf)

    # TODO(synk): fold this 2x2 sub-pixel de-interleave + spatial pad into the
    # conv1 patch indexing (or store directly from the GEMM kernel) to remove
    # one extra HBM round trip of the upsampled activation.
    y = y.reshape(N, H2, W2, 2, 2, Chalf)
    y = jnp.transpose(y, (0, 1, 3, 2, 4, 5)).reshape(N, 2 * H2, 2 * W2, Chalf)

    # --- pad to x1 spatial size (exactly F.pad(x2, [dX//2,dX//2,dY//2,dY//2]))
    disX = x1.shape[1] - y.shape[1]     # x1.size(2) - x2.size(2)
    disY = x1.shape[2] - y.shape[2]     # x1.size(3) - x2.size(3)
    y = jnp.pad(y, ((0, 0), (disY // 2, disY // 2), (disX // 2, disX // 2), (0, 0)))

    # --- concat [x1, up(x2)] with channels packed contiguously (no per-half
    #     lane padding; the GEMM wrapper pads the total K once) ---------------
    concat = jnp.concatenate([x1.astype(jnp.bfloat16), y], axis=-1)   # (N,H,W,Cin)

    # --- Double 3x3 conv -> BatchNorm(batch stats) -> ReLU -------------------
    h = _conv3x3_bn_relu(concat, params["c1_w"], params["bn1_g"], params["bn1_b"],
                         out_dtype=jnp.bfloat16)
    h = _conv3x3_bn_relu(h, params["c2_w"], params["bn2_g"], params["bn2_b"],
                         out_dtype=jnp.float32)

    return jnp.transpose(h, (0, 3, 1, 2))                             # NCHW


# ---------------------------------------------------------------------------
# pure-JAX f32 reference (no Pallas / padding / bf16) for validation
# ---------------------------------------------------------------------------
def up_forward_reference(x2_nchw, x1_nchw, params):
    x2 = jnp.transpose(x2_nchw, (0, 2, 3, 1)).astype(jnp.float32)
    x1 = jnp.transpose(x1_nchw, (0, 2, 3, 1)).astype(jnp.float32)
    N, H2, W2, Cin = x2.shape
    Chalf = Cin // 2
    w_mat = jnp.transpose(params["up_w"], (0, 2, 3, 1)).reshape(Cin, 4 * Chalf)
    y = x2.reshape(-1, Cin) @ w_mat + jnp.tile(params["up_b"], 4)
    y = y.reshape(N, H2, W2, 2, 2, Chalf)
    y = jnp.transpose(y, (0, 1, 3, 2, 4, 5)).reshape(N, 2 * H2, 2 * W2, Chalf)
    disX = x1.shape[1] - y.shape[1]
    disY = x1.shape[2] - y.shape[2]
    y = jnp.pad(y, ((0, 0), (disY // 2, disY // 2), (disX // 2, disX // 2), (0, 0)))
    h = jnp.concatenate([x1, y], axis=-1)

    def conv_bn_relu(x, w_pt, g, b):
        n, hh, ww, c = x.shape
        cout = w_pt.shape[0]
        z = _im2col_3x3(x) @ jnp.transpose(w_pt, (2, 3, 1, 0)).reshape(9 * c, cout)
        mu = jnp.mean(z, axis=0)
        var = jnp.var(z, axis=0)
        z = (z - mu) * jax.lax.rsqrt(var + BN_EPS) * g + b
        return jnp.maximum(z, 0.0).reshape(n, hh, ww, cout)

    h = conv_bn_relu(h, params["c1_w"], params["bn1_g"], params["bn1_b"])
    h = conv_bn_relu(h, params["c2_w"], params["bn2_g"], params["bn2_b"])
    return jnp.transpose(h, (0, 3, 1, 2))


def init_params(key, in_channels, out_channels):
    Cin, Cout = in_channels, out_channels
    Chalf = Cin // 2
    ks = jax.random.split(key, 8)
    return {
        "up_w": 0.1 * jax.random.normal(ks[0], (Cin, Chalf, 2, 2), jnp.float32),
        "up_b": 0.1 * jax.random.normal(ks[1], (Chalf,), jnp.float32),
        "c1_w": 0.1 * jax.random.normal(ks[2], (Cout, Cin, 3, 3), jnp.float32),
        "bn1_g": 1.0 + 0.1 * jax.random.normal(ks[3], (Cout,), jnp.float32),
        "bn1_b": 0.1 * jax.random.normal(ks[4], (Cout,), jnp.float32),
        "c2_w": 0.1 * jax.random.normal(ks[5], (Cout, Cout, 3, 3), jnp.float32),
        "bn2_g": 1.0 + 0.1 * jax.random.normal(ks[6], (Cout,), jnp.float32),
        "bn2_b": 0.1 * jax.random.normal(ks[7], (Cout,), jnp.float32),
    }


if __name__ == "__main__":
    in_channels, out_channels = 4, 4
    key = jax.random.PRNGKey(0)
    k_x2, k_x1, k_p = jax.random.split(key, 3)

    # x2: deep feature (to be upsampled), x1: skip connection at 2x resolution
    x2 = jax.random.normal(k_x2, (2, in_channels, 8, 8), jnp.float32)         # NCHW
    x1 = jax.random.normal(k_x1, (2, in_channels // 2, 16, 16), jnp.float32)  # NCHW
    params = init_params(k_p, in_channels, out_channels)

    out = jax.block_until_ready(jax.jit(up_forward)(x2, x1, params))
    assert out.shape == (2, out_channels, 16, 16), out.shape
    assert bool(jnp.all(jnp.isfinite(out)))

    # sanity check vs. pure-JAX f32 reference (bf16 MXU inputs -> loose tol)
    ref = jax.block_until_ready(jax.jit(up_forward_reference)(x2, x1, params))
    err = float(jnp.max(jnp.abs(out - ref)))
    assert err < 0.25, f"max abs error vs reference: {err}"

    print("KERNEL_OK")
</pallas_src>

<mosaic_0001>
module attributes {stable_mosaic.version = 11 : i64} {
  func.func @_gemm_bias_kernel(%arg0: i32, %arg1: i32, %arg2: i32, %arg3: memref<256x128xbf16, #tpu.memory_space<vmem>>, %arg4: memref<128x128xbf16, #tpu.memory_space<vmem>>, %arg5: memref<1x128xf32, #tpu.memory_space<vmem>>, %arg6: memref<256x128xbf16, #tpu.memory_space<vmem>>, %arg7: memref<256x128xf32, #tpu.memory_space<vmem>>) attributes {dimension_semantics = [#tpu.dimension_semantics<parallel>, #tpu.dimension_semantics<parallel>, #tpu.dimension_semantics<arbitrary>], iteration_bounds = array<i64: 1, 1, 1>, scalar_prefetch = 0 : i64, scratch_operands = 1 : i64, tpu.core_type = #tpu.core_type<tc>, window_params = [{transform_indices = @transform_0, window_bounds = array<i64: 256, 128>}, {transform_indices = @transform_1, window_bounds = array<i64: 128, 128>}, {transform_indices = @transform_2, window_bounds = array<i64: 1, 128>}, {transform_indices = @transform_3, window_bounds = array<i64: 256, 128>}]} {
    %c0_i32 = arith.constant 0 : i32
    %0 = arith.cmpi eq, %arg2, %c0_i32 : i32
    %1 = arith.extui %0 : i1 to i32
    %c0_i32_0 = arith.constant 0 : i32
    %2 = arith.cmpi ne, %1, %c0_i32_0 : i32
    scf.if %2 {
      %cst_10 = arith.constant 0.000000e+00 : f32
      %12 = vector.broadcast %cst_10 : f32 to vector<256x128xf32>
      %c0_11 = arith.constant 0 : index
      %c0_12 = arith.constant 0 : index
      %13 = vector.load %arg7[%c0_11, %c0_12] : memref<256x128xf32, #tpu.memory_space<vmem>>, vector<256x128xf32>
      tpu.vector_store %arg7[%c0_11, %c0_12], %12 {strides = array<i32>} : memref<256x128xf32, #tpu.memory_space<vmem>>, vector<256x128xf32>,
    } else {
    }
    %c0 = arith.constant 0 : index
    %c0_1 = arith.constant 0 : index
    %3 = vector.load %arg7[%c0, %c0_1] : memref<256x128xf32, #tpu.memory_space<vmem>>, vector<256x128xf32>
    %c0_2 = arith.constant 0 : index
    %c0_3 = arith.constant 0 : index
    %4 = vector.load %arg3[%c0_2, %c0_3] : memref<256x128xbf16, #tpu.memory_space<vmem>>, vector<256x128xbf16>
    %c0_4 = arith.constant 0 : index
    %c0_5 = arith.constant 0 : index
    %5 = vector.load %arg4[%c0_4, %c0_5] : memref<128x128xbf16, #tpu.memory_space<vmem>>, vector<128x128xbf16>
    %cst = arith.constant dense<0.000000e+00> : vector<256x128xf32>
    %6 = tpu.matmul %4, %5, %cst {dimension_numbers = #tpu.dot_dimension_numbers<[1], [0], [0], [1], [0, 0, 1, 1], [], []>} : vector<256x128xbf16>, vector<128x128xbf16>, vector<256x128xf32> -> vector<256x128xf32>
    %7 = arith.addf %3, %6 : vector<256x128xf32>
    %c0_6 = arith.constant 0 : index
    %c0_7 = arith.constant 0 : index
    %8 = vector.load %arg7[%c0_6, %c0_7] : memref<256x128xf32, #tpu.memory_space<vmem>>, vector<256x128xf32>
    tpu.vector_store %arg7[%c0_6, %c0_7], %7 {strides = array<i32>} : memref<256x128xf32, #tpu.memory_space<vmem>>, vector<256x128xf32>,
    %c0_i32_8 = arith.constant 0 : i32
    %9 = arith.cmpi eq, %arg2, %c0_i32_8 : i32
    %10 = arith.extui %9 : i1 to i32
    %c0_i32_9 = arith.constant 0 : i32
    %11 = arith.cmpi ne, %10, %c0_i32_9 : i32
    scf.if %11 {
      %c0_10 = arith.constant 0 : index
      %c0_11 = arith.constant 0 : index
      %12 = vector.load %arg7[%c0_10, %c0_11] : memref<256x128xf32, #tpu.memory_space<vmem>>, vector<256x128xf32>
      %c0_12 = arith.constant 0 : index
      %c0_13 = arith.constant 0 : index
      %13 = vector.load %arg5[%c0_12, %c0_13] : memref<1x128xf32, #tpu.memory_space<vmem>>, vector<1x128xf32>
      %14 = vector.broadcast %13 : vector<1x128xf32> to vector<256x128xf32>
      %15 = arith.addf %12, %14 : vector<256x128xf32>
      %16 = arith.truncf %15 : vector<256x128xf32> to vector<256x128xbf16>
      %c0_14 = arith.constant 0 : index
      %c0_15 = arith.constant 0 : index
      %17 = vector.load %arg6[%c0_14, %c0_15] : memref<256x128xbf16, #tpu.memory_space<vmem>>, vector<256x128xbf16>
      tpu.vector_store %arg6[%c0_14, %c0_15], %16 {strides = array<i32>} : memref<256x128xbf16, #tpu.memory_space<vmem>>, vector<256x128xbf16>,
    } else {
    }
    return
  }
  func.func @transform_0(%arg0: i32, %arg1: i32, %arg2: i32) -> (i32, i32) {
    %c0_i32 = arith.constant 0 : i32
    return %arg0, %arg2 : i32, i32
  }
  func.func @transform_1(%arg0: i32, %arg1: i32, %arg2: i32) -> (i32, i32) {
    %c0_i32 = arith.constant 0 : i32
    return %arg2, %arg1 : i32, i32
  }
  func.func @transform_2(%arg0: i32, %arg1: i32, %arg2: i32) -> (i32, i32) {
    %c0_i32 = arith.constant 0 : i32
    %c0_i32_0 = arith.constant 0 : i32
    return %c0_i32, %arg1 : i32, i32
  }
  func.func @transform_3(%arg0: i32, %arg1: i32, %arg2: i32) -> (i32, i32) {
    %c0_i32 = arith.constant 0 : i32
    return %arg0, %arg1 : i32, i32
  }
}

module attributes {stable_mosaic.version = 11 : i64} {
  func.func @_gemm_stats_kernel(%arg0: i32, %arg1: i32, %arg2: i32, %arg3: memref<256x128xbf16, #tpu.memory_space<vmem>>, %arg4: memref<128x128xbf16, #tpu.memory_space<vmem>>, %arg5: memref<256x128xbf16, #tpu.memory_space<vmem>>, %arg6: memref<1x1x128xf32, #tpu.memory_space<vmem>>, %arg7: memref<1x1x128xf32, #tpu.memory_space<vmem>>, %arg8: memref<256x128xf32, #tpu.memory_space<vmem>>) attributes {dimension_semantics = [#tpu.dimension_semantics<parallel>, #tpu.dimension_semantics<parallel>, #tpu.dimension_semantics<arbitrary>], iteration_bounds = array<i64: 2, 1, 1>, scalar_prefetch = 0 : i64, scratch_operands = 1 : i64, tpu.core_type = #tpu.core_type<tc>, window_params = [{transform_indices = @transform_0, window_bounds = array<i64: 256, 128>}, {transform_indices = @transform_1, window_bounds = array<i64: 128, 128>}, {transform_indices = @transform_2, window_bounds = array<i64: 256, 128>}, {transform_indices = @transform_3, window_bounds = array<i64: 1, 1, 128>}, {transform_indices = @transform_4, window_bounds = array<i64: 1, 1, 128>}]} {
    %c0_i32 = arith.constant 0 : i32
    %0 = arith.cmpi eq, %arg2, %c0_i32 : i32
    %1 = arith.extui %0 : i1 to i32
    %c0_i32_0 = arith.constant 0 : i32
    %2 = arith.cmpi ne, %1, %c0_i32_0 : i32
    scf.if %2 {
      %cst_10 = arith.constant 0.000000e+00 : f32
      %12 = vector.broadcast %cst_10 : f32 to vector<256x128xf32>
      %c0_11 = arith.constant 0 : index
      %c0_12 = arith.constant 0 : index
      %13 = vector.load %arg8[%c0_11, %c0_12] : memref<256x128xf32, #tpu.memory_space<vmem>>, vector<256x128xf32>
      tpu.vector_store %arg8[%c0_11, %c0_12], %12 {strides = array<i32>} : memref<256x128xf32, #tpu.memory_space<vmem>>, vector<256x128xf32>,
    } else {
    }
    %c0 = arith.constant 0 : index
    %c0_1 = arith.constant 0 : index
    %3 = vector.load %arg8[%c0, %c0_1] : memref<256x128xf32, #tpu.memory_space<vmem>>, vector<256x128xf32>
    %c0_2 = arith.constant 0 : index
    %c0_3 = arith.constant 0 : index
    %4 = vector.load %arg3[%c0_2, %c0_3] : memref<256x128xbf16, #tpu.memory_space<vmem>>, vector<256x128xbf16>
    %c0_4 = arith.constant 0 : index
    %c0_5 = arith.constant 0 : index
    %5 = vector.load %arg4[%c0_4, %c0_5] : memref<128x128xbf16, #tpu.memory_space<vmem>>, vector<128x128xbf16>
    %cst = arith.constant dense<0.000000e+00> : vector<256x128xf32>
    %6 = tpu.matmul %4, %5, %cst {dimension_numbers = #tpu.dot_dimension_numbers<[1], [0], [0], [1], [0, 0, 1, 1], [], []>} : vector<256x128xbf16>, vector<128x128xbf16>, vector<256x128xf32> -> vector<256x128xf32>
    %7 = arith.addf %3, %6 : vector<256x128xf32>
    %c0_6 = arith.constant 0 : index
    %c0_7 = arith.constant 0 : index
    %8 = vector.load %arg8[%c0_6, %c0_7] : memref<256x128xf32, #tpu.memory_space<vmem>>, vector<256x128xf32>
    tpu.vector_store %arg8[%c0_6, %c0_7], %7 {strides = array<i32>} : memref<256x128xf32, #tpu.memory_space<vmem>>, vector<256x128xf32>,
    %c0_i32_8 = arith.constant 0 : i32
    %9 = arith.cmpi eq, %arg2, %c0_i32_8 : i32
    %10 = arith.extui %9 : i1 to i32
    %c0_i32_9 = arith.constant 0 : i32
    %11 = arith.cmpi ne, %10, %c0_i32_9 : i32
    scf.if %11 {
      %c0_10 = arith.constant 0 : index
      %c0_11 = arith.constant 0 : index
      %12 = vector.load %arg8[%c0_10, %c0_11] : memref<256x128xf32, #tpu.memory_space<vmem>>, vector<256x128xf32>
      %13 = arith.truncf %12 : vector<256x128xf32> to vector<256x128xbf16>
      %c0_12 = arith.constant 0 : index
      %c0_13 = arith.constant 0 : index
      %14 = vector.load %arg5[%c0_12, %c0_13] : memref<256x128xbf16, #tpu.memory_space<vmem>>, vector<256x128xbf16>
      tpu.vector_store %arg5[%c0_12, %c0_13], %13 {strides = array<i32>} : memref<256x128xbf16, #tpu.memory_space<vmem>>, vector<256x128xbf16>,
      %cst_14 = arith.constant dense<0.000000e+00> : vector<128xf32>
      %15 = vector.multi_reduction <add>, %12, %cst_14 [0] : vector<256x128xf32> to vector<128xf32>
      %16 = vector.shape_cast %15 : vector<128xf32> to vector<1x128xf32>
      %17 = vector.shape_cast %16 : vector<1x128xf32> to vector<1x1x128xf32>
      %c0_15 = arith.constant 0 : index
      %c0_16 = arith.constant 0 : index
      %c0_17 = arith.constant 0 : index
      %18 = vector.load %arg6[%c0_15, %c0_16, %c0_17] : memref<1x1x128xf32, #tpu.memory_space<vmem>>, vector<1x1x128xf32>
      tpu.vector_store %arg6[%c0_15, %c0_16, %c0_17], %17 {strides = array<i32>} : memref<1x1x128xf32, #tpu.memory_space<vmem>>, vector<1x1x128xf32>,
      %19 = arith.mulf %12, %12 : vector<256x128xf32>
      %cst_18 = arith.constant dense<0.000000e+00> : vector<128xf32>
      %20 = vector.multi_reduction <add>, %19, %cst_18 [0] : vector<256x128xf32> to vector<128xf32>
      %21 = vector.shape_cast %20 : vector<128xf32> to vector<1x128xf32>
      %22 = vector.shape_cast %21 : vector<1x128xf32> to vector<1x1x128xf32>
      %c0_19 = arith.constant 0 : index
      %c0_20 = arith.constant 0 : index
      %c0_21 = arith.constant 0 : index
      %23 = vector.load %arg7[%c0_19, %c0_20, %c0_21] : memref<1x1x128xf32, #tpu.memory_space<vmem>>, vector<1x1x128xf32>
      tpu.vector_store %arg7[%c0_19, %c0_20, %c0_21], %22 {strides = array<i32>} : memref<1x1x128xf32, #tpu.memory_space<vmem>>, vector<1x1x128xf32>,
    } else {
    }
    return
  }
  func.func @transform_0(%arg0: i32, %arg1: i32, %arg2: i32) -> (i32, i32) {
    %c0_i32 = arith.constant 0 : i32
    return %arg0, %arg2 : i32, i32
  }
  func.func @transform_1(%arg0: i32, %arg1: i32, %arg2: i32) -> (i32, i32) {
    %c0_i32 = arith.constant 0 : i32
    return %arg2, %arg1 : i32, i32
  }
  func.func @transform_2(%arg0: i32, %arg1: i32, %arg2: i32) -> (i32, i32) {
    %c0_i32 = arith.constant 0 : i32
    return %arg0, %arg1 : i32, i32
  }
  func.func @transform_3(%arg0: i32, %arg1: i32, %arg2: i32) -> (i32, i32, i32) {
    %c0_i32 = arith.constant 0 : i32
    %c0_i32_0 = arith.constant 0 : i32
    return %arg0, %c0_i32, %arg1 : i32, i32, i32
  }
  func.func @transform_4(%arg0: i32, %arg1: i32, %arg2: i32) -> (i32, i32, i32) {
    %c0_i32 = arith.constant 0 : i32
    %c0_i32_0 = arith.constant 0 : i32
    return %arg0, %c0_i32, %arg1 : i32, i32, i32
  }
}

module attributes {stable_mosaic.version = 11 : i64} {
  func.func @_scale_shift_relu_kernel(%arg0: i32, %arg1: i32, %arg2: memref<512x128xbf16, #tpu.memory_space<vmem>>, %arg3: memref<1x128xf32, #tpu.memory_space<vmem>>, %arg4: memref<1x128xf32, #tpu.memory_space<vmem>>, %arg5: memref<512x128xbf16, #tpu.memory_space<vmem>>) attributes {dimension_semantics = [#tpu.dimension_semantics<parallel>, #tpu.dimension_semantics<parallel>], iteration_bounds = array<i64: 1, 1>, scalar_prefetch = 0 : i64, scratch_operands = 0 : i64, tpu.core_type = #tpu.core_type<tc>, window_params = [{transform_indices = @transform_0, window_bounds = array<i64: 512, 128>}, {transform_indices = @transform_1, window_bounds = array<i64: 1, 128>}, {transform_indices = @transform_2, window_bounds = array<i64: 1, 128>}, {transform_indices = @transform_3, window_bounds = array<i64: 512, 128>}]} {
    %c0 = arith.constant 0 : index
    %c0_0 = arith.constant 0 : index
    %0 = vector.load %arg2[%c0, %c0_0] : memref<512x128xbf16, #tpu.memory_space<vmem>>, vector<512x128xbf16>
    %1 = arith.extf %0 : vector<512x128xbf16> to vector<512x128xf32>
    %c0_1 = arith.constant 0 : index
    %c0_2 = arith.constant 0 : index
    %2 = vector.load %arg3[%c0_1, %c0_2] : memref<1x128xf32, #tpu.memory_space<vmem>>, vector<1x128xf32>
    %3 = vector.broadcast %2 : vector<1x128xf32> to vector<512x128xf32>
    %4 = arith.mulf %1, %3 : vector<512x128xf32>
    %c0_3 = arith.constant 0 : index
    %c0_4 = arith.constant 0 : index
    %5 = vector.load %arg4[%c0_3, %c0_4] : memref<1x128xf32, #tpu.memory_space<vmem>>, vector<1x128xf32>
    %6 = vector.broadcast %5 : vector<1x128xf32> to vector<512x128xf32>
    %7 = arith.addf %4, %6 : vector<512x128xf32>
    %cst = arith.constant 0.000000e+00 : f32
    %8 = vector.broadcast %cst : f32 to vector<512x128xf32>
    %9 = arith.maximumf %7, %8 : vector<512x128xf32>
    %10 = arith.truncf %9 : vector<512x128xf32> to vector<512x128xbf16>
    %c0_5 = arith.constant 0 : index
    %c0_6 = arith.constant 0 : index
    %11 = vector.load %arg5[%c0_5, %c0_6] : memref<512x128xbf16, #tpu.memory_space<vmem>>, vector<512x128xbf16>
    tpu.vector_store %arg5[%c0_5, %c0_6], %10 {strides = array<i32>} : memref<512x128xbf16, #tpu.memory_space<vmem>>, vector<512x128xbf16>,
    return
  }
  func.func @transform_0(%arg0: i32, %arg1: i32) -> (i32, i32) {
    %c0_i32 = arith.constant 0 : i32
    return %arg0, %arg1 : i32, i32
  }
  func.func @transform_1(%arg0: i32, %arg1: i32) -> (i32, i32) {
    %c0_i32 = arith.constant 0 : i32
    %c0_i32_0 = arith.constant 0 : i32
    return %c0_i32, %arg1 : i32, i32
  }
  func.func @transform_2(%arg0: i32, %arg1: i32) -> (i32, i32) {
    %c0_i32 = arith.constant 0 : i32
    %c0_i32_0 = arith.constant 0 : i32
    return %c0_i32, %arg1 : i32, i32
  }
  func.func @transform_3(%arg0: i32, %arg1: i32) -> (i32, i32) {
    %c0_i32 = arith.constant 0 : i32
    return %arg0, %arg1 : i32, i32
  }
}

module attributes {stable_mosaic.version = 11 : i64} {
  func.func @_scale_shift_relu_kernel(%arg0: i32, %arg1: i32, %arg2: memref<512x128xbf16, #tpu.memory_space<vmem>>, %arg3: memref<1x128xf32, #tpu.memory_space<vmem>>, %arg4: memref<1x128xf32, #tpu.memory_space<vmem>>, %arg5: memref<512x128xf32, #tpu.memory_space<vmem>>) attributes {dimension_semantics = [#tpu.dimension_semantics<parallel>, #tpu.dimension_semantics<parallel>], iteration_bounds = array<i64: 1, 1>, scalar_prefetch = 0 : i64, scratch_operands = 0 : i64, tpu.core_type = #tpu.core_type<tc>, window_params = [{transform_indices = @transform_0, window_bounds = array<i64: 512, 128>}, {transform_indices = @transform_1, window_bounds = array<i64: 1, 128>}, {transform_indices = @transform_2, window_bounds = array<i64: 1, 128>}, {transform_indices = @transform_3, window_bounds = array<i64: 512, 128>}]} {
    %c0 = arith.constant 0 : index
    %c0_0 = arith.constant 0 : index
    %0 = vector.load %arg2[%c0, %c0_0] : memref<512x128xbf16, #tpu.memory_space<vmem>>, vector<512x128xbf16>
    %1 = arith.extf %0 : vector<512x128xbf16> to vector<512x128xf32>
    %c0_1 = arith.constant 0 : index
    %c0_2 = arith.constant 0 : index
    %2 = vector.load %arg3[%c0_1, %c0_2] : memref<1x128xf32, #tpu.memory_space<vmem>>, vector<1x128xf32>
    %3 = vector.broadcast %2 : vector<1x128xf32> to vector<512x128xf32>
    %4 = arith.mulf %1, %3 : vector<512x128xf32>
    %c0_3 = arith.constant 0 : index
    %c0_4 = arith.constant 0 : index
    %5 = vector.load %arg4[%c0_3, %c0_4] : memref<1x128xf32, #tpu.memory_space<vmem>>, vector<1x128xf32>
    %6 = vector.broadcast %5 : vector<1x128xf32> to vector<512x128xf32>
    %7 = arith.addf %4, %6 : vector<512x128xf32>
    %cst = arith.constant 0.000000e+00 : f32
    %8 = vector.broadcast %cst : f32 to vector<512x128xf32>
    %9 = arith.maximumf %7, %8 : vector<512x128xf32>
    %c0_5 = arith.constant 0 : index
    %c0_6 = arith.constant 0 : index
    %10 = vector.load %arg5[%c0_5, %c0_6] : memref<512x128xf32, #tpu.memory_space<vmem>>, vector<512x128xf32>
    tpu.vector_store %arg5[%c0_5, %c0_6], %9 {strides = array<i32>} : memref<512x128xf32, #tpu.memory_space<vmem>>, vector<512x128xf32>,
    return
  }
  func.func @transform_0(%arg0: i32, %arg1: i32) -> (i32, i32) {
    %c0_i32 = arith.constant 0 : i32
    return %arg0, %arg1 : i32, i32
  }
  func.func @transform_1(%arg0: i32, %arg1: i32) -> (i32, i32) {
    %c0_i32 = arith.constant 0 : i32
    %c0_i32_0 = arith.constant 0 : i32
    return %c0_i32, %arg1 : i32, i32
  }
  func.func @transform_2(%arg0: i32, %arg1: i32) -> (i32, i32) {
    %c0_i32 = arith.constant 0 : i32
    %c0_i32_0 = arith.constant 0 : i32
    return %c0_i32, %arg1 : i32, i32
  }
  func.func @transform_3(%arg0: i32, %arg1: i32) -> (i32, i32) {
    %c0_i32 = arith.constant 0 : i32
    return %arg0, %arg1 : i32, i32
  }
}

</mosaic_0001>

<llo_original>
// kernel: tile.8
$region0: #{tile.8}
  #allocation0 [shape = 's32[1]{0}', space=sflag, size = 0x4, scoped, tag = 'scoped memory for tile.8']
  %s0 = inlined_call_operand.vmem [shape: f32[2], index: 0, kind: input, shape index: {}]
  %s1 = inlined_call_operand.vmem [shape: f32[4,2], index: 1, kind: output, shape index: {}]
  // Predicated region
  $region2: #{tile.8} parent=0 // pred_check
    _
  $region3: #{tile.8} parent=0 // pred_check_branch
    %3 = sbr.rel (0) target = $region5
  $region4: #{tile.8} parent=0 // pred_region
    _
  $region5: #{tile.8} parent=0 // pred_fallthru
    _
  %v4 = vld [vmem:[%s0] ss:$0 sm:$0xff]
  %5 = vst [vmem:[%s1] sm:$0xf] %v4

// kernel: tile.9
$region0: #{tile.9}
  %s0 = inlined_call_operand.vmem [shape: f32[4,2], index: 0, kind: input, shape index: {}]
  %s1 = inlined_call_operand.vmem [shape: f32[8], index: 1, kind: output, shape index: {}]
  $region1: #{tile.9} parent=0
    #allocation0 [shape = 'u8[4096]{0}', space=vmem, size = 0x1000, scoped, tag = 'scoped mem for output reshape']
    #allocation1 [shape = 'u8[4096]{0}', space=vmem, size = 0x1000, scoped, tag = 'scoped mem for input reshape']
    %s3 = sshllo.u32 0, 4
    %v4 = vld [vmem:[%s0] sm:%s3]
    %5 = vst [vmem:[#allocation1] sm:%s3] %v4
    %v6 = vld [vmem:[#allocation1] sm:$0x1]
    %vm7 = vcmask 15360
    %8 = vst.msk [vmem:[#allocation0] sm:$0x1] %vm7, %v6
    %s9 = scalar_lea.vmem [#allocation1], 3
    %v10 = vld [vmem:[%s9] sm:$0x1]
    %11 = vrot.lane.b32.xlu0 %v10, 6
    %v12 = vpop.permute.xlu0 %11
    %vm13 = vcmask 64560
    %14 = vst.msk [vmem:[#allocation0] sm:$0x1] %vm13, %v12
    %s15 = scalar_lea.vmem [#allocation1], 2
    %v16 = vld [vmem:[%s15] sm:$0x1]
    %17 = vrot.lane.b32.xlu0 %v16, 4
    %v18 = vpop.permute.xlu0 %17
    %vm19 = vcmask 48160
    %20 = vst.msk [vmem:[#allocation0] sm:$0x1] %vm19, %v18
    %s21 = scalar_lea.vmem [#allocation1], 1
    %v22 = vld [vmem:[%s21] sm:$0x1]
    %23 = vrot.lane.b32.xlu0 %v22, 2
    %v24 = vpop.permute.xlu0 %23
    %vm25 = vcmask 31760
    %26 = vst.msk [vmem:[#allocation0] sm:$0x1] %vm25, %v24
    %s28 = sshllo.u32 0, 1
    %v30 = vld [vmem:[#allocation0] sm:%s28]
    %s31 = sshllo.u32 0, 1
    %32 = vst [vmem:[%s1] sm:%s31] %v30

// kernel: up_forward.5
$region0: #{up_forward.5}
  #allocation0 [shape = 'u32[]', space=smem, size = 0x4, offset = 0x4, fixed_abs, tag = 'smem constant byte address 0x4 - core index']
  #allocation1 [shape = 'u32[144,128]{1,0:T(1,128)}', space=vmem, size = 0x12000, scoped, tag = 'internal scratch']
  #allocation2 [shape = 'f32[256,128]{1,0:T(8,128)}', space=vmem, size = 0x20000, scoped, tag = 'scratch operand']
  %s0 = inlined_call_operand.vmem [shape: bf16[256,128], index: 0, kind: input, shape index: {}]
  %s1 = inlined_call_operand.vmem [shape: bf16[128,128], index: 1, kind: input, shape index: {}]
  %s2 = inlined_call_operand.vmem [shape: f32[1,128], index: 2, kind: input, shape index: {}]
  %s3 = inlined_call_operand.vmem [shape: bf16[256,128], index: 3, kind: output, shape index: {}]
  %s4 = sld [smem:[#allocation0]]
  $region30: #{up_forward.5} parent=0
    _
  %s6 = ssub.s32 1, %s4
  %s7 = scalar_select 0, %s6, %s4
  // Predicated region
  $region2: #{up_forward.5} parent=0 // pred_check
    _
  $region3: #{up_forward.5} parent=0 // pred_check_branch
    %9 = sbr.rel (0) target = $region5
  $region4: #{up_forward.5} parent=0 // pred_region
    _
  $region5: #{up_forward.5} parent=0 // pred_fallthru
    _
  // Predicated region
  $region6: #{up_forward.5} parent=0 // pred_check
    _
  $region7: #{up_forward.5} parent=0 // pred_check_branch
    %11 = sbr.rel (0) target = $region9
  $region8: #{up_forward.5} parent=0 // pred_region
    _
  $region9: #{up_forward.5} parent=0 // pred_fallthru
    _
  // Predicated region
  $region10: #{up_forward.5} parent=0 // pred_check
    _
  $region11: #{up_forward.5} parent=0 // pred_check_branch
    %13 = sbr.rel (0) target = $region13
  $region12: #{up_forward.5} parent=0 // pred_region
    _
  $region13: #{up_forward.5} parent=0 // pred_fallthru
    _
  %p15 = scmp.eq.s32.totalorder 0, 0
  // Predicated region
  $region14: #{up_forward.5} parent=0 // pred_check
    %p16 = pneg %p15
  $region15: #{up_forward.5} parent=0 // pred_check_branch
    %18 = sbr.rel (%p16) target = $region17
  $region16: #{up_forward.5} parent=0 // pred_region
    %19 = vst [vmem:[#allocation2] sm:$0xff] 0.0
    %20 = vst [vmem:[#allocation2 + $0x8] sm:$0xff] 0.0
    %21 = vst [vmem:[#allocation2 + $0x10] sm:$0xff] 0.0
    %22 = vst [vmem:[#allocation2 + $0x18] sm:$0xff] 0.0
    %23 = vst [vmem:[#allocation2 + $0x20] sm:$0xff] 0.0
    %24 = vst [vmem:[#allocation2 + $0x28] sm:$0xff] 0.0
    %25 = vst [vmem:[#allocation2 + $0x30] sm:$0xff] 0.0
    %26 = vst [vmem:[#allocation2 + $0x38] sm:$0xff] 0.0
    %27 = vst [vmem:[#allocation2 + $0x40] sm:$0xff] 0.0
    %28 = vst [vmem:[#allocation2 + $0x48] sm:$0xff] 0.0
    %29 = vst [vmem:[#allocation2 + $0x50] sm:$0xff] 0.0
    %30 = vst [vmem:[#allocation2 + $0x58] sm:$0xff] 0.0
    %31 = vst [vmem:[#allocation2 + $0x60] sm:$0xff] 0.0
    %32 = vst [vmem:[#allocation2 + $0x68] sm:$0xff] 0.0
    %33 = vst [vmem:[#allocation2 + $0x70] sm:$0xff] 0.0
    %34 = vst [vmem:[#allocation2 + $0x78] sm:$0xff] 0.0
    %35 = vst [vmem:[#allocation2 + $0x80] sm:$0xff] 0.0
    %36 = vst [vmem:[#allocation2 + $0x88] sm:$0xff] 0.0
    %37 = vst [vmem:[#allocation2 + $0x90] sm:$0xff] 0.0
    %38 = vst [vmem:[#allocation2 + $0x98] sm:$0xff] 0.0
    %39 = vst [vmem:[#allocation2 + $0xa0] sm:$0xff] 0.0
    %40 = vst [vmem:[#allocation2 + $0xa8] sm:$0xff] 0.0
    %41 = vst [vmem:[#allocation2 + $0xb0] sm:$0xff] 0.0
    %42 = vst [vmem:[#allocation2 + $0xb8] sm:$0xff] 0.0
    %43 = vst [vmem:[#allocation2 + $0xc0] sm:$0xff] 0.0
    %44 = vst [vmem:[#allocation2 + $0xc8] sm:$0xff] 0.0
    %45 = vst [vmem:[#allocation2 + $0xd0] sm:$0xff] 0.0
    %46 = vst [vmem:[#allocation2 + $0xd8] sm:$0xff] 0.0
    %47 = vst [vmem:[#allocation2 + $0xe0] sm:$0xff] 0.0
    %48 = vst [vmem:[#allocation2 + $0xe8] sm:$0xff] 0.0
    %49 = vst [vmem:[#allocation2 + $0xf0] sm:$0xff] 0.0
    %50 = vst [vmem:[#allocation2 + $0xf8] sm:$0xff] 0.0
  $region17: #{up_forward.5} parent=0 // pred_fallthru
    _
  %v51 = vld [vmem:[#allocation2] sm:$0xff]
  %v52 = vld [vmem:[#allocation2 + $0x8] sm:$0xff]
  %v53 = vld [vmem:[#allocation2 + $0x10] sm:$0xff]
  %v54 = vld [vmem:[#allocation2 + $0x18] sm:$0xff]
  %v55 = vld [vmem:[#allocation2 + $0x20] sm:$0xff]
  %v56 = vld [vmem:[#allocation2 + $0x28] sm:$0xff]
  %v57 = vld [vmem:[#allocation2 + $0x30] sm:$0xff]
  %v58 = vld [vmem:[#allocation2 + $0x38] sm:$0xff]
  %v59 = vld [vmem:[#allocation2 + $0x40] sm:$0xff]
  %v60 = vld [vmem:[#allocation2 + $0x48] sm:$0xff]
  %v61 = vld [vmem:[#allocation2 + $0x50] sm:$0xff]
  %v62 = vld [vmem:[#allocation2 + $0x58] sm:$0xff]
  %v63 = vld [vmem:[#allocation2 + $0x60] sm:$0xff]
  %v64 = vld [vmem:[#allocation2 + $0x68] sm:$0xff]
  %v65 = vld [vmem:[#allocation2 + $0x70] sm:$0xff]
  %v66 = vld [vmem:[#allocation2 + $0x78] sm:$0xff]
  %v67 = vld [vmem:[#allocation2 + $0x80] sm:$0xff]
  %v68 = vld [vmem:[#allocation2 + $0x88] sm:$0xff]
  %v69 = vld [vmem:[#allocation2 + $0x90] sm:$0xff]
  %v70 = vld [vmem:[#allocation2 + $0x98] sm:$0xff]
  %v71 = vld [vmem:[#allocation2 + $0xa0] sm:$0xff]
  %v72 = vld [vmem:[#allocation2 + $0xa8] sm:$0xff]
  %v73 = vld [vmem:[#allocation2 + $0xb0] sm:$0xff]
  %v74 = vld [vmem:[#allocation2 + $0xb8] sm:$0xff]
  %v75 = vld [vmem:[#allocation2 + $0xc0] sm:$0xff]
  %v76 = vld [vmem:[#allocation2 + $0xc8] sm:$0xff]
  %v77 = vld [vmem:[#allocation2 + $0xd0] sm:$0xff]
  %v78 = vld [vmem:[#allocation2 + $0xd8] sm:$0xff]
  %v79 = vld [vmem:[#allocation2 + $0xe0] sm:$0xff]
  %v80 = vld [vmem:[#allocation2 + $0xe8] sm:$0xff]
  %v81 = vld [vmem:[#allocation2 + $0xf0] sm:$0xff]
  %v82 = vld [vmem:[#allocation2 + $0xf8] sm:$0xff]
  %v83 = vld [vmem:[%s0] sm:$0xf]
  %v84 = vld [vmem:[%s0 + $0x4] sm:$0xf]
  %v85 = vld [vmem:[%s0 + $0x8] sm:$0xf]
  %v86 = vld [vmem:[%s0 + $0xc] sm:$0xf]
  %v87 = vld [vmem:[%s0 + $0x10] sm:$0xf]
  %v88 = vld [vmem:[%s0 + $0x14] sm:$0xf]
  %v89 = vld [vmem:[%s0 + $0x18] sm:$0xf]
  %v90 = vld [vmem:[%s0 + $0x1c] sm:$0xf]
  %v91 = vld [vmem:[%s0 + $0x20] sm:$0xf]
  %v92 = vld [vmem:[%s0 + $0x24] sm:$0xf]
  %v93 = vld [vmem:[%s0 + $0x28] sm:$0xf]
  %v94 = vld [vmem:[%s0 + $0x2c] sm:$0xf]
  %v95 = vld [vmem:[%s0 + $0x30] sm:$0xf]
  %v96 = vld [vmem:[%s0 + $0x34] sm:$0xf]
  %v97 = vld [vmem:[%s0 + $0x38] sm:$0xf]
  %v98 = vld [vmem:[%s0 + $0x3c] sm:$0xf]
  %v99 = vld [vmem:[%s0 + $0x40] sm:$0xf]
  %v100 = vld [vmem:[%s0 + $0x44] sm:$0xf]
  %v101 = vld [vmem:[%s0 + $0x48] sm:$0xf]
  %v102 = vld [vmem:[%s0 + $0x4c] sm:$0xf]
  %v103 = vld [vmem:[%s0 + $0x50] sm:$0xf]
  %v104 = vld [vmem:[%s0 + $0x54] sm:$0xf]
  %v105 = vld [vmem:[%s0 + $0x58] sm:$0xf]
  %v106 = vld [vmem:[%s0 + $0x5c] sm:$0xf]
  %v107 = vld [vmem:[%s0 + $0x60] sm:$0xf]
  %v108 = vld [vmem:[%s0 + $0x64] sm:$0xf]
  %v109 = vld [vmem:[%s0 + $0x68] sm:$0xf]
  %v110 = vld [vmem:[%s0 + $0x6c] sm:$0xf]
  %v111 = vld [vmem:[%s0 + $0x70] sm:$0xf]
  %v112 = vld [vmem:[%s0 + $0x74] sm:$0xf]
  %v113 = vld [vmem:[%s0 + $0x78] sm:$0xf]
  %v114 = vld [vmem:[%s0 + $0x7c] sm:$0xf]
  %v115 = vld [vmem:[%s1] sm:$0xf]
  %v116 = vld [vmem:[%s1 + $0x4] sm:$0xf]
  %v117 = vld [vmem:[%s1 + $0x8] sm:$0xf]
  %v118 = vld [vmem:[%s1 + $0xc] sm:$0xf]
  %v119 = vld [vmem:[%s1 + $0x10] sm:$0xf]
  %v120 = vld [vmem:[%s1 + $0x14] sm:$0xf]
  %v121 = vld [vmem:[%s1 + $0x18] sm:$0xf]
  %v122 = vld [vmem:[%s1 + $0x1c] sm:$0xf]
  %v123 = vld [vmem:[%s1 + $0x20] sm:$0xf]
  %v124 = vld [vmem:[%s1 + $0x24] sm:$0xf]
  %v125 = vld [vmem:[%s1 + $0x28] sm:$0xf]
  %v126 = vld [vmem:[%s1 + $0x2c] sm:$0xf]
  %v127 = vld [vmem:[%s1 + $0x30] sm:$0xf]
  %v128 = vld [vmem:[%s1 + $0x34] sm:$0xf]
  %v129 = vld [vmem:[%s1 + $0x38] sm:$0xf]
  %v130 = vld [vmem:[%s1 + $0x3c] sm:$0xf]
  %v163 = vunpack.c.l.b16 %v83
  %v164 = vunpack.c.l.b16 %v84
  %v165 = vunpack.c.l.b16 %v85
  %v166 = vunpack.c.l.b16 %v86
  %v167 = vunpack.c.l.b16 %v87
  %v168 = vunpack.c.l.b16 %v88
  %v169 = vunpack.c.l.b16 %v89
  %v170 = vunpack.c.l.b16 %v90
  %v171 = vunpack.c.l.b16 %v91
  %v172 = vunpack.c.l.b16 %v92
  %v173 = vunpack.c.l.b16 %v93
  %v174 = vunpack.c.l.b16 %v94
  %v175 = vunpack.c.l.b16 %v95
  %v176 = vunpack.c.l.b16 %v96
  %v177 = vunpack.c.l.b16 %v97
  %v178 = vunpack.c.l.b16 %v98
  %v179 = vunpack.c.l.b16 %v99
  %v180 = vunpack.c.l.b16 %v100
  %v181 = vunpack.c.l.b16 %v101
  %v182 = vunpack.c.l.b16 %v102
  %v183 = vunpack.c.l.b16 %v103
  %v184 = vunpack.c.l.b16 %v104
  %v185 = vunpack.c.l.b16 %v105
  %v186 = vunpack.c.l.b16 %v106
  %v187 = vunpack.c.l.b16 %v107
  %v188 = vunpack.c.l.b16 %v108
  %v189 = vunpack.c.l.b16 %v109
  %v190 = vunpack.c.l.b16 %v110
  %v191 = vunpack.c.l.b16 %v111
  %v192 = vunpack.c.l.b16 %v112
  %v193 = vunpack.c.l.b16 %v113
  %v194 = vunpack.c.l.b16 %v114
  %v195 = vpack.c.b16 %v164, %v163
  %v196 = vpack.c.b16 %v166, %v165
  %v197 = vpack.c.b16 %v168, %v167
  %v198 = vpack.c.b16 %v170, %v169
  %v199 = vpack.c.b16 %v172, %v171
  %v200 = vpack.c.b16 %v174, %v173
  %v201 = vpack.c.b16 %v176, %v175
  %v202 = vpack.c.b16 %v178, %v177
  %v203 = vpack.c.b16 %v180, %v179
  %v204 = vpack.c.b16 %v182, %v181
  %v205 = vpack.c.b16 %v184, %v183
  %v206 = vpack.c.b16 %v186, %v185
  %v207 = vpack.c.b16 %v188, %v187
  %v208 = vpack.c.b16 %v190, %v189
  %v209 = vpack.c.b16 %v192, %v191
  %v210 = vpack.c.b16 %v194, %v193
  %v243 = vunpack.c.l.b16 %v115
  %v244 = vunpack.c.l.b16 %v116
  %v245 = vunpack.c.l.b16 %v117
  %v246 = vunpack.c.l.b16 %v118
  %v247 = vunpack.c.l.b16 %v119
  %v248 = vunpack.c.l.b16 %v120
  %v249 = vunpack.c.l.b16 %v121
  %v250 = vunpack.c.l.b16 %v122
  %v251 = vunpack.c.l.b16 %v123
  %v252 = vunpack.c.l.b16 %v124
  %v253 = vunpack.c.l.b16 %v125
  %v254 = vunpack.c.l.b16 %v126
  %v255 = vunpack.c.l.b16 %v127
  %v256 = vunpack.c.l.b16 %v128
  %v257 = vunpack.c.l.b16 %v129
  %v258 = vunpack.c.l.b16 %v130
  %v259 = vpack.c.b16 %v244, %v243
  %v260 = vpack.c.b16 %v246, %v245
  %v261 = vpack.c.b16 %v248, %v247
  %v262 = vpack.c.b16 %v250, %v249
  %v263 = vpack.c.b16 %v252, %v251
  %v264 = vpack.c.b16 %v254, %v253
  %v265 = vpack.c.b16 %v256, %v255
  %v266 = vpack.c.b16 %v258, %v257
  %275 = vmatprep.subr.bf16.mxu0 0
  %276 = vmatpush1.bf16.msra.mxu0 %v259
  %277 = vmatprep.subr.bf16.mxu0 0
  %278 = vmatpush1.bf16.msra.mxu0 %v260
  %279 = vmatprep.subr.bf16.mxu0 0
  %280 = vmatpush1.bf16.msra.mxu0 %v261
  %281 = vmatprep.subr.bf16.mxu0 0
  %282 = vmatpush1.bf16.msra.mxu0 %v262
  %283 = vmatprep.subr.bf16.mxu0 0
  %284 = vmatpush1.bf16.msra.mxu0 %v263
  %285 = vmatprep.subr.bf16.mxu0 0
  %286 = vmatpush1.bf16.msra.mxu0 %v264
  %287 = vmatprep.subr.bf16.mxu0 0
  %288 = vmatpush1.bf16.msra.mxu0 %v265
  %289 = vmatprep.subr.bf16.mxu0 0
  %290 = vmatpush1.bf16.msra.mxu0 %v266
  %291 = vmatprep.subr.bf16.mxu0 0
  %292 = vmatpush1.bf16.msra.mxu0 0
  %293 = vmatprep.subr.bf16.mxu0 0
  %294 = vmatpush1.bf16.msra.mxu0 0
  %295 = vmatprep.subr.bf16.mxu0 0
  %296 = vmatpush1.bf16.msra.mxu0 0
  %297 = vmatprep.subr.bf16.mxu0 0
  %298 = vmatpush1.bf16.msra.mxu0 0
  %299 = vmatprep.subr.bf16.mxu0 0
  %300 = vmatpush1.bf16.msra.mxu0 0
  %301 = vmatprep.subr.bf16.mxu0 0
  %302 = vmatpush1.bf16.msra.mxu0 0
  %303 = vmatprep.subr.bf16.mxu0 0
  %304 = vmatpush1.bf16.msra.mxu0 0
  %305 = vmatprep.subr.bf16.mxu0 0
  %306 = vmatpush1.bf16.msra.mxu0 0
  %307 = vmatprep.mubr.bf16.mxu0 0
  %308 = vmatmul.mubr.bf16.gmra.mrb[0].mxu0 %v195
  %v309 = vpop.f32.mrb[0].mxu0
  %v310 = vadd.f32 0.0, %v309
  %v311 = vpop.f32.mrb[0].mxu0
  %v312 = vpop.f32.mrb[0].mxu0
  %v313 = vadd.f32 0.0, %v312
  %v314 = vpop.f32.mrb[0].mxu0
  %315 = vmatprep.mubr.bf16.mxu0 0
  %316 = vmatmul.mubr.bf16.gmra.mrb[0].mxu0 %v196
  %v317 = vpop.f32.mrb[0].mxu0
  %v318 = vadd.f32 0.0, %v317
  %v319 = vpop.f32.mrb[0].mxu0
  %v320 = vpop.f32.mrb[0].mxu0
  %v321 = vadd.f32 0.0, %v320
  %v322 = vpop.f32.mrb[0].mxu0
  %323 = vmatprep.mubr.bf16.mxu0 0
  %324 = vmatmul.mubr.bf16.gmra.mrb[0].mxu0 %v197
  %v325 = vpop.f32.mrb[0].mxu0
  %v326 = vadd.f32 0.0, %v325
  %v327 = vpop.f32.mrb[0].mxu0
  %v328 = vpop.f32.mrb[0].mxu0
  %v329 = vadd.f32 0.0, %v328
  %v330 = vpop.f32.mrb[0].mxu0
  %331 = vmatprep.mubr.bf16.mxu0 0
  %332 = vmatmul.mubr.bf16.gmra.mrb[0].mxu0 %v198
  %v333 = vpop.f32.mrb[0].mxu0
  %v334 = vadd.f32 0.0, %v333
  %v335 = vpop.f32.mrb[0].mxu0
  %v336 = vpop.f32.mrb[0].mxu0
  %v337 = vadd.f32 0.0, %v336
  %v338 = vpop.f32.mrb[0].mxu0
  %339 = vmatprep.mubr.bf16.mxu0 0
  %340 = vmatmul.mubr.bf16.gmra.mrb[0].mxu0 %v199
  %v341 = vpop.f32.mrb[0].mxu0
  %v342 = vadd.f32 0.0, %v341
  %v343 = vpop.f32.mrb[0].mxu0
  %v344 = vpop.f32.mrb[0].mxu0
  %v345 = vadd.f32 0.0, %v344
  %v346 = vpop.f32.mrb[0].mxu0
  %347 = vmatprep.mubr.bf16.mxu0 0
  %348 = vmatmul.mubr.bf16.gmra.mrb[0].mxu0 %v200
  %v349 = vpop.f32.mrb[0].mxu0
  %v350 = vadd.f32 0.0, %v349
  %v351 = vpop.f32.mrb[0].mxu0
  %v352 = vpop.f32.mrb[0].mxu0
  %v353 = vadd.f32 0.0, %v352
  %v354 = vpop.f32.mrb[0].mxu0
  %355 = vmatprep.mubr.bf16.mxu0 0
  %356 = vmatmul.mubr.bf16.gmra.mrb[0].mxu0 %v201
  %v357 = vpop.f32.mrb[0].mxu0
  %v358 = vadd.f32 0.0, %v357
  %v359 = vpop.f32.mrb[0].mxu0
  %v360 = vpop.f32.mrb[0].mxu0
  %v361 = vadd.f32 0.0, %v360
  %v362 = vpop.f32.mrb[0].mxu0
  %363 = vmatprep.mubr.bf16.mxu0 0
  %364 = vmatmul.mubr.bf16.gmra.mrb[0].mxu0 %v202
  %v365 = vpop.f32.mrb[0].mxu0
  %v366 = vadd.f32 0.0, %v365
  %v367 = vpop.f32.mrb[0].mxu0
  %v368 = vpop.f32.mrb[0].mxu0
  %v369 = vadd.f32 0.0, %v368
  %v370 = vpop.f32.mrb[0].mxu0
  %371 = vmatprep.mubr.bf16.mxu0 0
  %372 = vmatmul.mubr.bf16.gmra.mrb[0].mxu0 %v203
  %v373 = vpop.f32.mrb[0].mxu0
  %v374 = vadd.f32 0.0, %v373
  %v375 = vpop.f32.mrb[0].mxu0
  %v376 = vpop.f32.mrb[0].mxu0
  %v377 = vadd.f32 0.0, %v376
  %v378 = vpop.f32.mrb[0].mxu0
  %379 = vmatprep.mubr.bf16.mxu0 0
  %380 = vmatmul.mubr.bf16.gmra.mrb[0].mxu0 %v204
  %v381 = vpop.f32.mrb[0].mxu0
  %v382 = vadd.f32 0.0, %v381
  %v383 = vpop.f32.mrb[0].mxu0
  %v384 = vpop.f32.mrb[0].mxu0
  %v385 = vadd.f32 0.0, %v384
  %v386 = vpop.f32.mrb[0].mxu0
  %387 = vmatprep.mubr.bf16.mxu0 0
  %388 = vmatmul.mubr.bf16.gmra.mrb[0].mxu0 %v205
  %v389 = vpop.f32.mrb[0].mxu0
  %v390 = vadd.f32 0.0, %v389
  %v391 = vpop.f32.mrb[0].mxu0
  %v392 = vpop.f32.mrb[0].mxu0
  %v393 = vadd.f32 0.0, %v392
  %v394 = vpop.f32.mrb[0].mxu0
  %395 = vmatprep.mubr.bf16.mxu0 0
  %396 = vmatmul.mubr.bf16.gmra.mrb[0].mxu0 %v206
  %v397 = vpop.f32.mrb[0].mxu0
  %v398 = vadd.f32 0.0, %v397
  %v399 = vpop.f32.mrb[0].mxu0
  %v400 = vpop.f32.mrb[0].mxu0
  %v401 = vadd.f32 0.0, %v400
  %v402 = vpop.f32.mrb[0].mxu0
  %403 = vmatprep.mubr.bf16.mxu0 0
  %404 = vmatmul.mubr.bf16.gmra.mrb[0].mxu0 %v207
  %v405 = vpop.f32.mrb[0].mxu0
  %v406 = vadd.f32 0.0, %v405
  %v407 = vpop.f32.mrb[0].mxu0
  %v408 = vpop.f32.mrb[0].mxu0
  %v409 = vadd.f32 0.0, %v408
  %v410 = vpop.f32.mrb[0].mxu0
  %411 = vmatprep.mubr.bf16.mxu0 0
  %412 = vmatmul.mubr.bf16.gmra.mrb[0].mxu0 %v208
  %v413 = vpop.f32.mrb[0].mxu0
  %v414 = vadd.f32 0.0, %v413
  %v415 = vpop.f32.mrb[0].mxu0
  %v416 = vpop.f32.mrb[0].mxu0
  %v417 = vadd.f32 0.0, %v416
  %v418 = vpop.f32.mrb[0].mxu0
  %419 = vmatprep.mubr.bf16.mxu0 0
  %420 = vmatmul.mubr.bf16.gmra.mrb[0].mxu0 %v209
  %v421 = vpop.f32.mrb[0].mxu0
  %v422 = vadd.f32 0.0, %v421
  %v423 = vpop.f32.mrb[0].mxu0
  %v424 = vpop.f32.mrb[0].mxu0
  %v425 = vadd.f32 0.0, %v424
  %v426 = vpop.f32.mrb[0].mxu0
  %427 = vmatprep.mubr.bf16.mxu0 0
  %428 = vmatmul.mubr.bf16.gmra.mrb[0].mxu0 %v210
  %v429 = vpop.f32.mrb[0].mxu0
  %v430 = vadd.f32 0.0, %v429
  %v431 = vpop.f32.mrb[0].mxu0
  %v432 = vpop.f32.mrb[0].mxu0
  %v433 = vadd.f32 0.0, %v432
  %v434 = vpop.f32.mrb[0].mxu0
  %435 = vdwg.mxu0
  %v436 = vadd.f32 %v51, %v310
  %v437 = vadd.f32 %v52, %v313
  %v438 = vadd.f32 %v53, %v318
  %v439 = vadd.f32 %v54, %v321
  %v440 = vadd.f32 %v55, %v326
  %v441 = vadd.f32 %v56, %v329
  %v442 = vadd.f32 %v57, %v334
  %v443 = vadd.f32 %v58, %v337
  %v444 = vadd.f32 %v59, %v342
  %v445 = vadd.f32 %v60, %v345
  %v446 = vadd.f32 %v61, %v350
  %v447 = vadd.f32 %v62, %v353
  %v448 = vadd.f32 %v63, %v358
  %v449 = vadd.f32 %v64, %v361
  %v450 = vadd.f32 %v65, %v366
  %v451 = vadd.f32 %v66, %v369
  %v452 = vadd.f32 %v67, %v374
  %v453 = vadd.f32 %v68, %v377
  %v454 = vadd.f32 %v69, %v382
  %v455 = vadd.f32 %v70, %v385
  %v456 = vadd.f32 %v71, %v390
  %v457 = vadd.f32 %v72, %v393
  %v458 = vadd.f32 %v73, %v398
  %v459 = vadd.f32 %v74, %v401
  %v460 = vadd.f32 %v75, %v406
  %v461 = vadd.f32 %v76, %v409
  %v462 = vadd.f32 %v77, %v414
  %v463 = vadd.f32 %v78, %v417
  %v464 = vadd.f32 %v79, %v422
  %v465 = vadd.f32 %v80, %v425
  %v466 = vadd.f32 %v81, %v430
  %v467 = vadd.f32 %v82, %v433
  %468 = vst [vmem:[#allocation2] sm:$0xff] %v436
  %469 = vst [vmem:[#allocation2 + $0x8] sm:$0xff] %v437
  %470 = vst [vmem:[#allocation2 + $0x10] sm:$0xff] %v438
  %471 = vst [vmem:[#allocation2 + $0x18] sm:$0xff] %v439
  %472 = vst [vmem:[#allocation2 + $0x20] sm:$0xff] %v440
  %473 = vst [vmem:[#allocation2 + $0x28] sm:$0xff] %v441
  %474 = vst [vmem:[#allocation2 + $0x30] sm:$0xff] %v442
  %475 = vst [vmem:[#allocation2 + $0x38] sm:$0xff] %v443
  %476 = vst [vmem:[#allocation2 + $0x40] sm:$0xff] %v444
  %477 = vst [vmem:[#allocation2 + $0x48] sm:$0xff] %v445
  %478 = vst [vmem:[#allocation2 + $0x50] sm:$0xff] %v446
  %479 = vst [vmem:[#allocation2 + $0x58] sm:$0xff] %v447
  %480 = vst [vmem:[#allocation2 + $0x60] sm:$0xff] %v448
  %481 = vst [vmem:[#allocation2 + $0x68] sm:$0xff] %v449
  %482 = vst [vmem:[#allocation2 + $0x70] sm:$0xff] %v450
  %483 = vst [vmem:[#allocation2 + $0x78] sm:$0xff] %v451
  %484 = vst [vmem:[#allocation2 + $0x80] sm:$0xff] %v452
  %485 = vst [vmem:[#allocation2 + $0x88] sm:$0xff] %v453
  %486 = vst [vmem:[#allocation2 + $0x90] sm:$0xff] %v454
  %487 = vst [vmem:[#allocation2 + $0x98] sm:$0xff] %v455
  %488 = vst [vmem:[#allocation2 + $0xa0] sm:$0xff] %v456
  %489 = vst [vmem:[#allocation2 + $0xa8] sm:$0xff] %v457
  %490 = vst [vmem:[#allocation2 + $0xb0] sm:$0xff] %v458
  %491 = vst [vmem:[#allocation2 + $0xb8] sm:$0xff] %v459
  %492 = vst [vmem:[#allocation2 + $0xc0] sm:$0xff] %v460
  %493 = vst [vmem:[#allocation2 + $0xc8] sm:$0xff] %v461
  %494 = vst [vmem:[#allocation2 + $0xd0] sm:$0xff] %v462
  %495 = vst [vmem:[#allocation2 + $0xd8] sm:$0xff] %v463
  %496 = vst [vmem:[#allocation2 + $0xe0] sm:$0xff] %v464
  %497 = vst [vmem:[#allocation2 + $0xe8] sm:$0xff] %v465
  %498 = vst [vmem:[#allocation2 + $0xf0] sm:$0xff] %v466
  %499 = vst [vmem:[#allocation2 + $0xf8] sm:$0xff] %v467
  // Predicated region
  $region18: #{up_forward.5} parent=0 // pred_check
    %p500 = pneg %p15
  $region19: #{up_forward.5} parent=0 // pred_check_branch
    %502 = sbr.rel (%p500) target = $region21
  $region20: #{up_forward.5} parent=0 // pred_region
    %v503 = vld [vmem:[#allocation2] sm:$0xff]
    %v504 = vld [vmem:[#allocation2 + $0x8] sm:$0xff]
    %v505 = vld [vmem:[#allocation2 + $0x10] sm:$0xff]
    %v506 = vld [vmem:[#allocation2 + $0x18] sm:$0xff]
    %v507 = vld [vmem:[#allocation2 + $0x20] sm:$0xff]
    %v508 = vld [vmem:[#allocation2 + $0x28] sm:$0xff]
    %v509 = vld [vmem:[#allocation2 + $0x30] sm:$0xff]
    %v510 = vld [vmem:[#allocation2 + $0x38] sm:$0xff]
    %v511 = vld [vmem:[#allocation2 + $0x40] sm:$0xff]
    %v512 = vld [vmem:[#allocation2 + $0x48] sm:$0xff]
    %v513 = vld [vmem:[#allocation2 + $0x50] sm:$0xff]
    %v514 = vld [vmem:[#allocation2 + $0x58] sm:$0xff]
    %v515 = vld [vmem:[#allocation2 + $0x60] sm:$0xff]
    %v516 = vld [vmem:[#allocation2 + $0x68] sm:$0xff]
    %v517 = vld [vmem:[#allocation2 + $0x70] sm:$0xff]
    %v518 = vld [vmem:[#allocation2 + $0x78] sm:$0xff]
    %v519 = vld [vmem:[#allocation2 + $0x80] sm:$0xff]
    %v520 = vld [vmem:[#allocation2 + $0x88] sm:$0xff]
    %v521 = vld [vmem:[#allocation2 + $0x90] sm:$0xff]
    %v522 = vld [vmem:[#allocation2 + $0x98] sm:$0xff]
    %v523 = vld [vmem:[#allocation2 + $0xa0] sm:$0xff]
    %v524 = vld [vmem:[#allocation2 + $0xa8] sm:$0xff]
    %v525 = vld [vmem:[#allocation2 + $0xb0] sm:$0xff]
    %v526 = vld [vmem:[#allocation2 + $0xb8] sm:$0xff]
    %v527 = vld [vmem:[#allocation2 + $0xc0] sm:$0xff]
    %v528 = vld [vmem:[#allocation2 + $0xc8] sm:$0xff]
    %v529 = vld [vmem:[#allocation2 + $0xd0] sm:$0xff]
    %v530 = vld [vmem:[#allocation2 + $0xd8] sm:$0xff]
    %v531 = vld [vmem:[#allocation2 + $0xe0] sm:$0xff]
    %v532 = vld [vmem:[#allocation2 + $0xe8] sm:$0xff]
    %v533 = vld [vmem:[#allocation2 + $0xf0] sm:$0xff]
    %v534 = vld [vmem:[#allocation2 + $0xf8] sm:$0xff]
    %v535 = vld [vmem:[%s2] sm:$0x1]
    %v537 = vlaneseq
    %v538 = vshrl.u32 %v537, 7
    %v539 = vsub.s32 0, %v538
    %v540 = vrot.slane %v535, %v539
    %v542 = vadd.f32 %v503, %v540
    %v543 = vadd.f32 %v504, %v540
    %v544 = vadd.f32 %v505, %v540
    %v545 = vadd.f32 %v506, %v540
    %v546 = vadd.f32 %v507, %v540
    %v547 = vadd.f32 %v508, %v540
    %v548 = vadd.f32 %v509, %v540
    %v549 = vadd.f32 %v510, %v540
    %v550 = vadd.f32 %v511, %v540
    %v551 = vadd.f32 %v512, %v540
    %v552 = vadd.f32 %v513, %v540
    %v553 = vadd.f32 %v514, %v540
    %v554 = vadd.f32 %v515, %v540
    %v555 = vadd.f32 %v516, %v540
    %v556 = vadd.f32 %v517, %v540
    %v557 = vadd.f32 %v518, %v540
    %v558 = vadd.f32 %v519, %v540
    %v559 = vadd.f32 %v520, %v540
    %v560 = vadd.f32 %v521, %v540
    %v561 = vadd.f32 %v522, %v540
    %v562 = vadd.f32 %v523, %v540
    %v563 = vadd.f32 %v524, %v540
    %v564 = vadd.f32 %v525, %v540
    %v565 = vadd.f32 %v526, %v540
    %v566 = vadd.f32 %v527, %v540
    %v567 = vadd.f32 %v528, %v540
    %v568 = vadd.f32 %v529, %v540
    %v569 = vadd.f32 %v530, %v540
    %v570 = vadd.f32 %v531, %v540
    %v571 = vadd.f32 %v532, %v540
    %v572 = vadd.f32 %v533, %v540
    %v573 = vadd.f32 %v534, %v540
    %v574 = vpack.c.bf16 %v543, %v542
    %v575 = vpack.c.bf16 %v545, %v544
    %v576 = vpack.c.bf16 %v547, %v546
    %v577 = vpack.c.bf16 %v549, %v548
    %v578 = vpack.c.bf16 %v551, %v550
    %v579 = vpack.c.bf16 %v553, %v552
    %v580 = vpack.c.bf16 %v555, %v554
    %v581 = vpack.c.bf16 %v557, %v556
    %v582 = vpack.c.bf16 %v559, %v558
    %v583 = vpack.c.bf16 %v561, %v560
    %v584 = vpack.c.bf16 %v563, %v562
    %v585 = vpack.c.bf16 %v565, %v564
    %v586 = vpack.c.bf16 %v567, %v566
    %v587 = vpack.c.bf16 %v569, %v568
    %v588 = vpack.c.bf16 %v571, %v570
    %v589 = vpack.c.bf16 %v573, %v572
    %v606 = vunpack.c.l.b16 %v574
    %v607 = vunpack.c.h.b16 %v574
    %v608 = vunpack.c.l.b16 %v575
    %v609 = vunpack.c.h.b16 %v575
    %v610 = vunpack.c.l.b16 %v576
    %v611 = vunpack.c.h.b16 %v576
    %v612 = vunpack.c.l.b16 %v577
    %v613 = vunpack.c.h.b16 %v577
    %v614 = vunpack.c.l.b16 %v578
    %v615 = vunpack.c.h.b16 %v578
    %v616 = vunpack.c.l.b16 %v579
    %v617 = vunpack.c.h.b16 %v579
    %v618 = vunpack.c.l.b16 %v580
    %v619 = vunpack.c.h.b16 %v580
    %v620 = vunpack.c.l.b16 %v581
    %v621 = vunpack.c.h.b16 %v581
    %v622 = vunpack.c.l.b16 %v582
    %v623 = vunpack.c.h.b16 %v582
    %v624 = vunpack.c.l.b16 %v583
    %v625 = vunpack.c.h.b16 %v583
    %v626 = vunpack.c.l.b16 %v584
    %v627 = vunpack.c.h.b16 %v584
    %v628 = vunpack.c.l.b16 %v585
    %v629 = vunpack.c.h.b16 %v585
    %v630 = vunpack.c.l.b16 %v586
    %v631 = vunpack.c.h.b16 %v586
    %v632 = vunpack.c.l.b16 %v587
    %v633 = vunpack.c.h.b16 %v587
    %v634 = vunpack.c.l.b16 %v588
    %v635 = vunpack.c.h.b16 %v588
    %v636 = vunpack.c.l.b16 %v589
    %v637 = vunpack.c.h.b16 %v589
    %v638 = vpack.c.b16 %v606, %v606
    %v639 = vpack.c.b16 %v607, %v607
    %v640 = vpack.c.b16 %v608, %v608
    %v641 = vpack.c.b16 %v609, %v609
    %v642 = vpack.c.b16 %v610, %v610
    %v643 = vpack.c.b16 %v611, %v611
    %v644 = vpack.c.b16 %v612, %v612
    %v645 = vpack.c.b16 %v613, %v613
    %v646 = vpack.c.b16 %v614, %v614
    %v647 = vpack.c.b16 %v615, %v615
    %v648 = vpack.c.b16 %v616, %v616
    %v649 = vpack.c.b16 %v617, %v617
    %v650 = vpack.c.b16 %v618, %v618
    %v651 = vpack.c.b16 %v619, %v619
    %v652 = vpack.c.b16 %v620, %v620
    %v653 = vpack.c.b16 %v621, %v621
    %v654 = vpack.c.b16 %v622, %v622
    %v655 = vpack.c.b16 %v623, %v623
    %v656 = vpack.c.b16 %v624, %v624
    %v657 = vpack.c.b16 %v625, %v625
    %v658 = vpack.c.b16 %v626, %v626
    %v659 = vpack.c.b16 %v627, %v627
    %v660 = vpack.c.b16 %v628, %v628
    %v661 = vpack.c.b16 %v629, %v629
    %v662 = vpack.c.b16 %v630, %v630
    %v663 = vpack.c.b16 %v631, %v631
    %v664 = vpack.c.b16 %v632, %v632
    %v665 = vpack.c.b16 %v633, %v633
    %v666 = vpack.c.b16 %v634, %v634
    %v667 = vpack.c.b16 %v635, %v635
    %v668 = vpack.c.b16 %v636, %v636
    %v669 = vpack.c.b16 %v637, %v637
    %702 = vst [vmem:[%s3] sm:$0xf] %v638
    %703 = vst [vmem:[%s3 + $0x4] sm:$0xf] %v639
    %704 = vst [vmem:[%s3 + $0x8] sm:$0xf] %v640
    %705 = vst [vmem:[%s3 + $0xc] sm:$0xf] %v641
    %706 = vst [vmem:[%s3 + $0x10] sm:$0xf] %v642
    %707 = vst [vmem:[%s3 + $0x14] sm:$0xf] %v643
    %708 = vst [vmem:[%s3 + $0x18] sm:$0xf] %v644
    %709 = vst [vmem:[%s3 + $0x1c] sm:$0xf] %v645
    %710 = vst [vmem:[%s3 + $0x20] sm:$0xf] %v646
    %711 = vst [vmem:[%s3 + $0x24] sm:$0xf] %v647
    %712 = vst [vmem:[%s3 + $0x28] sm:$0xf] %v648
    %713 = vst [vmem:[%s3 + $0x2c] sm:$0xf] %v649
    %714 = vst [vmem:[%s3 + $0x30] sm:$0xf] %v650
    %715 = vst [vmem:[%s3 + $0x34] sm:$0xf] %v651
    %716 = vst [vmem:[%s3 + $0x38] sm:$0xf] %v652
    %717 = vst [vmem:[%s3 + $0x3c] sm:$0xf] %v653
    %718 = vst [vmem:[%s3 + $0x40] sm:$0xf] %v654
    %719 = vst [vmem:[%s3 + $0x44] sm:$0xf] %v655
    %720 = vst [vmem:[%s3 + $0x48] sm:$0xf] %v656
    %721 = vst [vmem:[%s3 + $0x4c] sm:$0xf] %v657
    %722 = vst [vmem:[%s3 + $0x50] sm:$0xf] %v658
    %723 = vst [vmem:[%s3 + $0x54] sm:$0xf] %v659
    %724 = vst [vmem:[%s3 + $0x58] sm:$0xf] %v660
    %725 = vst [vmem:[%s3 + $0x5c] sm:$0xf] %v661
    %726 = vst [vmem:[%s3 + $0x60] sm:$0xf] %v662
    %727 = vst [vmem:[%s3 + $0x64] sm:$0xf] %v663
    %728 = vst [vmem:[%s3 + $0x68] sm:$0xf] %v664
    %729 = vst [vmem:[%s3 + $0x6c] sm:$0xf] %v665
    %730 = vst [vmem:[%s3 + $0x70] sm:$0xf] %v666
    %731 = vst [vmem:[%s3 + $0x74] sm:$0xf] %v667
    %732 = vst [vmem:[%s3 + $0x78] sm:$0xf] %v668
    %733 = vst [vmem:[%s3 + $0x7c] sm:$0xf] %v669
  $region21: #{up_forward.5} parent=0 // pred_fallthru
    _
  // Predicated region
  $region22: #{up_forward.5} parent=0 // pred_check
    _
  $region23: #{up_forward.5} parent=0 // pred_check_branch
    %735 = sbr.rel (0) target = $region25
  $region24: #{up_forward.5} parent=0 // pred_region
    _
  $region25: #{up_forward.5} parent=0 // pred_fallthru
    _
  // Predicated region
  $region26: #{up_forward.5} parent=0 // pred_check
    _
  $region27: #{up_forward.5} parent=0 // pred_check_branch
    %737 = sbr.rel (0) target = $region29
  $region28: #{up_forward.5} parent=0 // pred_region
    _
  $region29: #{up_forward.5} parent=0 // pred_fallthru
    _

// kernel: up_forward.6
$region0: #{up_forward.6}
  #allocation0 [shape = 'u32[]', space=smem, size = 0x4, offset = 0x4, fixed_abs, tag = 'smem constant byte address 0x4 - core index']
  #allocation1 [shape = 'u32[144,128]{1,0:T(1,128)}', space=vmem, size = 0x12000, scoped, tag = 'internal scratch']
  #allocation2 [shape = 'f32[256,128]{1,0:T(8,128)}', space=vmem, size = 0x20000, scoped, tag = 'scratch operand']
  %s0 = inlined_call_operand.vmem [shape: bf16[512,128], index: 0, kind: input, shape index: {}]
  %s1 = inlined_call_operand.vmem [shape: bf16[128,128], index: 1, kind: input, shape index: {}]
  %s2 = inlined_call_operand.vmem [shape: bf16[512,128], index: 2, kind: output, shape index: {0}]
  %s3 = inlined_call_operand.vmem [shape: f32[2,1,128], index: 3, kind: output, shape index: {1}]
  %s4 = inlined_call_operand.vmem [shape: f32[2,1,128], index: 4, kind: output, shape index: {2}]
  %5 = xla_tuple %s2, %s3, %s4
  %s6 = sld [smem:[#allocation0]]
  $region65: #{up_forward.6} parent=0
    _
  %s8 = ssub.s32 1, %s6
  %s9 = scalar_select 0, %s8, %s6
  loop: start=0, step=1, limit=4
  $region2: #{up_forward.6} parent=0 // loop_pre_header
    _
  $region3: #{up_forward.6} parent=0 // loop_header
    %s11 = sphi 0, %s15
    %p12 = scmp.ge.s32.totalorder %s11, 4
    %s18 = sphi 0, %s37
    %s19 = sphi 0, %s33
    %s20 = sphi 0, %s29
    %s21 = sphi 0, %s18
    %s22 = sphi 0, %s19
    %s23 = sphi 0, %s20
    %s24 = sphi 0, %s21
    %s25 = sphi 0, %s22
    %s26 = sphi 0, %s23
    %s42 = sphi 0, %s44
    %s45 = sphi 0, %s42
    %s46 = sphi 0, %s45
    %s62 = sphi 0, %s46
    %s70 = sphi 0, %s72
    %s73 = sphi 0, %s70
    %s74 = sphi 0, %s73
    %s90 = sphi 0, %s74
    %s98 = sphi 0, %s100
    %s101 = sphi 0, %s98
    %s102 = sphi 0, %s101
    %s118 = sphi 0, %s102
    %s126 = sphi 0, %s128
    %s129 = sphi 0, %s126
    %s130 = sphi 0, %s129
    %s146 = sphi 0, %s130
    %s154 = sphi 0, %s156
    %s157 = sphi 0, %s154
    %s158 = sphi 0, %s157
    %s174 = sphi 0, %s158
  $region4: #{up_forward.6} parent=0 // loop_header_branch
    %14 = sbr.rel (%p12) target = $region8
  $region5: #{up_forward.6} parent=0 // loop_body
    %s16 = ssub.s32 %s11, 1
    %s17 = ssub.s32 %s11, 2
    %s27 = sadd.s32 1, %s20
    %p28 = scmp.ge.s32.totalorder %s27, 1
    %s29 = scalar_select %p28, 0, %s27
    %s30 = sadd.s32 1, %s19
    %s31 = scalar_select %p28, %s30, %s19
    %p32 = scmp.ge.s32.totalorder %s31, 1
    %s33 = scalar_select %p32, 0, %s31
    %s34 = sadd.s32 1, %s18
    %s35 = scalar_select %p32, %s34, %s18
    %p36 = scmp.ge.s32.totalorder %s35, 2
    %s37 = scalar_select %p36, 0, %s35
    %s38 = ssub.s32 %s18, %s37
    %s39 = ssub.s32 %s20, %s29
    %s40 = sor.u32 %s38, %s39
    %p41 = scmp.eq.s32.totalorder %s40, 0
    %s43 = sadd.s32 %s42, 1
    %s44 = scalar_select %p41, %s42, %s43
    %p47 = pneg %p41
    %p48 = scmp.eq.s32.totalorder %s11, 1
    %p49 = por %p47, %p48
    %p50 = scmp.ne.s32.totalorder %s42, %s45
    %p51 = scmp.eq.s32.totalorder %s11, 0
    %p52 = por %p50, %p51
    %p53 = scmp.ne.s32.totalorder %s42, %s45
    %p54 = scmp.eq.s32.totalorder %s16, 1
    %p55 = por %p53, %p54
    %p56 = scmp.ne.s32.totalorder %s45, %s46
    %p57 = scmp.eq.s32.totalorder %s16, 0
    %p58 = por %p56, %p57
    %p59 = scmp.ne.s32.totalorder %s45, %s46
    %p60 = scmp.eq.s32.totalorder %s17, 1
    %p61 = por %p59, %p60
    %p63 = scmp.ne.s32.totalorder %s46, %s62
    %p64 = scmp.eq.s32.totalorder %s17, 0
    %p65 = por %p63, %p64
    %s66 = ssub.s32 %s20, %s29
    %s67 = ssub.s32 %s19, %s33
    %s68 = sor.u32 %s66, %s67
    %p69 = scmp.eq.s32.totalorder %s68, 0
    %s71 = sadd.s32 %s70, 1
    %s72 = scalar_select %p69, %s70, %s71
    %p75 = pneg %p69
    %p76 = scmp.eq.s32.totalorder %s11, 1
    %p77 = por %p75, %p76
    %p78 = scmp.ne.s32.totalorder %s70, %s73
    %p79 = scmp.eq.s32.totalorder %s11, 0
    %p80 = por %p78, %p79
    %p81 = scmp.ne.s32.totalorder %s70, %s73
    %p82 = scmp.eq.s32.totalorder %s16, 1
    %p83 = por %p81, %p82
    %p84 = scmp.ne.s32.totalorder %s73, %s74
    %p85 = scmp.eq.s32.totalorder %s16, 0
    %p86 = por %p84, %p85
    %p87 = scmp.ne.s32.totalorder %s73, %s74
    %p88 = scmp.eq.s32.totalorder %s17, 1
    %p89 = por %p87, %p88
    %p91 = scmp.ne.s32.totalorder %s74, %s90
    %p92 = scmp.eq.s32.totalorder %s17, 0
    %p93 = por %p91, %p92
    %s94 = ssub.s32 %s18, %s37
    %s95 = ssub.s32 %s19, %s33
    %s96 = sor.u32 %s94, %s95
    %p97 = scmp.eq.s32.totalorder %s96, 0
    %s99 = sadd.s32 %s98, 1
    %s100 = scalar_select %p97, %s98, %s99
    %p103 = pneg %p97
    %p104 = scmp.eq.s32.totalorder %s11, 1
    %p105 = por %p103, %p104
    %p106 = scmp.ne.s32.totalorder %s98, %s101
    %p107 = scmp.eq.s32.totalorder %s11, 0
    %p108 = por %p106, %p107
    %p109 = scmp.ne.s32.totalorder %s98, %s101
    %p110 = scmp.eq.s32.totalorder %s16, 1
    %p111 = por %p109, %p110
    %p112 = scmp.ne.s32.totalorder %s101, %s102
    %p113 = scmp.eq.s32.totalorder %s16, 0
    %p114 = por %p112, %p113
    %p115 = scmp.ne.s32.totalorder %s101, %s102
    %p116 = scmp.eq.s32.totalorder %s17, 1
    %p117 = por %p115, %p116
    %p119 = scmp.ne.s32.totalorder %s102, %s118
    %p120 = scmp.eq.s32.totalorder %s17, 0
    %p121 = por %p119, %p120
    %s122 = ssub.s32 %s18, %s37
    %s123 = ssub.s32 %s19, %s33
    %s124 = sor.u32 %s122, %s123
    %p125 = scmp.eq.s32.totalorder %s124, 0
    %s127 = sadd.s32 %s126, 1
    %s128 = scalar_select %p125, %s126, %s127
    %p131 = pneg %p125
    %p132 = scmp.eq.s32.totalorder %s11, 1
    %p133 = por %p131, %p132
    %p134 = scmp.ne.s32.totalorder %s126, %s129
    %p135 = scmp.eq.s32.totalorder %s11, 0
    %p136 = por %p134, %p135
    %p137 = scmp.ne.s32.totalorder %s126, %s129
    %p138 = scmp.eq.s32.totalorder %s16, 1
    %p139 = por %p137, %p138
    %p140 = scmp.ne.s32.totalorder %s129, %s130
    %p141 = scmp.eq.s32.totalorder %s16, 0
    %p142 = por %p140, %p141
    %p143 = scmp.ne.s32.totalorder %s129, %s130
    %p144 = scmp.eq.s32.totalorder %s17, 1
    %p145 = por %p143, %p144
    %p147 = scmp.ne.s32.totalorder %s130, %s146
    %p148 = scmp.eq.s32.totalorder %s17, 0
    %p149 = por %p147, %p148
    %s150 = ssub.s32 %s18, %s37
    %s151 = ssub.s32 %s19, %s33
    %s152 = sor.u32 %s150, %s151
    %p153 = scmp.eq.s32.totalorder %s152, 0
    %s155 = sadd.s32 %s154, 1
    %s156 = scalar_select %p153, %s154, %s155
    %p159 = pneg %p153
    %p160 = scmp.eq.s32.totalorder %s11, 1
    %p161 = por %p159, %p160
    %p162 = scmp.ne.s32.totalorder %s154, %s157
    %p163 = scmp.eq.s32.totalorder %s11, 0
    %p164 = por %p162, %p163
    %p165 = scmp.ne.s32.totalorder %s154, %s157
    %p166 = scmp.eq.s32.totalorder %s16, 1
    %p167 = por %p165, %p166
    %p168 = scmp.ne.s32.totalorder %s157, %s158
    %p169 = scmp.eq.s32.totalorder %s16, 0
    %p170 = por %p168, %p169
    %p171 = scmp.ne.s32.totalorder %s157, %s158
    %p172 = scmp.eq.s32.totalorder %s17, 1
    %p173 = por %p171, %p172
    %p175 = scmp.ne.s32.totalorder %s158, %s174
    %p176 = scmp.eq.s32.totalorder %s17, 0
    %p177 = por %p175, %p176
    %p178 = scmp.le.s32.totalorder 1, %s11
    %p179 = scmp.lt.s32.totalorder %s11, 3
    %p180 = pnand %p178, %p179
    %p181 = pneg %p180
    // Predicated region
    $region9: #{up_forward.6} parent=5 // pred_check
      _
    $region10: #{up_forward.6} parent=5 // pred_check_branch
      %183 = sbr.rel (%p180) target = $region12
    $region11: #{up_forward.6} parent=5 // pred_region
      %s184 = ssub.s32 %s11, 1
      // Predicated region
      $region13: #{up_forward.6} parent=11 // pred_check
        %p185 = pneg %p86
      $region14: #{up_forward.6} parent=11 // pred_check_branch
        %187 = sbr.rel (%p185) target = $region16
      $region15: #{up_forward.6} parent=11 // pred_region
        %s188 = smul.u32 16, %s23
        %p189 = scmp.lt.s32.totalorder %s188, 15
        %s190 = scalar_select %p189, %s188, 15
        %p191 = scmp.lt.s32.totalorder %s22, 0
        %s192 = scalar_select %p191, %s22, 0
        %s193 = sadd.s32 %s192, %s190
        %s194 = smul.addr %s193, 4
        %s195 = scalar_lea.vmem %s1, %s194
        %s196 = smul.u32 16, %s23
      $region16: #{up_forward.6} parent=11 // pred_fallthru
        _
    $region12: #{up_forward.6} parent=5 // pred_fallthru
      _
    %p197 = scmp.lt.s32.totalorder %s11, 2
    // Predicated region
    $region17: #{up_forward.6} parent=5 // pred_check
      %p198 = pneg %p197
    $region18: #{up_forward.6} parent=5 // pred_check_branch
      %200 = sbr.rel (%p198) target = $region20
    $region19: #{up_forward.6} parent=5 // pred_region
      // Predicated region
      $region21: #{up_forward.6} parent=19 // pred_check
        %p201 = pneg %p52
      $region22: #{up_forward.6} parent=19 // pred_check_branch
        %203 = sbr.rel (%p201) target = $region24
      $region23: #{up_forward.6} parent=19 // pred_region
        %s204 = smul.u32 32, %s18
        %p205 = scmp.lt.s32.totalorder %s204, 63
        %s206 = scalar_select %p205, %s204, 63
        %p207 = scmp.lt.s32.totalorder %s20, 0
        %s208 = scalar_select %p207, %s20, 0
        %s209 = sadd.s32 %s208, %s206
        %s210 = smul.addr %s209, 4
        %s211 = scalar_lea.vmem %s0, %s210
        %s212 = smul.u32 32, %s18
      $region24: #{up_forward.6} parent=19 // pred_fallthru
        _
    $region20: #{up_forward.6} parent=5 // pred_fallthru
      _
    %p213 = scmp.le.s32.totalorder 1, %s11
    %p214 = scmp.lt.s32.totalorder %s11, 3
    %p215 = pnand %p213, %p214
    %p216 = pneg %p215
    // Predicated region
    $region25: #{up_forward.6} parent=5 // pred_check
      _
    $region26: #{up_forward.6} parent=5 // pred_check_branch
      %218 = sbr.rel (%p215) target = $region28
    $region27: #{up_forward.6} parent=5 // pred_region
      %s219 = ssub.s32 %s11, 1
      %s220 = smul.u32 32, %s21
      %p221 = scmp.lt.s32.totalorder %s220, 63
      %s222 = scalar_select %p221, %s220, 63
      %p223 = scmp.lt.s32.totalorder %s23, 0
      %s224 = scalar_select %p223, %s23, 0
      %s225 = sadd.s32 %s224, %s222
      %s226 = smul.addr %s225, 4
      %s227 = scalar_lea.vmem %s0, %s226
      %p228 = pneg %p58
      %p229 = pneg %p55
      %s230 = smul.u32 16, %s23
      %p231 = scmp.lt.s32.totalorder %s230, 15
      %s232 = scalar_select %p231, %s230, 15
      %p233 = scmp.lt.s32.totalorder %s22, 0
      %s234 = scalar_select %p233, %s22, 0
      %s235 = sadd.s32 %s234, %s232
      %s236 = smul.addr %s235, 4
      %s237 = scalar_lea.vmem %s1, %s236
      %p238 = pneg %p86
      %p239 = pneg %p83
      %p240 = pneg %p114
      %p241 = pneg %p111
      %s242 = smul.u32 32, %s21
      %p243 = scmp.lt.s32.totalorder %s242, 63
      %s244 = scalar_select %p243, %s242, 63
      %p245 = scmp.lt.s32.totalorder %s22, 0
      %s246 = scalar_select %p245, %s22, 0
      %s247 = sadd.s32 %s246, %s244
      %s248 = smul.addr %s247, 4
      %s249 = scalar_lea.vmem %s2, %s248
      %p250 = pneg %p142
      %p251 = pneg %p139
      %p252 = scmp.lt.s32.totalorder %s21, 1
      %s253 = scalar_select %p252, %s21, 1
      %p254 = scmp.lt.s32.totalorder %s22, 0
      %s255 = scalar_select %p254, %s22, 0
      %s256 = sadd.s32 %s255, %s253
      %s257 = scalar_lea.vmem %s3, %s256
      %p258 = pneg %p170
      %p259 = pneg %p167
      %p260 = scmp.lt.s32.totalorder %s21, 1
      %s261 = scalar_select %p260, %s21, 1
      %p262 = scmp.lt.s32.totalorder %s22, 0
      %s263 = scalar_select %p262, %s22, 0
      %s264 = sadd.s32 %s263, %s261
      %s265 = scalar_lea.vmem %s4, %s264
      %s266 = smul.u32 32, %s21
      %p267 = scmp.lt.s32.totalorder %s266, 63
      %s268 = scalar_select %p267, %s266, 63
      %p269 = scmp.lt.s32.totalorder %s23, 0
      %s270 = scalar_select %p269, %s23, 0
      %s271 = sadd.s32 %s270, %s268
      %s272 = smul.addr %s271, 4
      %s273 = scalar_lea.vmem %s0, %s272
      %s274 = smul.u32 32, %s21
      %s275 = smul.u32 16, %s23
      %p276 = scmp.lt.s32.totalorder %s275, 15
      %s277 = scalar_select %p276, %s275, 15
      %p278 = scmp.lt.s32.totalorder %s22, 0
      %s279 = scalar_select %p278, %s22, 0
      %s280 = sadd.s32 %s279, %s277
      %s281 = smul.addr %s280, 4
      %s282 = scalar_lea.vmem %s1, %s281
      %s283 = smul.u32 16, %s23
      %s284 = smul.u32 32, %s21
      %p285 = scmp.lt.s32.totalorder %s284, 63
      %s286 = scalar_select %p285, %s284, 63
      %p287 = scmp.lt.s32.totalorder %s22, 0
      %s288 = scalar_select %p287, %s22, 0
      %s289 = sadd.s32 %s288, %s286
      %s290 = smul.addr %s289, 4
      %s291 = scalar_lea.vmem %s2, %s290
      %s292 = smul.u32 32, %s21
      %p293 = scmp.lt.s32.totalorder %s21, 1
      %s294 = scalar_select %p293, %s21, 1
      %p295 = scmp.lt.s32.totalorder %s22, 0
      %s296 = scalar_select %p295, %s22, 0
      %s297 = sadd.s32 %s296, %s294
      %s298 = scalar_lea.vmem %s3, %s297
      %p299 = scmp.lt.s32.totalorder %s21, 1
      %s300 = scalar_select %p299, %s21, 1
      %p301 = scmp.lt.s32.totalorder %s22, 0
      %s302 = scalar_select %p301, %s22, 0
      %s303 = sadd.s32 %s302, %s300
      %s304 = scalar_lea.vmem %s4, %s303
      %p306 = scmp.eq.s32.totalorder %s23, 0
      // Predicated region
      $region29: #{up_forward.6} parent=27 // pred_check
        %p307 = pneg %p306
      $region30: #{up_forward.6} parent=27 // pred_check_branch
        %309 = sbr.rel (%p307) target = $region32
      $region31: #{up_forward.6} parent=27 // pred_region
        %310 = vst [vmem:[#allocation2] sm:$0xff] 0.0
        %311 = vst [vmem:[#allocation2 + $0x8] sm:$0xff] 0.0
        %312 = vst [vmem:[#allocation2 + $0x10] sm:$0xff] 0.0
        %313 = vst [vmem:[#allocation2 + $0x18] sm:$0xff] 0.0
        %314 = vst [vmem:[#allocation2 + $0x20] sm:$0xff] 0.0
        %315 = vst [vmem:[#allocation2 + $0x28] sm:$0xff] 0.0
        %316 = vst [vmem:[#allocation2 + $0x30] sm:$0xff] 0.0
        %317 = vst [vmem:[#allocation2 + $0x38] sm:$0xff] 0.0
        %318 = vst [vmem:[#allocation2 + $0x40] sm:$0xff] 0.0
        %319 = vst [vmem:[#allocation2 + $0x48] sm:$0xff] 0.0
        %320 = vst [vmem:[#allocation2 + $0x50] sm:$0xff] 0.0
        %321 = vst [vmem:[#allocation2 + $0x58] sm:$0xff] 0.0
        %322 = vst [vmem:[#allocation2 + $0x60] sm:$0xff] 0.0
        %323 = vst [vmem:[#allocation2 + $0x68] sm:$0xff] 0.0
        %324 = vst [vmem:[#allocation2 + $0x70] sm:$0xff] 0.0
        %325 = vst [vmem:[#allocation2 + $0x78] sm:$0xff] 0.0
        %326 = vst [vmem:[#allocation2 + $0x80] sm:$0xff] 0.0
        %327 = vst [vmem:[#allocation2 + $0x88] sm:$0xff] 0.0
        %328 = vst [vmem:[#allocation2 + $0x90] sm:$0xff] 0.0
        %329 = vst [vmem:[#allocation2 + $0x98] sm:$0xff] 0.0
        %330 = vst [vmem:[#allocation2 + $0xa0] sm:$0xff] 0.0
        %331 = vst [vmem:[#allocation2 + $0xa8] sm:$0xff] 0.0
        %332 = vst [vmem:[#allocation2 + $0xb0] sm:$0xff] 0.0
        %333 = vst [vmem:[#allocation2 + $0xb8] sm:$0xff] 0.0
        %334 = vst [vmem:[#allocation2 + $0xc0] sm:$0xff] 0.0
        %335 = vst [vmem:[#allocation2 + $0xc8] sm:$0xff] 0.0
        %336 = vst [vmem:[#allocation2 + $0xd0] sm:$0xff] 0.0
        %337 = vst [vmem:[#allocation2 + $0xd8] sm:$0xff] 0.0
        %338 = vst [vmem:[#allocation2 + $0xe0] sm:$0xff] 0.0
        %339 = vst [vmem:[#allocation2 + $0xe8] sm:$0xff] 0.0
        %340 = vst [vmem:[#allocation2 + $0xf0] sm:$0xff] 0.0
        %341 = vst [vmem:[#allocation2 + $0xf8] sm:$0xff] 0.0
      $region32: #{up_forward.6} parent=27 // pred_fallthru
        _
      %v342 = vld [vmem:[#allocation2] sm:$0xff]
      %v343 = vld [vmem:[#allocation2 + $0x8] sm:$0xff]
      %v344 = vld [vmem:[#allocation2 + $0x10] sm:$0xff]
      %v345 = vld [vmem:[#allocation2 + $0x18] sm:$0xff]
      %v346 = vld [vmem:[#allocation2 + $0x20] sm:$0xff]
      %v347 = vld [vmem:[#allocation2 + $0x28] sm:$0xff]
      %v348 = vld [vmem:[#allocation2 + $0x30] sm:$0xff]
      %v349 = vld [vmem:[#allocation2 + $0x38] sm:$0xff]
      %v350 = vld [vmem:[#allocation2 + $0x40] sm:$0xff]
      %v351 = vld [vmem:[#allocation2 + $0x48] sm:$0xff]
      %v352 = vld [vmem:[#allocation2 + $0x50] sm:$0xff]
      %v353 = vld [vmem:[#allocation2 + $0x58] sm:$0xff]
      %v354 = vld [vmem:[#allocation2 + $0x60] sm:$0xff]
      %v355 = vld [vmem:[#allocation2 + $0x68] sm:$0xff]
      %v356 = vld [vmem:[#allocation2 + $0x70] sm:$0xff]
      %v357 = vld [vmem:[#allocation2 + $0x78] sm:$0xff]
      %v358 = vld [vmem:[#allocation2 + $0x80] sm:$0xff]
      %v359 = vld [vmem:[#allocation2 + $0x88] sm:$0xff]
      %v360 = vld [vmem:[#allocation2 + $0x90] sm:$0xff]
      %v361 = vld [vmem:[#allocation2 + $0x98] sm:$0xff]
      %v362 = vld [vmem:[#allocation2 + $0xa0] sm:$0xff]
      %v363 = vld [vmem:[#allocation2 + $0xa8] sm:$0xff]
      %v364 = vld [vmem:[#allocation2 + $0xb0] sm:$0xff]
      %v365 = vld [vmem:[#allocation2 + $0xb8] sm:$0xff]
      %v366 = vld [vmem:[#allocation2 + $0xc0] sm:$0xff]
      %v367 = vld [vmem:[#allocation2 + $0xc8] sm:$0xff]
      %v368 = vld [vmem:[#allocation2 + $0xd0] sm:$0xff]
      %v369 = vld [vmem:[#allocation2 + $0xd8] sm:$0xff]
      %v370 = vld [vmem:[#allocation2 + $0xe0] sm:$0xff]
      %v371 = vld [vmem:[#allocation2 + $0xe8] sm:$0xff]
      %v372 = vld [vmem:[#allocation2 + $0xf0] sm:$0xff]
      %v373 = vld [vmem:[#allocation2 + $0xf8] sm:$0xff]
      %v374 = vld [vmem:[%s273] sm:$0xf]
      %v375 = vld [vmem:[%s273 + $0x4] sm:$0xf]
      %v376 = vld [vmem:[%s273 + $0x8] sm:$0xf]
      %v377 = vld [vmem:[%s273 + $0xc] sm:$0xf]
      %v378 = vld [vmem:[%s273 + $0x10] sm:$0xf]
      %v379 = vld [vmem:[%s273 + $0x14] sm:$0xf]
      %v380 = vld [vmem:[%s273 + $0x18] sm:$0xf]
      %v381 = vld [vmem:[%s273 + $0x1c] sm:$0xf]
      %v382 = vld [vmem:[%s273 + $0x20] sm:$0xf]
      %v383 = vld [vmem:[%s273 + $0x24] sm:$0xf]
      %v384 = vld [vmem:[%s273 + $0x28] sm:$0xf]
      %v385 = vld [vmem:[%s273 + $0x2c] sm:$0xf]
      %v386 = vld [vmem:[%s273 + $0x30] sm:$0xf]
      %v387 = vld [vmem:[%s273 + $0x34] sm:$0xf]
      %v388 = vld [vmem:[%s273 + $0x38] sm:$0xf]
      %v389 = vld [vmem:[%s273 + $0x3c] sm:$0xf]
      %v390 = vld [vmem:[%s273 + $0x40] sm:$0xf]
      %v391 = vld [vmem:[%s273 + $0x44] sm:$0xf]
      %v392 = vld [vmem:[%s273 + $0x48] sm:$0xf]
      %v393 = vld [vmem:[%s273 + $0x4c] sm:$0xf]
      %v394 = vld [vmem:[%s273 + $0x50] sm:$0xf]
      %v395 = vld [vmem:[%s273 + $0x54] sm:$0xf]
      %v396 = vld [vmem:[%s273 + $0x58] sm:$0xf]
      %v397 = vld [vmem:[%s273 + $0x5c] sm:$0xf]
      %v398 = vld [vmem:[%s273 + $0x60] sm:$0xf]
      %v399 = vld [vmem:[%s273 + $0x64] sm:$0xf]
      %v400 = vld [vmem:[%s273 + $0x68] sm:$0xf]
      %v401 = vld [vmem:[%s273 + $0x6c] sm:$0xf]
      %v402 = vld [vmem:[%s273 + $0x70] sm:$0xf]
      %v403 = vld [vmem:[%s273 + $0x74] sm:$0xf]
      %v404 = vld [vmem:[%s273 + $0x78] sm:$0xf]
      %v405 = vld [vmem:[%s273 + $0x7c] sm:$0xf]
      %v406 = vld [vmem:[%s282] sm:$0xf]
      %v407 = vld [vmem:[%s282 + $0x4] sm:$0xf]
      %v408 = vld [vmem:[%s282 + $0x8] sm:$0xf]
      %v409 = vld [vmem:[%s282 + $0xc] sm:$0xf]
      %v410 = vld [vmem:[%s282 + $0x10] sm:$0xf]
      %v411 = vld [vmem:[%s282 + $0x14] sm:$0xf]
      %v412 = vld [vmem:[%s282 + $0x18] sm:$0xf]
      %v413 = vld [vmem:[%s282 + $0x1c] sm:$0xf]
      %v414 = vld [vmem:[%s282 + $0x20] sm:$0xf]
      %v415 = vld [vmem:[%s282 + $0x24] sm:$0xf]
      %v416 = vld [vmem:[%s282 + $0x28] sm:$0xf]
      %v417 = vld [vmem:[%s282 + $0x2c] sm:$0xf]
      %v418 = vld [vmem:[%s282 + $0x30] sm:$0xf]
      %v419 = vld [vmem:[%s282 + $0x34] sm:$0xf]
      %v420 = vld [vmem:[%s282 + $0x38] sm:$0xf]
      %v421 = vld [vmem:[%s282 + $0x3c] sm:$0xf]
      %v454 = vunpack.c.l.b16 %v374
      %v455 = vunpack.c.l.b16 %v375
      %v456 = vunpack.c.l.b16 %v376
      %v457 = vunpack.c.l.b16 %v377
      %v458 = vunpack.c.l.b16 %v378
      %v459 = vunpack.c.l.b16 %v379
      %v460 = vunpack.c.l.b16 %v380
      %v461 = vunpack.c.l.b16 %v381
      %v462 = vunpack.c.l.b16 %v382
      %v463 = vunpack.c.l.b16 %v383
      %v464 = vunpack.c.l.b16 %v384
      %v465 = vunpack.c.l.b16 %v385
      %v466 = vunpack.c.l.b16 %v386
      %v467 = vunpack.c.l.b16 %v387
      %v468 = vunpack.c.l.b16 %v388
      %v469 = vunpack.c.l.b16 %v389
      %v470 = vunpack.c.l.b16 %v390
      %v471 = vunpack.c.l.b16 %v391
      %v472 = vunpack.c.l.b16 %v392
      %v473 = vunpack.c.l.b16 %v393
      %v474 = vunpack.c.l.b16 %v394
      %v475 = vunpack.c.l.b16 %v395
      %v476 = vunpack.c.l.b16 %v396
      %v477 = vunpack.c.l.b16 %v397
      %v478 = vunpack.c.l.b16 %v398
      %v479 = vunpack.c.l.b16 %v399
      %v480 = vunpack.c.l.b16 %v400
      %v481 = vunpack.c.l.b16 %v401
      %v482 = vunpack.c.l.b16 %v402
      %v483 = vunpack.c.l.b16 %v403
      %v484 = vunpack.c.l.b16 %v404
      %v485 = vunpack.c.l.b16 %v405
      %v486 = vpack.c.b16 %v455, %v454
      %v487 = vpack.c.b16 %v457, %v456
      %v488 = vpack.c.b16 %v459, %v458
      %v489 = vpack.c.b16 %v461, %v460
      %v490 = vpack.c.b16 %v463, %v462
      %v491 = vpack.c.b16 %v465, %v464
      %v492 = vpack.c.b16 %v467, %v466
      %v493 = vpack.c.b16 %v469, %v468
      %v494 = vpack.c.b16 %v471, %v470
      %v495 = vpack.c.b16 %v473, %v472
      %v496 = vpack.c.b16 %v475, %v474
      %v497 = vpack.c.b16 %v477, %v476
      %v498 = vpack.c.b16 %v479, %v478
      %v499 = vpack.c.b16 %v481, %v480
      %v500 = vpack.c.b16 %v483, %v482
      %v501 = vpack.c.b16 %v485, %v484
      %v534 = vunpack.c.l.b16 %v406
      %v535 = vunpack.c.l.b16 %v407
      %v536 = vunpack.c.l.b16 %v408
      %v537 = vunpack.c.l.b16 %v409
      %v538 = vunpack.c.l.b16 %v410
      %v539 = vunpack.c.l.b16 %v411
      %v540 = vunpack.c.l.b16 %v412
      %v541 = vunpack.c.l.b16 %v413
      %v542 = vunpack.c.l.b16 %v414
      %v543 = vunpack.c.l.b16 %v415
      %v544 = vunpack.c.l.b16 %v416
      %v545 = vunpack.c.l.b16 %v417
      %v546 = vunpack.c.l.b16 %v418
      %v547 = vunpack.c.l.b16 %v419
      %v548 = vunpack.c.l.b16 %v420
      %v549 = vunpack.c.l.b16 %v421
      %v550 = vpack.c.b16 %v535, %v534
      %v551 = vpack.c.b16 %v537, %v536
      %v552 = vpack.c.b16 %v539, %v538
      %v553 = vpack.c.b16 %v541, %v540
      %v554 = vpack.c.b16 %v543, %v542
      %v555 = vpack.c.b16 %v545, %v544
      %v556 = vpack.c.b16 %v547, %v546
      %v557 = vpack.c.b16 %v549, %v548
      %566 = vmatprep.subr.bf16.mxu0 0
      %567 = vmatpush1.bf16.msra.mxu0 %v550
      %568 = vmatprep.subr.bf16.mxu0 0
      %569 = vmatpush1.bf16.msra.mxu0 %v551
      %570 = vmatprep.subr.bf16.mxu0 0
      %571 = vmatpush1.bf16.msra.mxu0 %v552
      %572 = vmatprep.subr.bf16.mxu0 0
      %573 = vmatpush1.bf16.msra.mxu0 %v553
      %574 = vmatprep.subr.bf16.mxu0 0
      %575 = vmatpush1.bf16.msra.mxu0 %v554
      %576 = vmatprep.subr.bf16.mxu0 0
      %577 = vmatpush1.bf16.msra.mxu0 %v555
      %578 = vmatprep.subr.bf16.mxu0 0
      %579 = vmatpush1.bf16.msra.mxu0 %v556
      %580 = vmatprep.subr.bf16.mxu0 0
      %581 = vmatpush1.bf16.msra.mxu0 %v557
      %582 = vmatprep.subr.bf16.mxu0 0
      %583 = vmatpush1.bf16.msra.mxu0 0
      %584 = vmatprep.subr.bf16.mxu0 0
      %585 = vmatpush1.bf16.msra.mxu0 0
      %586 = vmatprep.subr.bf16.mxu0 0
      %587 = vmatpush1.bf16.msra.mxu0 0
      %588 = vmatprep.subr.bf16.mxu0 0
      %589 = vmatpush1.bf16.msra.mxu0 0
      %590 = vmatprep.subr.bf16.mxu0 0
      %591 = vmatpush1.bf16.msra.mxu0 0
      %592 = vmatprep.subr.bf16.mxu0 0
      %593 = vmatpush1.bf16.msra.mxu0 0
      %594 = vmatprep.subr.bf16.mxu0 0
      %595 = vmatpush1.bf16.msra.mxu0 0
      %596 = vmatprep.subr.bf16.mxu0 0
      %597 = vmatpush1.bf16.msra.mxu0 0
      %598 = vmatprep.mubr.bf16.mxu0 0
      %599 = vmatmul.mubr.bf16.gmra.mrb[0].mxu0 %v486
      %v600 = vpop.f32.mrb[0].mxu0
      %v601 = vadd.f32 0.0, %v600
      %v602 = vpop.f32.mrb[0].mxu0
      %v603 = vpop.f32.mrb[0].mxu0
      %v604 = vadd.f32 0.0, %v603
      %v605 = vpop.f32.mrb[0].mxu0
      %606 = vmatprep.mubr.bf16.mxu0 0
      %607 = vmatmul.mubr.bf16.gmra.mrb[0].mxu0 %v487
      %v608 = vpop.f32.mrb[0].mxu0
      %v609 = vadd.f32 0.0, %v608
      %v610 = vpop.f32.mrb[0].mxu0
      %v611 = vpop.f32.mrb[0].mxu0
      %v612 = vadd.f32 0.0, %v611
      %v613 = vpop.f32.mrb[0].mxu0
      %614 = vmatprep.mubr.bf16.mxu0 0
      %615 = vmatmul.mubr.bf16.gmra.mrb[0].mxu0 %v488
      %v616 = vpop.f32.mrb[0].mxu0
      %v617 = vadd.f32 0.0, %v616
      %v618 = vpop.f32.mrb[0].mxu0
      %v619 = vpop.f32.mrb[0].mxu0
      %v620 = vadd.f32 0.0, %v619
      %v621 = vpop.f32.mrb[0].mxu0
      %622 = vmatprep.mubr.bf16.mxu0 0
      %623 = vmatmul.mubr.bf16.gmra.mrb[0].mxu0 %v489
      %v624 = vpop.f32.mrb[0].mxu0
      %v625 = vadd.f32 0.0, %v624
      %v626 = vpop.f32.mrb[0].mxu0
      %v627 = vpop.f32.mrb[0].mxu0
      %v628 = vadd.f32 0.0, %v627
      %v629 = vpop.f32.mrb[0].mxu0
      %630 = vmatprep.mubr.bf16.mxu0 0
      %631 = vmatmul.mubr.bf16.gmra.mrb[0].mxu0 %v490
      %v632 = vpop.f32.mrb[0].mxu0
      %v633 = vadd.f32 0.0, %v632
      %v634 = vpop.f32.mrb[0].mxu0
      %v635 = vpop.f32.mrb[0].mxu0
      %v636 = vadd.f32 0.0, %v635
      %v637 = vpop.f32.mrb[0].mxu0
      %638 = vmatprep.mubr.bf16.mxu0 0
      %639 = vmatmul.mubr.bf16.gmra.mrb[0].mxu0 %v491
      %v640 = vpop.f32.mrb[0].mxu0
      %v641 = vadd.f32 0.0, %v640
      %v642 = vpop.f32.mrb[0].mxu0
      %v643 = vpop.f32.mrb[0].mxu0
      %v644 = vadd.f32 0.0, %v643
      %v645 = vpop.f32.mrb[0].mxu0
      %646 = vmatprep.mubr.bf16.mxu0 0
      %647 = vmatmul.mubr.bf16.gmra.mrb[0].mxu0 %v492
      %v648 = vpop.f32.mrb[0].mxu0
      %v649 = vadd.f32 0.0, %v648
      %v650 = vpop.f32.mrb[0].mxu0
      %v651 = vpop.f32.mrb[0].mxu0
      %v652 = vadd.f32 0.0, %v651
      %v653 = vpop.f32.mrb[0].mxu0
      %654 = vmatprep.mubr.bf16.mxu0 0
      %655 = vmatmul.mubr.bf16.gmra.mrb[0].mxu0 %v493
      %v656 = vpop.f32.mrb[0].mxu0
      %v657 = vadd.f32 0.0, %v656
      %v658 = vpop.f32.mrb[0].mxu0
      %v659 = vpop.f32.mrb[0].mxu0
      %v660 = vadd.f32 0.0, %v659
      %v661 = vpop.f32.mrb[0].mxu0
      %662 = vmatprep.mubr.bf16.mxu0 0
      %663 = vmatmul.mubr.bf16.gmra.mrb[0].mxu0 %v494
      %v664 = vpop.f32.mrb[0].mxu0
      %v665 = vadd.f32 0.0, %v664
      %v666 = vpop.f32.mrb[0].mxu0
      %v667 = vpop.f32.mrb[0].mxu0
      %v668 = vadd.f32 0.0, %v667
      %v669 = vpop.f32.mrb[0].mxu0
      %670 = vmatprep.mubr.bf16.mxu0 0
      %671 = vmatmul.mubr.bf16.gmra.mrb[0].mxu0 %v495
      %v672 = vpop.f32.mrb[0].mxu0
      %v673 = vadd.f32 0.0, %v672
      %v674 = vpop.f32.mrb[0].mxu0
      %v675 = vpop.f32.mrb[0].mxu0
      %v676 = vadd.f32 0.0, %v675
      %v677 = vpop.f32.mrb[0].mxu0
      %678 = vmatprep.mubr.bf16.mxu0 0
      %679 = vmatmul.mubr.bf16.gmra.mrb[0].mxu0 %v496
      %v680 = vpop.f32.mrb[0].mxu0
      %v681 = vadd.f32 0.0, %v680
      %v682 = vpop.f32.mrb[0].mxu0
      %v683 = vpop.f32.mrb[0].mxu0
      %v684 = vadd.f32 0.0, %v683
      %v685 = vpop.f32.mrb[0].mxu0
      %686 = vmatprep.mubr.bf16.mxu0 0
      %687 = vmatmul.mubr.bf16.gmra.mrb[0].mxu0 %v497
      %v688 = vpop.f32.mrb[0].mxu0
      %v689 = vadd.f32 0.0, %v688
      %v690 = vpop.f32.mrb[0].mxu0
      %v691 = vpop.f32.mrb[0].mxu0
      %v692 = vadd.f32 0.0, %v691
      %v693 = vpop.f32.mrb[0].mxu0
      %694 = vmatprep.mubr.bf16.mxu0 0
      %695 = vmatmul.mubr.bf16.gmra.mrb[0].mxu0 %v498
      %v696 = vpop.f32.mrb[0].mxu0
      %v697 = vadd.f32 0.0, %v696
      %v698 = vpop.f32.mrb[0].mxu0
      %v699 = vpop.f32.mrb[0].mxu0
      %v700 = vadd.f32 0.0, %v699
      %v701 = vpop.f32.mrb[0].mxu0
      %702 = vmatprep.mubr.bf16.mxu0 0
      %703 = vmatmul.mubr.bf16.gmra.mrb[0].mxu0 %v499
      %v704 = vpop.f32.mrb[0].mxu0
      %v705 = vadd.f32 0.0, %v704
      %v706 = vpop.f32.mrb[0].mxu0
      %v707 = vpop.f32.mrb[0].mxu0
      %v708 = vadd.f32 0.0, %v707
      %v709 = vpop.f32.mrb[0].mxu0
      %710 = vmatprep.mubr.bf16.mxu0 0
      %711 = vmatmul.mubr.bf16.gmra.mrb[0].mxu0 %v500
      %v712 = vpop.f32.mrb[0].mxu0
      %v713 = vadd.f32 0.0, %v712
      %v714 = vpop.f32.mrb[0].mxu0
      %v715 = vpop.f32.mrb[0].mxu0
      %v716 = vadd.f32 0.0, %v715
      %v717 = vpop.f32.mrb[0].mxu0
      %718 = vmatprep.mubr.bf16.mxu0 0
      %719 = vmatmul.mubr.bf16.gmra.mrb[0].mxu0 %v501
      %v720 = vpop.f32.mrb[0].mxu0
      %v721 = vadd.f32 0.0, %v720
      %v722 = vpop.f32.mrb[0].mxu0
      %v723 = vpop.f32.mrb[0].mxu0
      %v724 = vadd.f32 0.0, %v723
      %v725 = vpop.f32.mrb[0].mxu0
      %726 = vdwg.mxu0
      %v727 = vadd.f32 %v342, %v601
      %v728 = vadd.f32 %v343, %v604
      %v729 = vadd.f32 %v344, %v609
      %v730 = vadd.f32 %v345, %v612
      %v731 = vadd.f32 %v346, %v617
      %v732 = vadd.f32 %v347, %v620
      %v733 = vadd.f32 %v348, %v625
      %v734 = vadd.f32 %v349, %v628
      %v735 = vadd.f32 %v350, %v633
      %v736 = vadd.f32 %v351, %v636
      %v737 = vadd.f32 %v352, %v641
      %v738 = vadd.f32 %v353, %v644
      %v739 = vadd.f32 %v354, %v649
      %v740 = vadd.f32 %v355, %v652
      %v741 = vadd.f32 %v356, %v657
      %v742 = vadd.f32 %v357, %v660
      %v743 = vadd.f32 %v358, %v665
      %v744 = vadd.f32 %v359, %v668
      %v745 = vadd.f32 %v360, %v673
      %v746 = vadd.f32 %v361, %v676
      %v747 = vadd.f32 %v362, %v681
      %v748 = vadd.f32 %v363, %v684
      %v749 = vadd.f32 %v364, %v689
      %v750 = vadd.f32 %v365, %v692
      %v751 = vadd.f32 %v366, %v697
      %v752 = vadd.f32 %v367, %v700
      %v753 = vadd.f32 %v368, %v705
      %v754 = vadd.f32 %v369, %v708
      %v755 = vadd.f32 %v370, %v713
      %v756 = vadd.f32 %v371, %v716
      %v757 = vadd.f32 %v372, %v721
      %v758 = vadd.f32 %v373, %v724
      %759 = vst [vmem:[#allocation2] sm:$0xff] %v727
      %760 = vst [vmem:[#allocation2 + $0x8] sm:$0xff] %v728
      %761 = vst [vmem:[#allocation2 + $0x10] sm:$0xff] %v729
      %762 = vst [vmem:[#allocation2 + $0x18] sm:$0xff] %v730
      %763 = vst [vmem:[#allocation2 + $0x20] sm:$0xff] %v731
      %764 = vst [vmem:[#allocation2 + $0x28] sm:$0xff] %v732
      %765 = vst [vmem:[#allocation2 + $0x30] sm:$0xff] %v733
      %766 = vst [vmem:[#allocation2 + $0x38] sm:$0xff] %v734
      %767 = vst [vmem:[#allocation2 + $0x40] sm:$0xff] %v735
      %768 = vst [vmem:[#allocation2 + $0x48] sm:$0xff] %v736
      %769 = vst [vmem:[#allocation2 + $0x50] sm:$0xff] %v737
      %770 = vst [vmem:[#allocation2 + $0x58] sm:$0xff] %v738
      %771 = vst [vmem:[#allocation2 + $0x60] sm:$0xff] %v739
      %772 = vst [vmem:[#allocation2 + $0x68] sm:$0xff] %v740
      %773 = vst [vmem:[#allocation2 + $0x70] sm:$0xff] %v741
      %774 = vst [vmem:[#allocation2 + $0x78] sm:$0xff] %v742
      %775 = vst [vmem:[#allocation2 + $0x80] sm:$0xff] %v743
      %776 = vst [vmem:[#allocation2 + $0x88] sm:$0xff] %v744
      %777 = vst [vmem:[#allocation2 + $0x90] sm:$0xff] %v745
      %778 = vst [vmem:[#allocation2 + $0x98] sm:$0xff] %v746
      %779 = vst [vmem:[#allocation2 + $0xa0] sm:$0xff] %v747
      %780 = vst [vmem:[#allocation2 + $0xa8] sm:$0xff] %v748
      %781 = vst [vmem:[#allocation2 + $0xb0] sm:$0xff] %v749
      %782 = vst [vmem:[#allocation2 + $0xb8] sm:$0xff] %v750
      %783 = vst [vmem:[#allocation2 + $0xc0] sm:$0xff] %v751
      %784 = vst [vmem:[#allocation2 + $0xc8] sm:$0xff] %v752
      %785 = vst [vmem:[#allocation2 + $0xd0] sm:$0xff] %v753
      %786 = vst [vmem:[#allocation2 + $0xd8] sm:$0xff] %v754
      %787 = vst [vmem:[#allocation2 + $0xe0] sm:$0xff] %v755
      %788 = vst [vmem:[#allocation2 + $0xe8] sm:$0xff] %v756
      %789 = vst [vmem:[#allocation2 + $0xf0] sm:$0xff] %v757
      %790 = vst [vmem:[#allocation2 + $0xf8] sm:$0xff] %v758
      // Predicated region
      $region33: #{up_forward.6} parent=27 // pred_check
        %p791 = pneg %p306
      $region34: #{up_forward.6} parent=27 // pred_check_branch
        %793 = sbr.rel (%p791) target = $region36
      $region35: #{up_forward.6} parent=27 // pred_region
        %v794 = vld [vmem:[#allocation2] sm:$0xff]
        %v795 = vld [vmem:[#allocation2 + $0x8] sm:$0xff]
        %v796 = vld [vmem:[#allocation2 + $0x10] sm:$0xff]
        %v797 = vld [vmem:[#allocation2 + $0x18] sm:$0xff]
        %v798 = vld [vmem:[#allocation2 + $0x20] sm:$0xff]
        %v799 = vld [vmem:[#allocation2 + $0x28] sm:$0xff]
        %v800 = vld [vmem:[#allocation2 + $0x30] sm:$0xff]
        %v801 = vld [vmem:[#allocation2 + $0x38] sm:$0xff]
        %v802 = vld [vmem:[#allocation2 + $0x40] sm:$0xff]
        %v803 = vld [vmem:[#allocation2 + $0x48] sm:$0xff]
        %v804 = vld [vmem:[#allocation2 + $0x50] sm:$0xff]
        %v805 = vld [vmem:[#allocation2 + $0x58] sm:$0xff]
        %v806 = vld [vmem:[#allocation2 + $0x60] sm:$0xff]
        %v807 = vld [vmem:[#allocation2 + $0x68] sm:$0xff]
        %v808 = vld [vmem:[#allocation2 + $0x70] sm:$0xff]
        %v809 = vld [vmem:[#allocation2 + $0x78] sm:$0xff]
        %v810 = vld [vmem:[#allocation2 + $0x80] sm:$0xff]
        %v811 = vld [vmem:[#allocation2 + $0x88] sm:$0xff]
        %v812 = vld [vmem:[#allocation2 + $0x90] sm:$0xff]
        %v813 = vld [vmem:[#allocation2 + $0x98] sm:$0xff]
        %v814 = vld [vmem:[#allocation2 + $0xa0] sm:$0xff]
        %v815 = vld [vmem:[#allocation2 + $0xa8] sm:$0xff]
        %v816 = vld [vmem:[#allocation2 + $0xb0] sm:$0xff]
        %v817 = vld [vmem:[#allocation2 + $0xb8] sm:$0xff]
        %v818 = vld [vmem:[#allocation2 + $0xc0] sm:$0xff]
        %v819 = vld [vmem:[#allocation2 + $0xc8] sm:$0xff]
        %v820 = vld [vmem:[#allocation2 + $0xd0] sm:$0xff]
        %v821 = vld [vmem:[#allocation2 + $0xd8] sm:$0xff]
        %v822 = vld [vmem:[#allocation2 + $0xe0] sm:$0xff]
        %v823 = vld [vmem:[#allocation2 + $0xe8] sm:$0xff]
        %v824 = vld [vmem:[#allocation2 + $0xf0] sm:$0xff]
        %v825 = vld [vmem:[#allocation2 + $0xf8] sm:$0xff]
        %v826 = vpack.c.bf16 %v795, %v794
        %v827 = vpack.c.bf16 %v797, %v796
        %v828 = vpack.c.bf16 %v799, %v798
        %v829 = vpack.c.bf16 %v801, %v800
        %v830 = vpack.c.bf16 %v803, %v802
        %v831 = vpack.c.bf16 %v805, %v804
        %v832 = vpack.c.bf16 %v807, %v806
        %v833 = vpack.c.bf16 %v809, %v808
        %v834 = vpack.c.bf16 %v811, %v810
        %v835 = vpack.c.bf16 %v813, %v812
        %v836 = vpack.c.bf16 %v815, %v814
        %v837 = vpack.c.bf16 %v817, %v816
        %v838 = vpack.c.bf16 %v819, %v818
        %v839 = vpack.c.bf16 %v821, %v820
        %v840 = vpack.c.bf16 %v823, %v822
        %v841 = vpack.c.bf16 %v825, %v824
        %v858 = vunpack.c.l.b16 %v826
        %v859 = vunpack.c.h.b16 %v826
        %v860 = vunpack.c.l.b16 %v827
        %v861 = vunpack.c.h.b16 %v827
        %v862 = vunpack.c.l.b16 %v828
        %v863 = vunpack.c.h.b16 %v828
        %v864 = vunpack.c.l.b16 %v829
        %v865 = vunpack.c.h.b16 %v829
        %v866 = vunpack.c.l.b16 %v830
        %v867 = vunpack.c.h.b16 %v830
        %v868 = vunpack.c.l.b16 %v831
        %v869 = vunpack.c.h.b16 %v831
        %v870 = vunpack.c.l.b16 %v832
        %v871 = vunpack.c.h.b16 %v832
        %v872 = vunpack.c.l.b16 %v833
        %v873 = vunpack.c.h.b16 %v833
        %v874 = vunpack.c.l.b16 %v834
        %v875 = vunpack.c.h.b16 %v834
        %v876 = vunpack.c.l.b16 %v835
        %v877 = vunpack.c.h.b16 %v835
        %v878 = vunpack.c.l.b16 %v836
        %v879 = vunpack.c.h.b16 %v836
        %v880 = vunpack.c.l.b16 %v837
        %v881 = vunpack.c.h.b16 %v837
        %v882 = vunpack.c.l.b16 %v838
        %v883 = vunpack.c.h.b16 %v838
        %v884 = vunpack.c.l.b16 %v839
        %v885 = vunpack.c.h.b16 %v839
        %v886 = vunpack.c.l.b16 %v840
        %v887 = vunpack.c.h.b16 %v840
        %v888 = vunpack.c.l.b16 %v841
        %v889 = vunpack.c.h.b16 %v841
        %v890 = vpack.c.b16 %v858, %v858
        %v891 = vpack.c.b16 %v859, %v859
        %v892 = vpack.c.b16 %v860, %v860
        %v893 = vpack.c.b16 %v861, %v861
        %v894 = vpack.c.b16 %v862, %v862
        %v895 = vpack.c.b16 %v863, %v863
        %v896 = vpack.c.b16 %v864, %v864
        %v897 = vpack.c.b16 %v865, %v865
        %v898 = vpack.c.b16 %v866, %v866
        %v899 = vpack.c.b16 %v867, %v867
        %v900 = vpack.c.b16 %v868, %v868
        %v901 = vpack.c.b16 %v869, %v869
        %v902 = vpack.c.b16 %v870, %v870
        %v903 = vpack.c.b16 %v871, %v871
        %v904 = vpack.c.b16 %v872, %v872
        %v905 = vpack.c.b16 %v873, %v873
        %v906 = vpack.c.b16 %v874, %v874
        %v907 = vpack.c.b16 %v875, %v875
        %v908 = vpack.c.b16 %v876, %v876
        %v909 = vpack.c.b16 %v877, %v877
        %v910 = vpack.c.b16 %v878, %v878
        %v911 = vpack.c.b16 %v879, %v879
        %v912 = vpack.c.b16 %v880, %v880
        %v913 = vpack.c.b16 %v881, %v881
        %v914 = vpack.c.b16 %v882, %v882
        %v915 = vpack.c.b16 %v883, %v883
        %v916 = vpack.c.b16 %v884, %v884
        %v917 = vpack.c.b16 %v885, %v885
        %v918 = vpack.c.b16 %v886, %v886
        %v919 = vpack.c.b16 %v887, %v887
        %v920 = vpack.c.b16 %v888, %v888
        %v921 = vpack.c.b16 %v889, %v889
        %954 = vst [vmem:[%s291] sm:$0xf] %v890
        %955 = vst [vmem:[%s291 + $0x4] sm:$0xf] %v891
        %956 = vst [vmem:[%s291 + $0x8] sm:$0xf] %v892
        %957 = vst [vmem:[%s291 + $0xc] sm:$0xf] %v893
        %958 = vst [vmem:[%s291 + $0x10] sm:$0xf] %v894
        %959 = vst [vmem:[%s291 + $0x14] sm:$0xf] %v895
        %960 = vst [vmem:[%s291 + $0x18] sm:$0xf] %v896
        %961 = vst [vmem:[%s291 + $0x1c] sm:$0xf] %v897
        %962 = vst [vmem:[%s291 + $0x20] sm:$0xf] %v898
        %963 = vst [vmem:[%s291 + $0x24] sm:$0xf] %v899
        %964 = vst [vmem:[%s291 + $0x28] sm:$0xf] %v900
        %965 = vst [vmem:[%s291 + $0x2c] sm:$0xf] %v901
        %966 = vst [vmem:[%s291 + $0x30] sm:$0xf] %v902
        %967 = vst [vmem:[%s291 + $0x34] sm:$0xf] %v903
        %968 = vst [vmem:[%s291 + $0x38] sm:$0xf] %v904
        %969 = vst [vmem:[%s291 + $0x3c] sm:$0xf] %v905
        %970 = vst [vmem:[%s291 + $0x40] sm:$0xf] %v906
        %971 = vst [vmem:[%s291 + $0x44] sm:$0xf] %v907
        %972 = vst [vmem:[%s291 + $0x48] sm:$0xf] %v908
        %973 = vst [vmem:[%s291 + $0x4c] sm:$0xf] %v909
        %974 = vst [vmem:[%s291 + $0x50] sm:$0xf] %v910
        %975 = vst [vmem:[%s291 + $0x54] sm:$0xf] %v911
        %976 = vst [vmem:[%s291 + $0x58] sm:$0xf] %v912
        %977 = vst [vmem:[%s291 + $0x5c] sm:$0xf] %v913
        %978 = vst [vmem:[%s291 + $0x60] sm:$0xf] %v914
        %979 = vst [vmem:[%s291 + $0x64] sm:$0xf] %v915
        %980 = vst [vmem:[%s291 + $0x68] sm:$0xf] %v916
        %981 = vst [vmem:[%s291 + $0x6c] sm:$0xf] %v917
        %982 = vst [vmem:[%s291 + $0x70] sm:$0xf] %v918
        %983 = vst [vmem:[%s291 + $0x74] sm:$0xf] %v919
        %984 = vst [vmem:[%s291 + $0x78] sm:$0xf] %v920
        %985 = vst [vmem:[%s291 + $0x7c] sm:$0xf] %v921
        %v986 = vadd.f32 %v794, %v795
        %v987 = vadd.f32 %v986, %v796
        %v988 = vadd.f32 %v987, %v797
        %v989 = vadd.f32 %v988, %v798
        %v990 = vadd.f32 %v989, %v799
        %v991 = vadd.f32 %v990, %v800
        %v992 = vadd.f32 %v991, %v801
        %v993 = vadd.f32 %v992, %v802
        %v994 = vadd.f32 %v993, %v803
        %v995 = vadd.f32 %v994, %v804
        %v996 = vadd.f32 %v995, %v805
        %v997 = vadd.f32 %v996, %v806
        %v998 = vadd.f32 %v997, %v807
        %v999 = vadd.f32 %v998, %v808
        %v1000 = vadd.f32 %v999, %v809
        %v1001 = vadd.f32 %v1000, %v810
        %v1002 = vadd.f32 %v1001, %v811
        %v1003 = vadd.f32 %v1002, %v812
        %v1004 = vadd.f32 %v1003, %v813
        %v1005 = vadd.f32 %v1004, %v814
        %v1006 = vadd.f32 %v1005, %v815
        %v1007 = vadd.f32 %v1006, %v816
        %v1008 = vadd.f32 %v1007, %v817
        %v1009 = vadd.f32 %v1008, %v818
        %v1010 = vadd.f32 %v1009, %v819
        %v1011 = vadd.f32 %v1010, %v820
        %v1012 = vadd.f32 %v1011, %v821
        %v1013 = vadd.f32 %v1012, %v822
        %v1014 = vadd.f32 %v1013, %v823
        %v1015 = vadd.f32 %v1014, %v824
        %v1016 = vadd.f32 %v1015, %v825
        %v1017 = vrot.slane %v1016, 4
        %v1018 = vadd.f32 %v1016, %v1017
        %v1019 = vrot.slane %v1018, 2
        %v1020 = vadd.f32 %v1018, %v1019
        %v1021 = vrot.slane %v1020, 1
        %v1022 = vadd.f32 %v1020, %v1021
        %1023 = vst [vmem:[%s298] sm:$0x1] %v1022
        %v1024 = vmul.f32 %v794, %v794
        %v1025 = vmul.f32 %v795, %v795
        %v1026 = vmul.f32 %v796, %v796
        %v1027 = vmul.f32 %v797, %v797
        %v1028 = vmul.f32 %v798, %v798
        %v1029 = vmul.f32 %v799, %v799
        %v1030 = vmul.f32 %v800, %v800
        %v1031 = vmul.f32 %v801, %v801
        %v1032 = vmul.f32 %v802, %v802
        %v1033 = vmul.f32 %v803, %v803
        %v1034 = vmul.f32 %v804, %v804
        %v1035 = vmul.f32 %v805, %v805
        %v1036 = vmul.f32 %v806, %v806
        %v1037 = vmul.f32 %v807, %v807
        %v1038 = vmul.f32 %v808, %v808
        %v1039 = vmul.f32 %v809, %v809
        %v1040 = vmul.f32 %v810, %v810
        %v1041 = vmul.f32 %v811, %v811
        %v1042 = vmul.f32 %v812, %v812
        %v1043 = vmul.f32 %v813, %v813
        %v1044 = vmul.f32 %v814, %v814
        %v1045 = vmul.f32 %v815, %v815
        %v1046 = vmul.f32 %v816, %v816
        %v1047 = vmul.f32 %v817, %v817
        %v1048 = vmul.f32 %v818, %v818
        %v1049 = vmul.f32 %v819, %v819
        %v1050 = vmul.f32 %v820, %v820
        %v1051 = vmul.f32 %v821, %v821
        %v1052 = vmul.f32 %v822, %v822
        %v1053 = vmul.f32 %v823, %v823
        %v1054 = vmul.f32 %v824, %v824
        %v1055 = vmul.f32 %v825, %v825
        %v1056 = vadd.f32 %v1024, %v1025
        %v1057 = vadd.f32 %v1056, %v1026
        %v1058 = vadd.f32 %v1057, %v1027
        %v1059 = vadd.f32 %v1058, %v1028
        %v1060 = vadd.f32 %v1059, %v1029
        %v1061 = vadd.f32 %v1060, %v1030
        %v1062 = vadd.f32 %v1061, %v1031
        %v1063 = vadd.f32 %v1062, %v1032
        %v1064 = vadd.f32 %v1063, %v1033
        %v1065 = vadd.f32 %v1064, %v1034
        %v1066 = vadd.f32 %v1065, %v1035
        %v1067 = vadd.f32 %v1066, %v1036
        %v1068 = vadd.f32 %v1067, %v1037
        %v1069 = vadd.f32 %v1068, %v1038
        %v1070 = vadd.f32 %v1069, %v1039
        %v1071 = vadd.f32 %v1070, %v1040
        %v1072 = vadd.f32 %v1071, %v1041
        %v1073 = vadd.f32 %v1072, %v1042
        %v1074 = vadd.f32 %v1073, %v1043
        %v1075 = vadd.f32 %v1074, %v1044
        %v1076 = vadd.f32 %v1075, %v1045
        %v1077 = vadd.f32 %v1076, %v1046
        %v1078 = vadd.f32 %v1077, %v1047
        %v1079 = vadd.f32 %v1078, %v1048
        %v1080 = vadd.f32 %v1079, %v1049
        %v1081 = vadd.f32 %v1080, %v1050
        %v1082 = vadd.f32 %v1081, %v1051
        %v1083 = vadd.f32 %v1082, %v1052
        %v1084 = vadd.f32 %v1083, %v1053
        %v1085 = vadd.f32 %v1084, %v1054
        %v1086 = vadd.f32 %v1085, %v1055
        %v1087 = vrot.slane %v1086, 4
        %v1088 = vadd.f32 %v1086, %v1087
        %v1089 = vrot.slane %v1088, 2
        %v1090 = vadd.f32 %v1088, %v1089
        %v1091 = vrot.slane %v1090, 1
        %v1092 = vadd.f32 %v1090, %v1091
        %1093 = vst [vmem:[%s304] sm:$0x1] %v1092
      $region36: #{up_forward.6} parent=27 // pred_fallthru
        _
      %s1094 = smul.u32 32, %s21
      %p1095 = scmp.lt.s32.totalorder %s1094, 63
      %s1096 = scalar_select %p1095, %s1094, 63
      %p1097 = scmp.lt.s32.totalorder %s22, 0
      %s1098 = scalar_select %p1097, %s22, 0
      %s1099 = sadd.s32 %s1098, %s1096
      %s1100 = smul.addr %s1099, 4
      %s1101 = scalar_lea.vmem %s2, %s1100
      %p1102 = scmp.lt.s32.totalorder %s21, 1
      %s1103 = scalar_select %p1102, %s21, 1
      %p1104 = scmp.lt.s32.totalorder %s22, 0
      %s1105 = scalar_select %p1104, %s22, 0
      %s1106 = sadd.s32 %s1105, %s1103
      %s1107 = scalar_lea.vmem %s3, %s1106
      %p1108 = scmp.lt.s32.totalorder %s21, 1
      %s1109 = scalar_select %p1108, %s21, 1
      %p1110 = scmp.lt.s32.totalorder %s22, 0
      %s1111 = scalar_select %p1110, %s22, 0
      %s1112 = sadd.s32 %s1111, %s1109
      %s1113 = scalar_lea.vmem %s4, %s1112
      // Predicated region
      $region37: #{up_forward.6} parent=27 // pred_check
        %p1114 = pneg %p111
      $region38: #{up_forward.6} parent=27 // pred_check_branch
        %1116 = sbr.rel (%p1114) target = $region40
      $region39: #{up_forward.6} parent=27 // pred_region
        %s1117 = smul.u32 32, %s21
      $region40: #{up_forward.6} parent=27 // pred_fallthru
        _
      // Predicated region
      $region41: #{up_forward.6} parent=27 // pred_check
        %p1118 = pneg %p139
      $region42: #{up_forward.6} parent=27 // pred_check_branch
        %1120 = sbr.rel (%p1118) target = $region44
      $region43: #{up_forward.6} parent=27 // pred_region
        _
      $region44: #{up_forward.6} parent=27 // pred_fallthru
        _
      // Predicated region
      $region45: #{up_forward.6} parent=27 // pred_check
        %p1121 = pneg %p167
      $region46: #{up_forward.6} parent=27 // pred_check_branch
        %1123 = sbr.rel (%p1121) target = $region48
      $region47: #{up_forward.6} parent=27 // pred_region
        _
      $region48: #{up_forward.6} parent=27 // pred_fallthru
        _
    $region28: #{up_forward.6} parent=5 // pred_fallthru
      _
    %p1124 = scmp.le.s32.totalorder 2, %s11
    // Predicated region
    $region49: #{up_forward.6} parent=5 // pred_check
      %p1125 = pneg %p1124
    $region50: #{up_forward.6} parent=5 // pred_check_branch
      %1127 = sbr.rel (%p1125) target = $region52
    $region51: #{up_forward.6} parent=5 // pred_region
      %s1128 = ssub.s32 %s11, 2
      // Predicated region
      $region53: #{up_forward.6} parent=51 // pred_check
        %p1129 = pneg %p117
      $region54: #{up_forward.6} parent=51 // pred_check_branch
        %1131 = sbr.rel (%p1129) target = $region56
      $region55: #{up_forward.6} parent=51 // pred_region
        %s1132 = smul.u32 32, %s24
        %p1133 = scmp.lt.s32.totalorder %s1132, 63
        %s1134 = scalar_select %p1133, %s1132, 63
        %p1135 = scmp.lt.s32.totalorder %s25, 0
        %s1136 = scalar_select %p1135, %s25, 0
        %s1137 = sadd.s32 %s1136, %s1134
        %s1138 = smul.addr %s1137, 4
        %s1139 = scalar_lea.vmem %s2, %s1138
      $region56: #{up_forward.6} parent=51 // pred_fallthru
        _
      // Predicated region
      $region57: #{up_forward.6} parent=51 // pred_check
        %p1140 = pneg %p145
      $region58: #{up_forward.6} parent=51 // pred_check_branch
        %1142 = sbr.rel (%p1140) target = $region60
      $region59: #{up_forward.6} parent=51 // pred_region
        %p1143 = scmp.lt.s32.totalorder %s24, 1
        %s1144 = scalar_select %p1143, %s24, 1
        %p1145 = scmp.lt.s32.totalorder %s25, 0
        %s1146 = scalar_select %p1145, %s25, 0
        %s1147 = sadd.s32 %s1146, %s1144
        %s1148 = scalar_lea.vmem %s3, %s1147
      $region60: #{up_forward.6} parent=51 // pred_fallthru
        _
      // Predicated region
      $region61: #{up_forward.6} parent=51 // pred_check
        %p1149 = pneg %p173
      $region62: #{up_forward.6} parent=51 // pred_check_branch
        %1151 = sbr.rel (%p1149) target = $region64
      $region63: #{up_forward.6} parent=51 // pred_region
        %p1152 = scmp.lt.s32.totalorder %s24, 1
        %s1153 = scalar_select %p1152, %s24, 1
        %p1154 = scmp.lt.s32.totalorder %s25, 0
        %s1155 = scalar_select %p1154, %s25, 0
        %s1156 = sadd.s32 %s1155, %s1153
        %s1157 = scalar_lea.vmem %s4, %s1156
      $region64: #{up_forward.6} parent=51 // pred_fallthru
        _
    $region52: #{up_forward.6} parent=5 // pred_fallthru
      _
  $region6: #{up_forward.6} parent=0 // loop_footer
    %s15 = sadd.s32 1, %s11
  $region7: #{up_forward.6} parent=0 // loop_footer_branch
    %10 = sbr.rel target = $region3
  $region8: #{up_forward.6} parent=0 // loop_exit
    _

// kernel: up_forward.7
$region0: #{up_forward.7}
  #allocation0 [shape = 'u32[]', space=smem, size = 0x4, offset = 0x4, fixed_abs, tag = 'smem constant byte address 0x4 - core index']
  #allocation1 [shape = 'u32[144,128]{1,0:T(1,128)}', space=vmem, size = 0x12000, scoped, tag = 'internal scratch']
  %s0 = inlined_call_operand.vmem [shape: bf16[512,128], index: 0, kind: input, shape index: {}]
  %s1 = inlined_call_operand.vmem [shape: f32[1,128], index: 1, kind: input, shape index: {}]
  %s2 = inlined_call_operand.vmem [shape: f32[1,128], index: 2, kind: input, shape index: {}]
  %s3 = inlined_call_operand.vmem [shape: bf16[512,128], index: 3, kind: output, shape index: {}]
  %s4 = sld [smem:[#allocation0]]
  $region22: #{up_forward.7} parent=0
    _
  %s6 = ssub.s32 1, %s4
  %s7 = scalar_select 0, %s6, %s4
  // Predicated region
  $region2: #{up_forward.7} parent=0 // pred_check
    _
  $region3: #{up_forward.7} parent=0 // pred_check_branch
    %9 = sbr.rel (0) target = $region5
  $region4: #{up_forward.7} parent=0 // pred_region
    _
  $region5: #{up_forward.7} parent=0 // pred_fallthru
    _
  // Predicated region
  $region6: #{up_forward.7} parent=0 // pred_check
    _
  $region7: #{up_forward.7} parent=0 // pred_check_branch
    %11 = sbr.rel (0) target = $region9
  $region8: #{up_forward.7} parent=0 // pred_region
    _
  $region9: #{up_forward.7} parent=0 // pred_fallthru
    _
  // Predicated region
  $region10: #{up_forward.7} parent=0 // pred_check
    _
  $region11: #{up_forward.7} parent=0 // pred_check_branch
    %13 = sbr.rel (0) target = $region13
  $region12: #{up_forward.7} parent=0 // pred_region
    _
  $region13: #{up_forward.7} parent=0 // pred_fallthru
    _
  %v14 = vld [vmem:[%s0] sm:$0xf]
  %v15 = vld [vmem:[%s0 + $0x4] sm:$0xf]
  %v16 = vld [vmem:[%s0 + $0x8] sm:$0xf]
  %v17 = vld [vmem:[%s0 + $0xc] sm:$0xf]
  %v18 = vld [vmem:[%s0 + $0x10] sm:$0xf]
  %v19 = vld [vmem:[%s0 + $0x14] sm:$0xf]
  %v20 = vld [vmem:[%s0 + $0x18] sm:$0xf]
  %v21 = vld [vmem:[%s0 + $0x1c] sm:$0xf]
  %v22 = vld [vmem:[%s0 + $0x20] sm:$0xf]
  %v23 = vld [vmem:[%s0 + $0x24] sm:$0xf]
  %v24 = vld [vmem:[%s0 + $0x28] sm:$0xf]
  %v25 = vld [vmem:[%s0 + $0x2c] sm:$0xf]
  %v26 = vld [vmem:[%s0 + $0x30] sm:$0xf]
  %v27 = vld [vmem:[%s0 + $0x34] sm:$0xf]
  %v28 = vld [vmem:[%s0 + $0x38] sm:$0xf]
  %v29 = vld [vmem:[%s0 + $0x3c] sm:$0xf]
  %v30 = vld [vmem:[%s0 + $0x40] sm:$0xf]
  %v31 = vld [vmem:[%s0 + $0x44] sm:$0xf]
  %v32 = vld [vmem:[%s0 + $0x48] sm:$0xf]
  %v33 = vld [vmem:[%s0 + $0x4c] sm:$0xf]
  %v34 = vld [vmem:[%s0 + $0x50] sm:$0xf]
  %v35 = vld [vmem:[%s0 + $0x54] sm:$0xf]
  %v36 = vld [vmem:[%s0 + $0x58] sm:$0xf]
  %v37 = vld [vmem:[%s0 + $0x5c] sm:$0xf]
  %v38 = vld [vmem:[%s0 + $0x60] sm:$0xf]
  %v39 = vld [vmem:[%s0 + $0x64] sm:$0xf]
  %v40 = vld [vmem:[%s0 + $0x68] sm:$0xf]
  %v41 = vld [vmem:[%s0 + $0x6c] sm:$0xf]
  %v42 = vld [vmem:[%s0 + $0x70] sm:$0xf]
  %v43 = vld [vmem:[%s0 + $0x74] sm:$0xf]
  %v44 = vld [vmem:[%s0 + $0x78] sm:$0xf]
  %v45 = vld [vmem:[%s0 + $0x7c] sm:$0xf]
  %v46 = vld [vmem:[%s0 + $0x80] sm:$0xf]
  %v47 = vld [vmem:[%s0 + $0x84] sm:$0xf]
  %v48 = vld [vmem:[%s0 + $0x88] sm:$0xf]
  %v49 = vld [vmem:[%s0 + $0x8c] sm:$0xf]
  %v50 = vld [vmem:[%s0 + $0x90] sm:$0xf]
  %v51 = vld [vmem:[%s0 + $0x94] sm:$0xf]
  %v52 = vld [vmem:[%s0 + $0x98] sm:$0xf]
  %v53 = vld [vmem:[%s0 + $0x9c] sm:$0xf]
  %v54 = vld [vmem:[%s0 + $0xa0] sm:$0xf]
  %v55 = vld [vmem:[%s0 + $0xa4] sm:$0xf]
  %v56 = vld [vmem:[%s0 + $0xa8] sm:$0xf]
  %v57 = vld [vmem:[%s0 + $0xac] sm:$0xf]
  %v58 = vld [vmem:[%s0 + $0xb0] sm:$0xf]
  %v59 = vld [vmem:[%s0 + $0xb4] sm:$0xf]
  %v60 = vld [vmem:[%s0 + $0xb8] sm:$0xf]
  %v61 = vld [vmem:[%s0 + $0xbc] sm:$0xf]
  %v62 = vld [vmem:[%s0 + $0xc0] sm:$0xf]
  %v63 = vld [vmem:[%s0 + $0xc4] sm:$0xf]
  %v64 = vld [vmem:[%s0 + $0xc8] sm:$0xf]
  %v65 = vld [vmem:[%s0 + $0xcc] sm:$0xf]
  %v66 = vld [vmem:[%s0 + $0xd0] sm:$0xf]
  %v67 = vld [vmem:[%s0 + $0xd4] sm:$0xf]
  %v68 = vld [vmem:[%s0 + $0xd8] sm:$0xf]
  %v69 = vld [vmem:[%s0 + $0xdc] sm:$0xf]
  %v70 = vld [vmem:[%s0 + $0xe0] sm:$0xf]
  %v71 = vld [vmem:[%s0 + $0xe4] sm:$0xf]
  %v72 = vld [vmem:[%s0 + $0xe8] sm:$0xf]
  %v73 = vld [vmem:[%s0 + $0xec] sm:$0xf]
  %v74 = vld [vmem:[%s0 + $0xf0] sm:$0xf]
  %v75 = vld [vmem:[%s0 + $0xf4] sm:$0xf]
  %v76 = vld [vmem:[%s0 + $0xf8] sm:$0xf]
  %v77 = vld [vmem:[%s0 + $0xfc] sm:$0xf]
  %v78 = vunpack.c.l.bf16 %v14
  %v79 = vunpack.c.l.bf16 %v15
  %v80 = vunpack.c.l.bf16 %v16
  %v81 = vunpack.c.l.bf16 %v17
  %v82 = vunpack.c.l.bf16 %v18
  %v83 = vunpack.c.l.bf16 %v19
  %v84 = vunpack.c.l.bf16 %v20
  %v85 = vunpack.c.l.bf16 %v21
  %v86 = vunpack.c.l.bf16 %v22
  %v87 = vunpack.c.l.bf16 %v23
  %v88 = vunpack.c.l.bf16 %v24
  %v89 = vunpack.c.l.bf16 %v25
  %v90 = vunpack.c.l.bf16 %v26
  %v91 = vunpack.c.l.bf16 %v27
  %v92 = vunpack.c.l.bf16 %v28
  %v93 = vunpack.c.l.bf16 %v29
  %v94 = vunpack.c.l.bf16 %v30
  %v95 = vunpack.c.l.bf16 %v31
  %v96 = vunpack.c.l.bf16 %v32
  %v97 = vunpack.c.l.bf16 %v33
  %v98 = vunpack.c.l.bf16 %v34
  %v99 = vunpack.c.l.bf16 %v35
  %v100 = vunpack.c.l.bf16 %v36
  %v101 = vunpack.c.l.bf16 %v37
  %v102 = vunpack.c.l.bf16 %v38
  %v103 = vunpack.c.l.bf16 %v39
  %v104 = vunpack.c.l.bf16 %v40
  %v105 = vunpack.c.l.bf16 %v41
  %v106 = vunpack.c.l.bf16 %v42
  %v107 = vunpack.c.l.bf16 %v43
  %v108 = vunpack.c.l.bf16 %v44
  %v109 = vunpack.c.l.bf16 %v45
  %v110 = vunpack.c.l.bf16 %v46
  %v111 = vunpack.c.l.bf16 %v47
  %v112 = vunpack.c.l.bf16 %v48
  %v113 = vunpack.c.l.bf16 %v49
  %v114 = vunpack.c.l.bf16 %v50
  %v115 = vunpack.c.l.bf16 %v51
  %v116 = vunpack.c.l.bf16 %v52
  %v117 = vunpack.c.l.bf16 %v53
  %v118 = vunpack.c.l.bf16 %v54
  %v119 = vunpack.c.l.bf16 %v55
  %v120 = vunpack.c.l.bf16 %v56
  %v121 = vunpack.c.l.bf16 %v57
  %v122 = vunpack.c.l.bf16 %v58
  %v123 = vunpack.c.l.bf16 %v59
  %v124 = vunpack.c.l.bf16 %v60
  %v125 = vunpack.c.l.bf16 %v61
  %v126 = vunpack.c.l.bf16 %v62
  %v127 = vunpack.c.l.bf16 %v63
  %v128 = vunpack.c.l.bf16 %v64
  %v129 = vunpack.c.l.bf16 %v65
  %v130 = vunpack.c.l.bf16 %v66
  %v131 = vunpack.c.l.bf16 %v67
  %v132 = vunpack.c.l.bf16 %v68
  %v133 = vunpack.c.l.bf16 %v69
  %v134 = vunpack.c.l.bf16 %v70
  %v135 = vunpack.c.l.bf16 %v71
  %v136 = vunpack.c.l.bf16 %v72
  %v137 = vunpack.c.l.bf16 %v73
  %v138 = vunpack.c.l.bf16 %v74
  %v139 = vunpack.c.l.bf16 %v75
  %v140 = vunpack.c.l.bf16 %v76
  %v141 = vunpack.c.l.bf16 %v77
  %v142 = vld [vmem:[%s1] sm:$0x1]
  %v144 = vlaneseq
  %v145 = vshrl.u32 %v144, 7
  %v146 = vsub.s32 0, %v145
  %v147 = vrot.slane %v142, %v146
  %v149 = vmul.f32 %v78, %v147
  %v150 = vmul.f32 %v79, %v147
  %v151 = vmul.f32 %v80, %v147
  %v152 = vmul.f32 %v81, %v147
  %v153 = vmul.f32 %v82, %v147
  %v154 = vmul.f32 %v83, %v147
  %v155 = vmul.f32 %v84, %v147
  %v156 = vmul.f32 %v85, %v147
  %v157 = vmul.f32 %v86, %v147
  %v158 = vmul.f32 %v87, %v147
  %v159 = vmul.f32 %v88, %v147
  %v160 = vmul.f32 %v89, %v147
  %v161 = vmul.f32 %v90, %v147
  %v162 = vmul.f32 %v91, %v147
  %v163 = vmul.f32 %v92, %v147
  %v164 = vmul.f32 %v93, %v147
  %v165 = vmul.f32 %v94, %v147
  %v166 = vmul.f32 %v95, %v147
  %v167 = vmul.f32 %v96, %v147
  %v168 = vmul.f32 %v97, %v147
  %v169 = vmul.f32 %v98, %v147
  %v170 = vmul.f32 %v99, %v147
  %v171 = vmul.f32 %v100, %v147
  %v172 = vmul.f32 %v101, %v147
  %v173 = vmul.f32 %v102, %v147
  %v174 = vmul.f32 %v103, %v147
  %v175 = vmul.f32 %v104, %v147
  %v176 = vmul.f32 %v105, %v147
  %v177 = vmul.f32 %v106, %v147
  %v178 = vmul.f32 %v107, %v147
  %v179 = vmul.f32 %v108, %v147
  %v180 = vmul.f32 %v109, %v147
  %v181 = vmul.f32 %v110, %v147
  %v182 = vmul.f32 %v111, %v147
  %v183 = vmul.f32 %v112, %v147
  %v184 = vmul.f32 %v113, %v147
  %v185 = vmul.f32 %v114, %v147
  %v186 = vmul.f32 %v115, %v147
  %v187 = vmul.f32 %v116, %v147
  %v188 = vmul.f32 %v117, %v147
  %v189 = vmul.f32 %v118, %v147
  %v190 = vmul.f32 %v119, %v147
  %v191 = vmul.f32 %v120, %v147
  %v192 = vmul.f32 %v121, %v147
  %v193 = vmul.f32 %v122, %v147
  %v194 = vmul.f32 %v123, %v147
  %v195 = vmul.f32 %v124, %v147
  %v196 = vmul.f32 %v125, %v147
  %v197 = vmul.f32 %v126, %v147
  %v198 = vmul.f32 %v127, %v147
  %v199 = vmul.f32 %v128, %v147
  %v200 = vmul.f32 %v129, %v147
  %v201 = vmul.f32 %v130, %v147
  %v202 = vmul.f32 %v131, %v147
  %v203 = vmul.f32 %v132, %v147
  %v204 = vmul.f32 %v133, %v147
  %v205 = vmul.f32 %v134, %v147
  %v206 = vmul.f32 %v135, %v147
  %v207 = vmul.f32 %v136, %v147
  %v208 = vmul.f32 %v137, %v147
  %v209 = vmul.f32 %v138, %v147
  %v210 = vmul.f32 %v139, %v147
  %v211 = vmul.f32 %v140, %v147
  %v212 = vmul.f32 %v141, %v147
  %v213 = vld [vmem:[%s2] sm:$0x1]
  %v215 = vlaneseq
  %v216 = vshrl.u32 %v215, 7
  %v217 = vsub.s32 0, %v216
  %v218 = vrot.slane %v213, %v217
  %v220 = vadd.f32 %v149, %v218
  %v221 = vadd.f32 %v150, %v218
  %v222 = vadd.f32 %v151, %v218
  %v223 = vadd.f32 %v152, %v218
  %v224 = vadd.f32 %v153, %v218
  %v225 = vadd.f32 %v154, %v218
  %v226 = vadd.f32 %v155, %v218
  %v227 = vadd.f32 %v156, %v218
  %v228 = vadd.f32 %v157, %v218
  %v229 = vadd.f32 %v158, %v218
  %v230 = vadd.f32 %v159, %v218
  %v231 = vadd.f32 %v160, %v218
  %v232 = vadd.f32 %v161, %v218
  %v233 = vadd.f32 %v162, %v218
  %v234 = vadd.f32 %v163, %v218
  %v235 = vadd.f32 %v164, %v218
  %v236 = vadd.f32 %v165, %v218
  %v237 = vadd.f32 %v166, %v218
  %v238 = vadd.f32 %v167, %v218
  %v239 = vadd.f32 %v168, %v218
  %v240 = vadd.f32 %v169, %v218
  %v241 = vadd.f32 %v170, %v218
  %v242 = vadd.f32 %v171, %v218
  %v243 = vadd.f32 %v172, %v218
  %v244 = vadd.f32 %v173, %v218
  %v245 = vadd.f32 %v174, %v218
  %v246 = vadd.f32 %v175, %v218
  %v247 = vadd.f32 %v176, %v218
  %v248 = vadd.f32 %v177, %v218
  %v249 = vadd.f32 %v178, %v218
  %v250 = vadd.f32 %v179, %v218
  %v251 = vadd.f32 %v180, %v218
  %v252 = vadd.f32 %v181, %v218
  %v253 = vadd.f32 %v182, %v218
  %v254 = vadd.f32 %v183, %v218
  %v255 = vadd.f32 %v184, %v218
  %v256 = vadd.f32 %v185, %v218
  %v257 = vadd.f32 %v186, %v218
  %v258 = vadd.f32 %v187, %v218
  %v259 = vadd.f32 %v188, %v218
  %v260 = vadd.f32 %v189, %v218
  %v261 = vadd.f32 %v190, %v218
  %v262 = vadd.f32 %v191, %v218
  %v263 = vadd.f32 %v192, %v218
  %v264 = vadd.f32 %v193, %v218
  %v265 = vadd.f32 %v194, %v218
  %v266 = vadd.f32 %v195, %v218
  %v267 = vadd.f32 %v196, %v218
  %v268 = vadd.f32 %v197, %v218
  %v269 = vadd.f32 %v198, %v218
  %v270 = vadd.f32 %v199, %v218
  %v271 = vadd.f32 %v200, %v218
  %v272 = vadd.f32 %v201, %v218
  %v273 = vadd.f32 %v202, %v218
  %v274 = vadd.f32 %v203, %v218
  %v275 = vadd.f32 %v204, %v218
  %v276 = vadd.f32 %v205, %v218
  %v277 = vadd.f32 %v206, %v218
  %v278 = vadd.f32 %v207, %v218
  %v279 = vadd.f32 %v208, %v218
  %v280 = vadd.f32 %v209, %v218
  %v281 = vadd.f32 %v210, %v218
  %v282 = vadd.f32 %v211, %v218
  %v283 = vadd.f32 %v212, %v218
  %v284 = vmax.f32 %v220, 0.0
  %v285 = vmax.f32 %v221, 0.0
  %v286 = vmax.f32 %v222, 0.0
  %v287 = vmax.f32 %v223, 0.0
  %v288 = vmax.f32 %v224, 0.0
  %v289 = vmax.f32 %v225, 0.0
  %v290 = vmax.f32 %v226, 0.0
  %v291 = vmax.f32 %v227, 0.0
  %v292 = vmax.f32 %v228, 0.0
  %v293 = vmax.f32 %v229, 0.0
  %v294 = vmax.f32 %v230, 0.0
  %v295 = vmax.f32 %v231, 0.0
  %v296 = vmax.f32 %v232, 0.0
  %v297 = vmax.f32 %v233, 0.0
  %v298 = vmax.f32 %v234, 0.0
  %v299 = vmax.f32 %v235, 0.0
  %v300 = vmax.f32 %v236, 0.0
  %v301 = vmax.f32 %v237, 0.0
  %v302 = vmax.f32 %v238, 0.0
  %v303 = vmax.f32 %v239, 0.0
  %v304 = vmax.f32 %v240, 0.0
  %v305 = vmax.f32 %v241, 0.0
  %v306 = vmax.f32 %v242, 0.0
  %v307 = vmax.f32 %v243, 0.0
  %v308 = vmax.f32 %v244, 0.0
  %v309 = vmax.f32 %v245, 0.0
  %v310 = vmax.f32 %v246, 0.0
  %v311 = vmax.f32 %v247, 0.0
  %v312 = vmax.f32 %v248, 0.0
  %v313 = vmax.f32 %v249, 0.0
  %v314 = vmax.f32 %v250, 0.0
  %v315 = vmax.f32 %v251, 0.0
  %v316 = vmax.f32 %v252, 0.0
  %v317 = vmax.f32 %v253, 0.0
  %v318 = vmax.f32 %v254, 0.0
  %v319 = vmax.f32 %v255, 0.0
  %v320 = vmax.f32 %v256, 0.0
  %v321 = vmax.f32 %v257, 0.0
  %v322 = vmax.f32 %v258, 0.0
  %v323 = vmax.f32 %v259, 0.0
  %v324 = vmax.f32 %v260, 0.0
  %v325 = vmax.f32 %v261, 0.0
  %v326 = vmax.f32 %v262, 0.0
  %v327 = vmax.f32 %v263, 0.0
  %v328 = vmax.f32 %v264, 0.0
  %v329 = vmax.f32 %v265, 0.0
  %v330 = vmax.f32 %v266, 0.0
  %v331 = vmax.f32 %v267, 0.0
  %v332 = vmax.f32 %v268, 0.0
  %v333 = vmax.f32 %v269, 0.0
  %v334 = vmax.f32 %v270, 0.0
  %v335 = vmax.f32 %v271, 0.0
  %v336 = vmax.f32 %v272, 0.0
  %v337 = vmax.f32 %v273, 0.0
  %v338 = vmax.f32 %v274, 0.0
  %v339 = vmax.f32 %v275, 0.0
  %v340 = vmax.f32 %v276, 0.0
  %v341 = vmax.f32 %v277, 0.0
  %v342 = vmax.f32 %v278, 0.0
  %v343 = vmax.f32 %v279, 0.0
  %v344 = vmax.f32 %v280, 0.0
  %v345 = vmax.f32 %v281, 0.0
  %v346 = vmax.f32 %v282, 0.0
  %v347 = vmax.f32 %v283, 0.0
  %v348 = vpack.c.bf16 %v285, %v284
  %v349 = vpack.c.bf16 %v287, %v286
  %v350 = vpack.c.bf16 %v289, %v288
  %v351 = vpack.c.bf16 %v291, %v290
  %v352 = vpack.c.bf16 %v293, %v292
  %v353 = vpack.c.bf16 %v295, %v294
  %v354 = vpack.c.bf16 %v297, %v296
  %v355 = vpack.c.bf16 %v299, %v298
  %v356 = vpack.c.bf16 %v301, %v300
  %v357 = vpack.c.bf16 %v303, %v302
  %v358 = vpack.c.bf16 %v305, %v304
  %v359 = vpack.c.bf16 %v307, %v306
  %v360 = vpack.c.bf16 %v309, %v308
  %v361 = vpack.c.bf16 %v311, %v310
  %v362 = vpack.c.bf16 %v313, %v312
  %v363 = vpack.c.bf16 %v315, %v314
  %v364 = vpack.c.bf16 %v317, %v316
  %v365 = vpack.c.bf16 %v319, %v318
  %v366 = vpack.c.bf16 %v321, %v320
  %v367 = vpack.c.bf16 %v323, %v322
  %v368 = vpack.c.bf16 %v325, %v324
  %v369 = vpack.c.bf16 %v327, %v326
  %v370 = vpack.c.bf16 %v329, %v328
  %v371 = vpack.c.bf16 %v331, %v330
  %v372 = vpack.c.bf16 %v333, %v332
  %v373 = vpack.c.bf16 %v335, %v334
  %v374 = vpack.c.bf16 %v337, %v336
  %v375 = vpack.c.bf16 %v339, %v338
  %v376 = vpack.c.bf16 %v341, %v340
  %v377 = vpack.c.bf16 %v343, %v342
  %v378 = vpack.c.bf16 %v345, %v344
  %v379 = vpack.c.bf16 %v347, %v346
  %v412 = vunpack.c.l.b16 %v348
  %v413 = vunpack.c.h.b16 %v348
  %v414 = vunpack.c.l.b16 %v349
  %v415 = vunpack.c.h.b16 %v349
  %v416 = vunpack.c.l.b16 %v350
  %v417 = vunpack.c.h.b16 %v350
  %v418 = vunpack.c.l.b16 %v351
  %v419 = vunpack.c.h.b16 %v351
  %v420 = vunpack.c.l.b16 %v352
  %v421 = vunpack.c.h.b16 %v352
  %v422 = vunpack.c.l.b16 %v353
  %v423 = vunpack.c.h.b16 %v353
  %v424 = vunpack.c.l.b16 %v354
  %v425 = vunpack.c.h.b16 %v354
  %v426 = vunpack.c.l.b16 %v355
  %v427 = vunpack.c.h.b16 %v355
  %v428 = vunpack.c.l.b16 %v356
  %v429 = vunpack.c.h.b16 %v356
  %v430 = vunpack.c.l.b16 %v357
  %v431 = vunpack.c.h.b16 %v357
  %v432 = vunpack.c.l.b16 %v358
  %v433 = vunpack.c.h.b16 %v358
  %v434 = vunpack.c.l.b16 %v359
  %v435 = vunpack.c.h.b16 %v359
  %v436 = vunpack.c.l.b16 %v360
  %v437 = vunpack.c.h.b16 %v360
  %v438 = vunpack.c.l.b16 %v361
  %v439 = vunpack.c.h.b16 %v361
  %v440 = vunpack.c.l.b16 %v362
  %v441 = vunpack.c.h.b16 %v362
  %v442 = vunpack.c.l.b16 %v363
  %v443 = vunpack.c.h.b16 %v363
  %v444 = vunpack.c.l.b16 %v364
  %v445 = vunpack.c.h.b16 %v364
  %v446 = vunpack.c.l.b16 %v365
  %v447 = vunpack.c.h.b16 %v365
  %v448 = vunpack.c.l.b16 %v366
  %v449 = vunpack.c.h.b16 %v366
  %v450 = vunpack.c.l.b16 %v367
  %v451 = vunpack.c.h.b16 %v367
  %v452 = vunpack.c.l.b16 %v368
  %v453 = vunpack.c.h.b16 %v368
  %v454 = vunpack.c.l.b16 %v369
  %v455 = vunpack.c.h.b16 %v369
  %v456 = vunpack.c.l.b16 %v370
  %v457 = vunpack.c.h.b16 %v370
  %v458 = vunpack.c.l.b16 %v371
  %v459 = vunpack.c.h.b16 %v371
  %v460 = vunpack.c.l.b16 %v372
  %v461 = vunpack.c.h.b16 %v372
  %v462 = vunpack.c.l.b16 %v373
  %v463 = vunpack.c.h.b16 %v373
  %v464 = vunpack.c.l.b16 %v374
  %v465 = vunpack.c.h.b16 %v374
  %v466 = vunpack.c.l.b16 %v375
  %v467 = vunpack.c.h.b16 %v375
  %v468 = vunpack.c.l.b16 %v376
  %v469 = vunpack.c.h.b16 %v376
  %v470 = vunpack.c.l.b16 %v377
  %v471 = vunpack.c.h.b16 %v377
  %v472 = vunpack.c.l.b16 %v378
  %v473 = vunpack.c.h.b16 %v378
  %v474 = vunpack.c.l.b16 %v379
  %v475 = vunpack.c.h.b16 %v379
  %v476 = vpack.c.b16 %v412, %v412
  %v477 = vpack.c.b16 %v413, %v413
  %v478 = vpack.c.b16 %v414, %v414
  %v479 = vpack.c.b16 %v415, %v415
  %v480 = vpack.c.b16 %v416, %v416
  %v481 = vpack.c.b16 %v417, %v417
  %v482 = vpack.c.b16 %v418, %v418
  %v483 = vpack.c.b16 %v419, %v419
  %v484 = vpack.c.b16 %v420, %v420
  %v485 = vpack.c.b16 %v421, %v421
  %v486 = vpack.c.b16 %v422, %v422
  %v487 = vpack.c.b16 %v423, %v423
  %v488 = vpack.c.b16 %v424, %v424
  %v489 = vpack.c.b16 %v425, %v425
  %v490 = vpack.c.b16 %v426, %v426
  %v491 = vpack.c.b16 %v427, %v427
  %v492 = vpack.c.b16 %v428, %v428
  %v493 = vpack.c.b16 %v429, %v429
  %v494 = vpack.c.b16 %v430, %v430
  %v495 = vpack.c.b16 %v431, %v431
  %v496 = vpack.c.b16 %v432, %v432
  %v497 = vpack.c.b16 %v433, %v433
  %v498 = vpack.c.b16 %v434, %v434
  %v499 = vpack.c.b16 %v435, %v435
  %v500 = vpack.c.b16 %v436, %v436
  %v501 = vpack.c.b16 %v437, %v437
  %v502 = vpack.c.b16 %v438, %v438
  %v503 = vpack.c.b16 %v439, %v439
  %v504 = vpack.c.b16 %v440, %v440
  %v505 = vpack.c.b16 %v441, %v441
  %v506 = vpack.c.b16 %v442, %v442
  %v507 = vpack.c.b16 %v443, %v443
  %v508 = vpack.c.b16 %v444, %v444
  %v509 = vpack.c.b16 %v445, %v445
  %v510 = vpack.c.b16 %v446, %v446
  %v511 = vpack.c.b16 %v447, %v447
  %v512 = vpack.c.b16 %v448, %v448
  %v513 = vpack.c.b16 %v449, %v449
  %v514 = vpack.c.b16 %v450, %v450
  %v515 = vpack.c.b16 %v451, %v451
  %v516 = vpack.c.b16 %v452, %v452
  %v517 = vpack.c.b16 %v453, %v453
  %v518 = vpack.c.b16 %v454, %v454
  %v519 = vpack.c.b16 %v455, %v455
  %v520 = vpack.c.b16 %v456, %v456
  %v521 = vpack.c.b16 %v457, %v457
  %v522 = vpack.c.b16 %v458, %v458
  %v523 = vpack.c.b16 %v459, %v459
  %v524 = vpack.c.b16 %v460, %v460
  %v525 = vpack.c.b16 %v461, %v461
  %v526 = vpack.c.b16 %v462, %v462
  %v527 = vpack.c.b16 %v463, %v463
  %v528 = vpack.c.b16 %v464, %v464
  %v529 = vpack.c.b16 %v465, %v465
  %v530 = vpack.c.b16 %v466, %v466
  %v531 = vpack.c.b16 %v467, %v467
  %v532 = vpack.c.b16 %v468, %v468
  %v533 = vpack.c.b16 %v469, %v469
  %v534 = vpack.c.b16 %v470, %v470
  %v535 = vpack.c.b16 %v471, %v471
  %v536 = vpack.c.b16 %v472, %v472
  %v537 = vpack.c.b16 %v473, %v473
  %v538 = vpack.c.b16 %v474, %v474
  %v539 = vpack.c.b16 %v475, %v475
  %604 = vst [vmem:[%s3] sm:$0xf] %v476
  %605 = vst [vmem:[%s3 + $0x4] sm:$0xf] %v477
  %606 = vst [vmem:[%s3 + $0x8] sm:$0xf] %v478
  %607 = vst [vmem:[%s3 + $0xc] sm:$0xf] %v479
  %608 = vst [vmem:[%s3 + $0x10] sm:$0xf] %v480
  %609 = vst [vmem:[%s3 + $0x14] sm:$0xf] %v481
  %610 = vst [vmem:[%s3 + $0x18] sm:$0xf] %v482
  %611 = vst [vmem:[%s3 + $0x1c] sm:$0xf] %v483
  %612 = vst [vmem:[%s3 + $0x20] sm:$0xf] %v484
  %613 = vst [vmem:[%s3 + $0x24] sm:$0xf] %v485
  %614 = vst [vmem:[%s3 + $0x28] sm:$0xf] %v486
  %615 = vst [vmem:[%s3 + $0x2c] sm:$0xf] %v487
  %616 = vst [vmem:[%s3 + $0x30] sm:$0xf] %v488
  %617 = vst [vmem:[%s3 + $0x34] sm:$0xf] %v489
  %618 = vst [vmem:[%s3 + $0x38] sm:$0xf] %v490
  %619 = vst [vmem:[%s3 + $0x3c] sm:$0xf] %v491
  %620 = vst [vmem:[%s3 + $0x40] sm:$0xf] %v492
  %621 = vst [vmem:[%s3 + $0x44] sm:$0xf] %v493
  %622 = vst [vmem:[%s3 + $0x48] sm:$0xf] %v494
  %623 = vst [vmem:[%s3 + $0x4c] sm:$0xf] %v495
  %624 = vst [vmem:[%s3 + $0x50] sm:$0xf] %v496
  %625 = vst [vmem:[%s3 + $0x54] sm:$0xf] %v497
  %626 = vst [vmem:[%s3 + $0x58] sm:$0xf] %v498
  %627 = vst [vmem:[%s3 + $0x5c] sm:$0xf] %v499
  %628 = vst [vmem:[%s3 + $0x60] sm:$0xf] %v500
  %629 = vst [vmem:[%s3 + $0x64] sm:$0xf] %v501
  %630 = vst [vmem:[%s3 + $0x68] sm:$0xf] %v502
  %631 = vst [vmem:[%s3 + $0x6c] sm:$0xf] %v503
  %632 = vst [vmem:[%s3 + $0x70] sm:$0xf] %v504
  %633 = vst [vmem:[%s3 + $0x74] sm:$0xf] %v505
  %634 = vst [vmem:[%s3 + $0x78] sm:$0xf] %v506
  %635 = vst [vmem:[%s3 + $0x7c] sm:$0xf] %v507
  %636 = vst [vmem:[%s3 + $0x80] sm:$0xf] %v508
  %637 = vst [vmem:[%s3 + $0x84] sm:$0xf] %v509
  %638 = vst [vmem:[%s3 + $0x88] sm:$0xf] %v510
  %639 = vst [vmem:[%s3 + $0x8c] sm:$0xf] %v511
  %640 = vst [vmem:[%s3 + $0x90] sm:$0xf] %v512
  %641 = vst [vmem:[%s3 + $0x94] sm:$0xf] %v513
  %642 = vst [vmem:[%s3 + $0x98] sm:$0xf] %v514
  %643 = vst [vmem:[%s3 + $0x9c] sm:$0xf] %v515
  %644 = vst [vmem:[%s3 + $0xa0] sm:$0xf] %v516
  %645 = vst [vmem:[%s3 + $0xa4] sm:$0xf] %v517
  %646 = vst [vmem:[%s3 + $0xa8] sm:$0xf] %v518
  %647 = vst [vmem:[%s3 + $0xac] sm:$0xf] %v519
  %648 = vst [vmem:[%s3 + $0xb0] sm:$0xf] %v520
  %649 = vst [vmem:[%s3 + $0xb4] sm:$0xf] %v521
  %650 = vst [vmem:[%s3 + $0xb8] sm:$0xf] %v522
  %651 = vst [vmem:[%s3 + $0xbc] sm:$0xf] %v523
  %652 = vst [vmem:[%s3 + $0xc0] sm:$0xf] %v524
  %653 = vst [vmem:[%s3 + $0xc4] sm:$0xf] %v525
  %654 = vst [vmem:[%s3 + $0xc8] sm:$0xf] %v526
  %655 = vst [vmem:[%s3 + $0xcc] sm:$0xf] %v527
  %656 = vst [vmem:[%s3 + $0xd0] sm:$0xf] %v528
  %657 = vst [vmem:[%s3 + $0xd4] sm:$0xf] %v529
  %658 = vst [vmem:[%s3 + $0xd8] sm:$0xf] %v530
  %659 = vst [vmem:[%s3 + $0xdc] sm:$0xf] %v531
  %660 = vst [vmem:[%s3 + $0xe0] sm:$0xf] %v532
  %661 = vst [vmem:[%s3 + $0xe4] sm:$0xf] %v533
  %662 = vst [vmem:[%s3 + $0xe8] sm:$0xf] %v534
  %663 = vst [vmem:[%s3 + $0xec] sm:$0xf] %v535
  %664 = vst [vmem:[%s3 + $0xf0] sm:$0xf] %v536
  %665 = vst [vmem:[%s3 + $0xf4] sm:$0xf] %v537
  %666 = vst [vmem:[%s3 + $0xf8] sm:$0xf] %v538
  %667 = vst [vmem:[%s3 + $0xfc] sm:$0xf] %v539
  // Predicated region
  $region14: #{up_forward.7} parent=0 // pred_check
    _
  $region15: #{up_forward.7} parent=0 // pred_check_branch
    %669 = sbr.rel (0) target = $region17
  $region16: #{up_forward.7} parent=0 // pred_region
    _
  $region17: #{up_forward.7} parent=0 // pred_fallthru
    _
  // Predicated region
  $region18: #{up_forward.7} parent=0 // pred_check
    _
  $region19: #{up_forward.7} parent=0 // pred_check_branch
    %671 = sbr.rel (0) target = $region21
  $region20: #{up_forward.7} parent=0 // pred_region
    _
  $region21: #{up_forward.7} parent=0 // pred_fallthru
    _

// kernel: up_forward.9
$region0: #{up_forward.9}
  #allocation0 [shape = 'u32[]', space=smem, size = 0x4, offset = 0x4, fixed_abs, tag = 'smem constant byte address 0x4 - core index']
  #allocation1 [shape = 'u32[144,128]{1,0:T(1,128)}', space=vmem, size = 0x12000, scoped, tag = 'internal scratch']
  %s0 = inlined_call_operand.vmem [shape: bf16[512,128], index: 0, kind: input, shape index: {}]
  %s1 = inlined_call_operand.vmem [shape: f32[1,128], index: 1, kind: input, shape index: {}]
  %s2 = inlined_call_operand.vmem [shape: f32[1,128], index: 2, kind: input, shape index: {}]
  %s3 = inlined_call_operand.vmem [shape: f32[512,128], index: 3, kind: output, shape index: {}]
  %s4 = sld [smem:[#allocation0]]
  $region22: #{up_forward.9} parent=0
    _
  %s6 = ssub.s32 1, %s4
  %s7 = scalar_select 0, %s6, %s4
  // Predicated region
  $region2: #{up_forward.9} parent=0 // pred_check
    _
  $region3: #{up_forward.9} parent=0 // pred_check_branch
    %9 = sbr.rel (0) target = $region5
  $region4: #{up_forward.9} parent=0 // pred_region
    _
  $region5: #{up_forward.9} parent=0 // pred_fallthru
    _
  // Predicated region
  $region6: #{up_forward.9} parent=0 // pred_check
    _
  $region7: #{up_forward.9} parent=0 // pred_check_branch
    %11 = sbr.rel (0) target = $region9
  $region8: #{up_forward.9} parent=0 // pred_region
    _
  $region9: #{up_forward.9} parent=0 // pred_fallthru
    _
  // Predicated region
  $region10: #{up_forward.9} parent=0 // pred_check
    _
  $region11: #{up_forward.9} parent=0 // pred_check_branch
    %13 = sbr.rel (0) target = $region13
  $region12: #{up_forward.9} parent=0 // pred_region
    _
  $region13: #{up_forward.9} parent=0 // pred_fallthru
    _
  %v14 = vld [vmem:[%s0] sm:$0xf]
  %v15 = vld [vmem:[%s0 + $0x4] sm:$0xf]
  %v16 = vld [vmem:[%s0 + $0x8] sm:$0xf]
  %v17 = vld [vmem:[%s0 + $0xc] sm:$0xf]
  %v18 = vld [vmem:[%s0 + $0x10] sm:$0xf]
  %v19 = vld [vmem:[%s0 + $0x14] sm:$0xf]
  %v20 = vld [vmem:[%s0 + $0x18] sm:$0xf]
  %v21 = vld [vmem:[%s0 + $0x1c] sm:$0xf]
  %v22 = vld [vmem:[%s0 + $0x20] sm:$0xf]
  %v23 = vld [vmem:[%s0 + $0x24] sm:$0xf]
  %v24 = vld [vmem:[%s0 + $0x28] sm:$0xf]
  %v25 = vld [vmem:[%s0 + $0x2c] sm:$0xf]
  %v26 = vld [vmem:[%s0 + $0x30] sm:$0xf]
  %v27 = vld [vmem:[%s0 + $0x34] sm:$0xf]
  %v28 = vld [vmem:[%s0 + $0x38] sm:$0xf]
  %v29 = vld [vmem:[%s0 + $0x3c] sm:$0xf]
  %v30 = vld [vmem:[%s0 + $0x40] sm:$0xf]
  %v31 = vld [vmem:[%s0 + $0x44] sm:$0xf]
  %v32 = vld [vmem:[%s0 + $0x48] sm:$0xf]
  %v33 = vld [vmem:[%s0 + $0x4c] sm:$0xf]
  %v34 = vld [vmem:[%s0 + $0x50] sm:$0xf]
  %v35 = vld [vmem:[%s0 + $0x54] sm:$0xf]
  %v36 = vld [vmem:[%s0 + $0x58] sm:$0xf]
  %v37 = vld [vmem:[%s0 + $0x5c] sm:$0xf]
  %v38 = vld [vmem:[%s0 + $0x60] sm:$0xf]
  %v39 = vld [vmem:[%s0 + $0x64] sm:$0xf]
  %v40 = vld [vmem:[%s0 + $0x68] sm:$0xf]
  %v41 = vld [vmem:[%s0 + $0x6c] sm:$0xf]
  %v42 = vld [vmem:[%s0 + $0x70] sm:$0xf]
  %v43 = vld [vmem:[%s0 + $0x74] sm:$0xf]
  %v44 = vld [vmem:[%s0 + $0x78] sm:$0xf]
  %v45 = vld [vmem:[%s0 + $0x7c] sm:$0xf]
  %v46 = vld [vmem:[%s0 + $0x80] sm:$0xf]
  %v47 = vld [vmem:[%s0 + $0x84] sm:$0xf]
  %v48 = vld [vmem:[%s0 + $0x88] sm:$0xf]
  %v49 = vld [vmem:[%s0 + $0x8c] sm:$0xf]
  %v50 = vld [vmem:[%s0 + $0x90] sm:$0xf]
  %v51 = vld [vmem:[%s0 + $0x94] sm:$0xf]
  %v52 = vld [vmem:[%s0 + $0x98] sm:$0xf]
  %v53 = vld [vmem:[%s0 + $0x9c] sm:$0xf]
  %v54 = vld [vmem:[%s0 + $0xa0] sm:$0xf]
  %v55 = vld [vmem:[%s0 + $0xa4] sm:$0xf]
  %v56 = vld [vmem:[%s0 + $0xa8] sm:$0xf]
  %v57 = vld [vmem:[%s0 + $0xac] sm:$0xf]
  %v58 = vld [vmem:[%s0 + $0xb0] sm:$0xf]
  %v59 = vld [vmem:[%s0 + $0xb4] sm:$0xf]
  %v60 = vld [vmem:[%s0 + $0xb8] sm:$0xf]
  %v61 = vld [vmem:[%s0 + $0xbc] sm:$0xf]
  %v62 = vld [vmem:[%s0 + $0xc0] sm:$0xf]
  %v63 = vld [vmem:[%s0 + $0xc4] sm:$0xf]
  %v64 = vld [vmem:[%s0 + $0xc8] sm:$0xf]
  %v65 = vld [vmem:[%s0 + $0xcc] sm:$0xf]
  %v66 = vld [vmem:[%s0 + $0xd0] sm:$0xf]
  %v67 = vld [vmem:[%s0 + $0xd4] sm:$0xf]
  %v68 = vld [vmem:[%s0 + $0xd8] sm:$0xf]
  %v69 = vld [vmem:[%s0 + $0xdc] sm:$0xf]
  %v70 = vld [vmem:[%s0 + $0xe0] sm:$0xf]
  %v71 = vld [vmem:[%s0 + $0xe4] sm:$0xf]
  %v72 = vld [vmem:[%s0 + $0xe8] sm:$0xf]
  %v73 = vld [vmem:[%s0 + $0xec] sm:$0xf]
  %v74 = vld [vmem:[%s0 + $0xf0] sm:$0xf]
  %v75 = vld [vmem:[%s0 + $0xf4] sm:$0xf]
  %v76 = vld [vmem:[%s0 + $0xf8] sm:$0xf]
  %v77 = vld [vmem:[%s0 + $0xfc] sm:$0xf]
  %v78 = vunpack.c.l.bf16 %v14
  %v79 = vunpack.c.l.bf16 %v15
  %v80 = vunpack.c.l.bf16 %v16
  %v81 = vunpack.c.l.bf16 %v17
  %v82 = vunpack.c.l.bf16 %v18
  %v83 = vunpack.c.l.bf16 %v19
  %v84 = vunpack.c.l.bf16 %v20
  %v85 = vunpack.c.l.bf16 %v21
  %v86 = vunpack.c.l.bf16 %v22
  %v87 = vunpack.c.l.bf16 %v23
  %v88 = vunpack.c.l.bf16 %v24
  %v89 = vunpack.c.l.bf16 %v25
  %v90 = vunpack.c.l.bf16 %v26
  %v91 = vunpack.c.l.bf16 %v27
  %v92 = vunpack.c.l.bf16 %v28
  %v93 = vunpack.c.l.bf16 %v29
  %v94 = vunpack.c.l.bf16 %v30
  %v95 = vunpack.c.l.bf16 %v31
  %v96 = vunpack.c.l.bf16 %v32
  %v97 = vunpack.c.l.bf16 %v33
  %v98 = vunpack.c.l.bf16 %v34
  %v99 = vunpack.c.l.bf16 %v35
  %v100 = vunpack.c.l.bf16 %v36
  %v101 = vunpack.c.l.bf16 %v37
  %v102 = vunpack.c.l.bf16 %v38
  %v103 = vunpack.c.l.bf16 %v39
  %v104 = vunpack.c.l.bf16 %v40
  %v105 = vunpack.c.l.bf16 %v41
  %v106 = vunpack.c.l.bf16 %v42
  %v107 = vunpack.c.l.bf16 %v43
  %v108 = vunpack.c.l.bf16 %v44
  %v109 = vunpack.c.l.bf16 %v45
  %v110 = vunpack.c.l.bf16 %v46
  %v111 = vunpack.c.l.bf16 %v47
  %v112 = vunpack.c.l.bf16 %v48
  %v113 = vunpack.c.l.bf16 %v49
  %v114 = vunpack.c.l.bf16 %v50
  %v115 = vunpack.c.l.bf16 %v51
  %v116 = vunpack.c.l.bf16 %v52
  %v117 = vunpack.c.l.bf16 %v53
  %v118 = vunpack.c.l.bf16 %v54
  %v119 = vunpack.c.l.bf16 %v55
  %v120 = vunpack.c.l.bf16 %v56
  %v121 = vunpack.c.l.bf16 %v57
  %v122 = vunpack.c.l.bf16 %v58
  %v123 = vunpack.c.l.bf16 %v59
  %v124 = vunpack.c.l.bf16 %v60
  %v125 = vunpack.c.l.bf16 %v61
  %v126 = vunpack.c.l.bf16 %v62
  %v127 = vunpack.c.l.bf16 %v63
  %v128 = vunpack.c.l.bf16 %v64
  %v129 = vunpack.c.l.bf16 %v65
  %v130 = vunpack.c.l.bf16 %v66
  %v131 = vunpack.c.l.bf16 %v67
  %v132 = vunpack.c.l.bf16 %v68
  %v133 = vunpack.c.l.bf16 %v69
  %v134 = vunpack.c.l.bf16 %v70
  %v135 = vunpack.c.l.bf16 %v71
  %v136 = vunpack.c.l.bf16 %v72
  %v137 = vunpack.c.l.bf16 %v73
  %v138 = vunpack.c.l.bf16 %v74
  %v139 = vunpack.c.l.bf16 %v75
  %v140 = vunpack.c.l.bf16 %v76
  %v141 = vunpack.c.l.bf16 %v77
  %v142 = vld [vmem:[%s1] sm:$0x1]
  %v144 = vlaneseq
  %v145 = vshrl.u32 %v144, 7
  %v146 = vsub.s32 0, %v145
  %v147 = vrot.slane %v142, %v146
  %v149 = vmul.f32 %v78, %v147
  %v150 = vmul.f32 %v79, %v147
  %v151 = vmul.f32 %v80, %v147
  %v152 = vmul.f32 %v81, %v147
  %v153 = vmul.f32 %v82, %v147
  %v154 = vmul.f32 %v83, %v147
  %v155 = vmul.f32 %v84, %v147
  %v156 = vmul.f32 %v85, %v147
  %v157 = vmul.f32 %v86, %v147
  %v158 = vmul.f32 %v87, %v147
  %v159 = vmul.f32 %v88, %v147
  %v160 = vmul.f32 %v89, %v147
  %v161 = vmul.f32 %v90, %v147
  %v162 = vmul.f32 %v91, %v147
  %v163 = vmul.f32 %v92, %v147
  %v164 = vmul.f32 %v93, %v147
  %v165 = vmul.f32 %v94, %v147
  %v166 = vmul.f32 %v95, %v147
  %v167 = vmul.f32 %v96, %v147
  %v168 = vmul.f32 %v97, %v147
  %v169 = vmul.f32 %v98, %v147
  %v170 = vmul.f32 %v99, %v147
  %v171 = vmul.f32 %v100, %v147
  %v172 = vmul.f32 %v101, %v147
  %v173 = vmul.f32 %v102, %v147
  %v174 = vmul.f32 %v103, %v147
  %v175 = vmul.f32 %v104, %v147
  %v176 = vmul.f32 %v105, %v147
  %v177 = vmul.f32 %v106, %v147
  %v178 = vmul.f32 %v107, %v147
  %v179 = vmul.f32 %v108, %v147
  %v180 = vmul.f32 %v109, %v147
  %v181 = vmul.f32 %v110, %v147
  %v182 = vmul.f32 %v111, %v147
  %v183 = vmul.f32 %v112, %v147
  %v184 = vmul.f32 %v113, %v147
  %v185 = vmul.f32 %v114, %v147
  %v186 = vmul.f32 %v115, %v147
  %v187 = vmul.f32 %v116, %v147
  %v188 = vmul.f32 %v117, %v147
  %v189 = vmul.f32 %v118, %v147
  %v190 = vmul.f32 %v119, %v147
  %v191 = vmul.f32 %v120, %v147
  %v192 = vmul.f32 %v121, %v147
  %v193 = vmul.f32 %v122, %v147
  %v194 = vmul.f32 %v123, %v147
  %v195 = vmul.f32 %v124, %v147
  %v196 = vmul.f32 %v125, %v147
  %v197 = vmul.f32 %v126, %v147
  %v198 = vmul.f32 %v127, %v147
  %v199 = vmul.f32 %v128, %v147
  %v200 = vmul.f32 %v129, %v147
  %v201 = vmul.f32 %v130, %v147
  %v202 = vmul.f32 %v131, %v147
  %v203 = vmul.f32 %v132, %v147
  %v204 = vmul.f32 %v133, %v147
  %v205 = vmul.f32 %v134, %v147
  %v206 = vmul.f32 %v135, %v147
  %v207 = vmul.f32 %v136, %v147
  %v208 = vmul.f32 %v137, %v147
  %v209 = vmul.f32 %v138, %v147
  %v210 = vmul.f32 %v139, %v147
  %v211 = vmul.f32 %v140, %v147
  %v212 = vmul.f32 %v141, %v147
  %v213 = vld [vmem:[%s2] sm:$0x1]
  %v215 = vlaneseq
  %v216 = vshrl.u32 %v215, 7
  %v217 = vsub.s32 0, %v216
  %v218 = vrot.slane %v213, %v217
  %v220 = vadd.f32 %v149, %v218
  %v221 = vadd.f32 %v150, %v218
  %v222 = vadd.f32 %v151, %v218
  %v223 = vadd.f32 %v152, %v218
  %v224 = vadd.f32 %v153, %v218
  %v225 = vadd.f32 %v154, %v218
  %v226 = vadd.f32 %v155, %v218
  %v227 = vadd.f32 %v156, %v218
  %v228 = vadd.f32 %v157, %v218
  %v229 = vadd.f32 %v158, %v218
  %v230 = vadd.f32 %v159, %v218
  %v231 = vadd.f32 %v160, %v218
  %v232 = vadd.f32 %v161, %v218
  %v233 = vadd.f32 %v162, %v218
  %v234 = vadd.f32 %v163, %v218
  %v235 = vadd.f32 %v164, %v218
  %v236 = vadd.f32 %v165, %v218
  %v237 = vadd.f32 %v166, %v218
  %v238 = vadd.f32 %v167, %v218
  %v239 = vadd.f32 %v168, %v218
  %v240 = vadd.f32 %v169, %v218
  %v241 = vadd.f32 %v170, %v218
  %v242 = vadd.f32 %v171, %v218
  %v243 = vadd.f32 %v172, %v218
  %v244 = vadd.f32 %v173, %v218
  %v245 = vadd.f32 %v174, %v218
  %v246 = vadd.f32 %v175, %v218
  %v247 = vadd.f32 %v176, %v218
  %v248 = vadd.f32 %v177, %v218
  %v249 = vadd.f32 %v178, %v218
  %v250 = vadd.f32 %v179, %v218
  %v251 = vadd.f32 %v180, %v218
  %v252 = vadd.f32 %v181, %v218
  %v253 = vadd.f32 %v182, %v218
  %v254 = vadd.f32 %v183, %v218
  %v255 = vadd.f32 %v184, %v218
  %v256 = vadd.f32 %v185, %v218
  %v257 = vadd.f32 %v186, %v218
  %v258 = vadd.f32 %v187, %v218
  %v259 = vadd.f32 %v188, %v218
  %v260 = vadd.f32 %v189, %v218
  %v261 = vadd.f32 %v190, %v218
  %v262 = vadd.f32 %v191, %v218
  %v263 = vadd.f32 %v192, %v218
  %v264 = vadd.f32 %v193, %v218
  %v265 = vadd.f32 %v194, %v218
  %v266 = vadd.f32 %v195, %v218
  %v267 = vadd.f32 %v196, %v218
  %v268 = vadd.f32 %v197, %v218
  %v269 = vadd.f32 %v198, %v218
  %v270 = vadd.f32 %v199, %v218
  %v271 = vadd.f32 %v200, %v218
  %v272 = vadd.f32 %v201, %v218
  %v273 = vadd.f32 %v202, %v218
  %v274 = vadd.f32 %v203, %v218
  %v275 = vadd.f32 %v204, %v218
  %v276 = vadd.f32 %v205, %v218
  %v277 = vadd.f32 %v206, %v218
  %v278 = vadd.f32 %v207, %v218
  %v279 = vadd.f32 %v208, %v218
  %v280 = vadd.f32 %v209, %v218
  %v281 = vadd.f32 %v210, %v218
  %v282 = vadd.f32 %v211, %v218
  %v283 = vadd.f32 %v212, %v218
  %v284 = vmax.f32 %v220, 0.0
  %v285 = vmax.f32 %v221, 0.0
  %v286 = vmax.f32 %v222, 0.0
  %v287 = vmax.f32 %v223, 0.0
  %v288 = vmax.f32 %v224, 0.0
  %v289 = vmax.f32 %v225, 0.0
  %v290 = vmax.f32 %v226, 0.0
  %v291 = vmax.f32 %v227, 0.0
  %v292 = vmax.f32 %v228, 0.0
  %v293 = vmax.f32 %v229, 0.0
  %v294 = vmax.f32 %v230, 0.0
  %v295 = vmax.f32 %v231, 0.0
  %v296 = vmax.f32 %v232, 0.0
  %v297 = vmax.f32 %v233, 0.0
  %v298 = vmax.f32 %v234, 0.0
  %v299 = vmax.f32 %v235, 0.0
  %v300 = vmax.f32 %v236, 0.0
  %v301 = vmax.f32 %v237, 0.0
  %v302 = vmax.f32 %v238, 0.0
  %v303 = vmax.f32 %v239, 0.0
  %v304 = vmax.f32 %v240, 0.0
  %v305 = vmax.f32 %v241, 0.0
  %v306 = vmax.f32 %v242, 0.0
  %v307 = vmax.f32 %v243, 0.0
  %v308 = vmax.f32 %v244, 0.0
  %v309 = vmax.f32 %v245, 0.0
  %v310 = vmax.f32 %v246, 0.0
  %v311 = vmax.f32 %v247, 0.0
  %v312 = vmax.f32 %v248, 0.0
  %v313 = vmax.f32 %v249, 0.0
  %v314 = vmax.f32 %v250, 0.0
  %v315 = vmax.f32 %v251, 0.0
  %v316 = vmax.f32 %v252, 0.0
  %v317 = vmax.f32 %v253, 0.0
  %v318 = vmax.f32 %v254, 0.0
  %v319 = vmax.f32 %v255, 0.0
  %v320 = vmax.f32 %v256, 0.0
  %v321 = vmax.f32 %v257, 0.0
  %v322 = vmax.f32 %v258, 0.0
  %v323 = vmax.f32 %v259, 0.0
  %v324 = vmax.f32 %v260, 0.0
  %v325 = vmax.f32 %v261, 0.0
  %v326 = vmax.f32 %v262, 0.0
  %v327 = vmax.f32 %v263, 0.0
  %v328 = vmax.f32 %v264, 0.0
  %v329 = vmax.f32 %v265, 0.0
  %v330 = vmax.f32 %v266, 0.0
  %v331 = vmax.f32 %v267, 0.0
  %v332 = vmax.f32 %v268, 0.0
  %v333 = vmax.f32 %v269, 0.0
  %v334 = vmax.f32 %v270, 0.0
  %v335 = vmax.f32 %v271, 0.0
  %v336 = vmax.f32 %v272, 0.0
  %v337 = vmax.f32 %v273, 0.0
  %v338 = vmax.f32 %v274, 0.0
  %v339 = vmax.f32 %v275, 0.0
  %v340 = vmax.f32 %v276, 0.0
  %v341 = vmax.f32 %v277, 0.0
  %v342 = vmax.f32 %v278, 0.0
  %v343 = vmax.f32 %v279, 0.0
  %v344 = vmax.f32 %v280, 0.0
  %v345 = vmax.f32 %v281, 0.0
  %v346 = vmax.f32 %v282, 0.0
  %v347 = vmax.f32 %v283, 0.0
  %348 = vst [vmem:[%s3] sm:$0xff] %v284
  %349 = vst [vmem:[%s3 + $0x8] sm:$0xff] %v285
  %350 = vst [vmem:[%s3 + $0x10] sm:$0xff] %v286
  %351 = vst [vmem:[%s3 + $0x18] sm:$0xff] %v287
  %352 = vst [vmem:[%s3 + $0x20] sm:$0xff] %v288
  %353 = vst [vmem:[%s3 + $0x28] sm:$0xff] %v289
  %354 = vst [vmem:[%s3 + $0x30] sm:$0xff] %v290
  %355 = vst [vmem:[%s3 + $0x38] sm:$0xff] %v291
  %356 = vst [vmem:[%s3 + $0x40] sm:$0xff] %v292
  %357 = vst [vmem:[%s3 + $0x48] sm:$0xff] %v293
  %358 = vst [vmem:[%s3 + $0x50] sm:$0xff] %v294
  %359 = vst [vmem:[%s3 + $0x58] sm:$0xff] %v295
  %360 = vst [vmem:[%s3 + $0x60] sm:$0xff] %v296
  %361 = vst [vmem:[%s3 + $0x68] sm:$0xff] %v297
  %362 = vst [vmem:[%s3 + $0x70] sm:$0xff] %v298
  %363 = vst [vmem:[%s3 + $0x78] sm:$0xff] %v299
  %364 = vst [vmem:[%s3 + $0x80] sm:$0xff] %v300
  %365 = vst [vmem:[%s3 + $0x88] sm:$0xff] %v301
  %366 = vst [vmem:[%s3 + $0x90] sm:$0xff] %v302
  %367 = vst [vmem:[%s3 + $0x98] sm:$0xff] %v303
  %368 = vst [vmem:[%s3 + $0xa0] sm:$0xff] %v304
  %369 = vst [vmem:[%s3 + $0xa8] sm:$0xff] %v305
  %370 = vst [vmem:[%s3 + $0xb0] sm:$0xff] %v306
  %371 = vst [vmem:[%s3 + $0xb8] sm:$0xff] %v307
  %372 = vst [vmem:[%s3 + $0xc0] sm:$0xff] %v308
  %373 = vst [vmem:[%s3 + $0xc8] sm:$0xff] %v309
  %374 = vst [vmem:[%s3 + $0xd0] sm:$0xff] %v310
  %375 = vst [vmem:[%s3 + $0xd8] sm:$0xff] %v311
  %376 = vst [vmem:[%s3 + $0xe0] sm:$0xff] %v312
  %377 = vst [vmem:[%s3 + $0xe8] sm:$0xff] %v313
  %378 = vst [vmem:[%s3 + $0xf0] sm:$0xff] %v314
  %379 = vst [vmem:[%s3 + $0xf8] sm:$0xff] %v315
  %380 = vst [vmem:[%s3 + $0x100] sm:$0xff] %v316
  %381 = vst [vmem:[%s3 + $0x108] sm:$0xff] %v317
  %382 = vst [vmem:[%s3 + $0x110] sm:$0xff] %v318
  %383 = vst [vmem:[%s3 + $0x118] sm:$0xff] %v319
  %384 = vst [vmem:[%s3 + $0x120] sm:$0xff] %v320
  %385 = vst [vmem:[%s3 + $0x128] sm:$0xff] %v321
  %386 = vst [vmem:[%s3 + $0x130] sm:$0xff] %v322
  %387 = vst [vmem:[%s3 + $0x138] sm:$0xff] %v323
  %388 = vst [vmem:[%s3 + $0x140] sm:$0xff] %v324
  %389 = vst [vmem:[%s3 + $0x148] sm:$0xff] %v325
  %390 = vst [vmem:[%s3 + $0x150] sm:$0xff] %v326
  %391 = vst [vmem:[%s3 + $0x158] sm:$0xff] %v327
  %392 = vst [vmem:[%s3 + $0x160] sm:$0xff] %v328
  %393 = vst [vmem:[%s3 + $0x168] sm:$0xff] %v329
  %394 = vst [vmem:[%s3 + $0x170] sm:$0xff] %v330
  %395 = vst [vmem:[%s3 + $0x178] sm:$0xff] %v331
  %396 = vst [vmem:[%s3 + $0x180] sm:$0xff] %v332
  %397 = vst [vmem:[%s3 + $0x188] sm:$0xff] %v333
  %398 = vst [vmem:[%s3 + $0x190] sm:$0xff] %v334
  %399 = vst [vmem:[%s3 + $0x198] sm:$0xff] %v335
  %400 = vst [vmem:[%s3 + $0x1a0] sm:$0xff] %v336
  %401 = vst [vmem:[%s3 + $0x1a8] sm:$0xff] %v337
  %402 = vst [vmem:[%s3 + $0x1b0] sm:$0xff] %v338
  %403 = vst [vmem:[%s3 + $0x1b8] sm:$0xff] %v339
  %404 = vst [vmem:[%s3 + $0x1c0] sm:$0xff] %v340
  %405 = vst [vmem:[%s3 + $0x1c8] sm:$0xff] %v341
  %406 = vst [vmem:[%s3 + $0x1d0] sm:$0xff] %v342
  %407 = vst [vmem:[%s3 + $0x1d8] sm:$0xff] %v343
  %408 = vst [vmem:[%s3 + $0x1e0] sm:$0xff] %v344
  %409 = vst [vmem:[%s3 + $0x1e8] sm:$0xff] %v345
  %410 = vst [vmem:[%s3 + $0x1f0] sm:$0xff] %v346
  %411 = vst [vmem:[%s3 + $0x1f8] sm:$0xff] %v347
  // Predicated region
  $region14: #{up_forward.9} parent=0 // pred_check
    _
  $region15: #{up_forward.9} parent=0 // pred_check_branch
    %413 = sbr.rel (0) target = $region17
  $region16: #{up_forward.9} parent=0 // pred_region
    _
  $region17: #{up_forward.9} parent=0 // pred_fallthru
    _
  // Predicated region
  $region18: #{up_forward.9} parent=0 // pred_check
    _
  $region19: #{up_forward.9} parent=0 // pred_check_branch
    %415 = sbr.rel (0) target = $region21
  $region20: #{up_forward.9} parent=0 // pred_region
    _
  $region21: #{up_forward.9} parent=0 // pred_fallthru
    _

</llo_original>
